<compile_context>
chip_gen: v7x
topology: tpu7x:2x2x1
jax: 0.10.0
libtpu: 0.0.40
codegen_flags: <defaults>
</compile_context>

<pallas_src>
import numpy as np
import jax
import jax.numpy as jnp
from jax.experimental import pallas as pl
from jax.experimental.pallas import tpu as pltpu


def _make_l2pool_filter(filter_size=5):
    # Deterministic init, exactly as the PyTorch __init__:
    # a = hanning(5)[1:-1] (length 3), g = outer(a, a) / sum.  Every channel uses the
    # SAME 3x3 filter, so a single (3, 3) array fully describes the grouped conv.
    a = np.hanning(filter_size)[1:-1]
    g = a[:, None] * a[None, :]
    g = g / g.sum()
    return np.asarray(g, dtype=np.float64)  # host-side constants


def _separable_factors(weight, ksize=3):
    # g is symmetric rank-1 (outer product of the normalized Hanning taps), so
    # g = outer(v, v) with v = sqrt(diag(g)).  `weight` must be a concrete host array
    # (A/M below are baked host-side); fine for this module's deterministic filter.
    g = np.asarray(weight, dtype=np.float64).reshape(ksize, ksize)
    v = np.sqrt(np.maximum(np.diag(g), 0.0))
    assert np.allclose(np.outer(v, v), g, rtol=1e-9, atol=1e-12), (
        "L2pooling filter must be separable (Hanning outer product)")
    return v


def _stride2_tap_matrix(n_in, n_out, taps, *, stride=2, pad=1):
    # T[k, j] = taps[k - stride*j + pad] for in-range k; zero padding handled by
    # simply omitting out-of-range rows.  A 1-D zero-padded, strided conv along an
    # axis then becomes a plain matmul with T along that axis.
    T = np.zeros((n_in, n_out), dtype=np.float32)
    for j in range(n_out):
        for d in range(len(taps)):
            k = stride * j - pad + d
            if 0 <= k < n_in:
                T[k, j] = float(taps[d])
    return T


def _l2pool_kernel(a_ref, m_ref, x_ref, o_ref):
    # a_ref: (Ho, H)   f32 row-tap matrix (stride-2 + zero halo baked in)
    # m_ref: (W, Wo)   f32 column-tap matrix
    # x_ref: (Ct, H, W)   input tile in storage dtype (NCHW block, W on lanes)
    # o_ref: (Ct, Ho, Wo) output tile in storage dtype
    A = a_ref[...]
    M = m_ref[...]
    for c in range(x_ref.shape[0]):           # static channel unroll (Ct <= 32)
        xc = x_ref[c].astype(jnp.float32)     # widen in-register only
        xsq = xc * xc                         # one squared (H, W) slab live at a time
        t = jnp.dot(xsq, M, preferred_element_type=jnp.float32,
                    precision=jax.lax.Precision.HIGHEST)           # (H, Wo) column taps
        oc = jnp.dot(A, t, preferred_element_type=jnp.float32,
                     precision=jax.lax.Precision.HIGHEST)          # (Ho, Wo) row taps
        o_ref[c] = jnp.sqrt(oc + 1e-12).astype(o_ref.dtype)


def _pick_tiling(B, C, H, W, Ho, Wo, itemsize, *,
                 budget_bytes=12 * 1024 * 1024, max_unroll=32):
    """Channel-tile size + explicit VMEM limit, modelling the real per-step footprint:
    double-buffered input and output blocks, the (tiny) tap matrices, and f32
    in-kernel temporaries.  The 12 MiB budget is generation-safe (v5e 16 MiB scoped
    default, v6e 32 MiB/128 MiB, v7x 32 MiB/64 MiB)."""
    per_ch = 2 * H * W * itemsize + 2 * Ho * Wo * itemsize    # 2x-buffered in + out
    fixed = 2 * (Ho * H + W * Wo) * 4                         # A, M blocks (2x-buffered)
    fixed += 6 * H * W * 4                                    # f32 temp / spill headroom
    ct = max(1, min(C, max_unroll, (budget_bytes - fixed) // per_ch))
    # v7x has 2 TensorCores: make sure the "parallel" grid has >= 2 steps to shard.
    if B * pl.cdiv(C, ct) < 2 and C >= 2:
        ct = pl.cdiv(C, 2)
    need = fixed + ct * per_ch
    vmem_limit = int(min(32 * 1024 * 1024, max(16 * 1024 * 1024, 2 * need)))
    return int(ct), vmem_limit


def l2pooling(x_nchw, weight, *, stride=2, ksize=3, pad=1):
    """L2pooling forward.  x_nchw: (B, C, H, W); weight: concrete separable (3, 3)
    filter.  Returns (B, C, Ho, Wo) in the same dtype as the input."""
    assert stride == 2 and ksize == 3 and pad == 1, (
        "specialised to filter_size=5 (3x3 taps, stride 2, pad 1)")
    B, C, H, W = x_nchw.shape
    Ho = (H + 2 * pad - ksize) // stride + 1
    Wo = (W + 2 * pad - ksize) // stride + 1

    # Host-built tap matrices (tiny): zero-padded stride-2 conv folded into matmuls.
    v = _separable_factors(weight, ksize)
    A = jnp.asarray(_stride2_tap_matrix(H, Ho, v, stride=stride, pad=pad).T)   # (Ho, H)
    M = jnp.asarray(_stride2_tap_matrix(W, Wo, v, stride=stride, pad=pad))     # (W, Wo)

    itemsize = jnp.dtype(x_nchw.dtype).itemsize
    Ct, vmem_limit = _pick_tiling(B, C, H, W, Ho, Wo, itemsize)
    grid = (B, pl.cdiv(C, Ct))

    n_out = B * C * Ho * Wo
    cost = pl.CostEstimate(
        flops=int(B * C * (H * W + 2 * H * W * Wo + 2 * Ho * H * Wo + Ho * Wo)),
        transcendentals=int(n_out),                            # sqrt per output element
        bytes_accessed=int(B * C * H * W * itemsize + n_out * itemsize
                           + (Ho * H + W * Wo) * 4),
    )

    out = pl.pallas_call(
        _l2pool_kernel,
        out_shape=jax.ShapeDtypeStruct((B, C, Ho, Wo), x_nchw.dtype),
        grid=grid,
        in_specs=[
            pl.BlockSpec((Ho, H), lambda b, c: (0, 0)),        # A: fetched once
            pl.BlockSpec((W, Wo), lambda b, c: (0, 0)),        # M: fetched once
            pl.BlockSpec((None, Ct, H, W), lambda b, c: (b, c, 0, 0)),
        ],
        out_specs=pl.BlockSpec((None, Ct, Ho, Wo), lambda b, c: (b, c, 0, 0)),
        compiler_params=pltpu.CompilerParams(
            dimension_semantics=("parallel", "parallel"),
            vmem_limit_bytes=vmem_limit),
        cost_estimate=cost,
    )(A, M, x_nchw)
    return out


def l2pooling_ref(x_nchw, weight):
    # Pure-JAX reference matching F.conv2d(x**2, filter, stride=2, padding=1, groups=C).
    C = x_nchw.shape[1]
    xx = x_nchw.astype(jnp.float32) ** 2
    filt = jnp.broadcast_to(weight[None, None, :, :], (C, 1, 3, 3)).astype(jnp.float32)
    out = jax.lax.conv_general_dilated(
        xx, filt, window_strides=(2, 2), padding=((1, 1), (1, 1)),
        dimension_numbers=("NCHW", "OIHW", "NCHW"), feature_group_count=C)
    return jnp.sqrt(out + 1e-12)


if __name__ == "__main__":
    key = jax.random.PRNGKey(0)
    w_np = _make_l2pool_filter(filter_size=5)             # (3, 3) host constants
    w_jnp = jnp.asarray(w_np, dtype=jnp.float32)

    # Main (even) shape plus one odd shape to exercise the boundary/halo handling.
    shapes = [(2, 4, 16, 16), (1, 4, 15, 13)]
    keys = jax.random.split(key, len(shapes))
    for k, (B, C, H, W) in zip(keys, shapes):
        x = jax.random.normal(k, (B, C, H, W), dtype=jnp.float32)

        out = jax.block_until_ready(l2pooling(x, w_np))
        ref = l2pooling_ref(x, w_jnp)

        Ho = (H + 2 - 3) // 2 + 1
        Wo = (W + 2 - 3) // 2 + 1
        assert out.shape == (B, C, Ho, Wo)
        np.testing.assert_allclose(np.asarray(out), np.asarray(ref), rtol=1e-5, atol=1e-5)

    print("KERNEL_OK")
</pallas_src>

<mosaic_0001>
module attributes {stable_mosaic.version = 11 : i64} {
  func.func @_l2pool_kernel(%arg0: i32, %arg1: i32, %arg2: memref<8x16xf32, #tpu.memory_space<vmem>>, %arg3: memref<16x8xf32, #tpu.memory_space<vmem>>, %arg4: memref<1x4x16x16xf32, #tpu.memory_space<vmem>>, %arg5: memref<1x4x8x8xf32, #tpu.memory_space<vmem>>) attributes {dimension_semantics = [#tpu.dimension_semantics<parallel>, #tpu.dimension_semantics<parallel>], iteration_bounds = array<i64: 2, 1>, scalar_prefetch = 0 : i64, scratch_operands = 0 : i64, tpu.core_type = #tpu.core_type<tc>, window_params = [{pipeline_mode = #tpu.pipeline_mode<synchronous>, transform_indices = @transform_0, window_bounds = array<i64: 8, 16>}, {pipeline_mode = #tpu.pipeline_mode<synchronous>, transform_indices = @transform_1, window_bounds = array<i64: 16, 8>}, {transform_indices = @transform_2, window_bounds = array<i64: 1, 4, 16, 16>}, {transform_indices = @transform_3, window_bounds = array<i64: 1, 4, 8, 8>}]} {
    %c0 = arith.constant 0 : index
    %c0_0 = arith.constant 0 : index
    %0 = vector.load %arg2[%c0, %c0_0] : memref<8x16xf32, #tpu.memory_space<vmem>>, vector<8x16xf32>
    %c0_1 = arith.constant 0 : index
    %c0_2 = arith.constant 0 : index
    %1 = vector.load %arg3[%c0_1, %c0_2] : memref<16x8xf32, #tpu.memory_space<vmem>>, vector<16x8xf32>
    %c0_3 = arith.constant 0 : index
    %c0_4 = arith.constant 0 : index
    %c0_5 = arith.constant 0 : index
    %c0_6 = arith.constant 0 : index
    %2 = vector.load %arg4[%c0_3, %c0_4, %c0_5, %c0_6] : memref<1x4x16x16xf32, #tpu.memory_space<vmem>>, vector<1x1x16x16xf32>
    %3 = vector.shape_cast %2 : vector<1x1x16x16xf32> to vector<16x16xf32>
    %4 = arith.mulf %3, %3 : vector<16x16xf32>
    %cst = arith.constant dense<0.000000e+00> : vector<16x8xf32>
    %5 = tpu.matmul %4, %1, %cst {dimension_numbers = #tpu.dot_dimension_numbers<[1], [0], [0], [1], [0, 0, 1, 1], [], []>, precision = #tpu.contract_precision<fp32>} : vector<16x16xf32>, vector<16x8xf32>, vector<16x8xf32> -> vector<16x8xf32>
    %cst_7 = arith.constant dense<0.000000e+00> : vector<8x8xf32>
    %6 = tpu.matmul %0, %5, %cst_7 {dimension_numbers = #tpu.dot_dimension_numbers<[1], [0], [0], [1], [0, 0, 1, 1], [], []>, precision = #tpu.contract_precision<fp32>} : vector<8x16xf32>, vector<16x8xf32>, vector<8x8xf32> -> vector<8x8xf32>
    %cst_8 = arith.constant 9.99999996E-13 : f32
    %7 = vector.broadcast %cst_8 : f32 to vector<8x8xf32>
    %8 = arith.addf %6, %7 : vector<8x8xf32>
    %9 = math.sqrt %8 : vector<8x8xf32>
    %c0_9 = arith.constant 0 : index
    %c0_10 = arith.constant 0 : index
    %c0_11 = arith.constant 0 : index
    %c0_12 = arith.constant 0 : index
    %10 = vector.load %arg5[%c0_9, %c0_10, %c0_11, %c0_12] : memref<1x4x8x8xf32, #tpu.memory_space<vmem>>, vector<1x1x8x8xf32>
    %11 = vector.shape_cast %10 : vector<1x1x8x8xf32> to vector<8x8xf32>
    %12 = vector.shape_cast %9 : vector<8x8xf32> to vector<1x1x8x8xf32>
    tpu.vector_store %arg5[%c0_9, %c0_10, %c0_11, %c0_12], %12 {strides = array<i32>} : memref<1x4x8x8xf32, #tpu.memory_space<vmem>>, vector<1x1x8x8xf32>,
    %c0_13 = arith.constant 0 : index
    %c1 = arith.constant 1 : index
    %c0_14 = arith.constant 0 : index
    %c0_15 = arith.constant 0 : index
    %13 = vector.load %arg4[%c0_13, %c1, %c0_14, %c0_15] : memref<1x4x16x16xf32, #tpu.memory_space<vmem>>, vector<1x1x16x16xf32>
    %14 = vector.shape_cast %13 : vector<1x1x16x16xf32> to vector<16x16xf32>
    %15 = arith.mulf %14, %14 : vector<16x16xf32>
    %cst_16 = arith.constant dense<0.000000e+00> : vector<16x8xf32>
    %16 = tpu.matmul %15, %1, %cst_16 {dimension_numbers = #tpu.dot_dimension_numbers<[1], [0], [0], [1], [0, 0, 1, 1], [], []>, precision = #tpu.contract_precision<fp32>} : vector<16x16xf32>, vector<16x8xf32>, vector<16x8xf32> -> vector<16x8xf32>
    %cst_17 = arith.constant dense<0.000000e+00> : vector<8x8xf32>
    %17 = tpu.matmul %0, %16, %cst_17 {dimension_numbers = #tpu.dot_dimension_numbers<[1], [0], [0], [1], [0, 0, 1, 1], [], []>, precision = #tpu.contract_precision<fp32>} : vector<8x16xf32>, vector<16x8xf32>, vector<8x8xf32> -> vector<8x8xf32>
    %cst_18 = arith.constant 9.99999996E-13 : f32
    %18 = vector.broadcast %cst_18 : f32 to vector<8x8xf32>
    %19 = arith.addf %17, %18 : vector<8x8xf32>
    %20 = math.sqrt %19 : vector<8x8xf32>
    %c0_19 = arith.constant 0 : index
    %c1_20 = arith.constant 1 : index
    %c0_21 = arith.constant 0 : index
    %c0_22 = arith.constant 0 : index
    %21 = vector.load %arg5[%c0_19, %c1_20, %c0_21, %c0_22] : memref<1x4x8x8xf32, #tpu.memory_space<vmem>>, vector<1x1x8x8xf32>
    %22 = vector.shape_cast %21 : vector<1x1x8x8xf32> to vector<8x8xf32>
    %23 = vector.shape_cast %20 : vector<8x8xf32> to vector<1x1x8x8xf32>
    tpu.vector_store %arg5[%c0_19, %c1_20, %c0_21, %c0_22], %23 {strides = array<i32>} : memref<1x4x8x8xf32, #tpu.memory_space<vmem>>, vector<1x1x8x8xf32>,
    %c0_23 = arith.constant 0 : index
    %c2 = arith.constant 2 : index
    %c0_24 = arith.constant 0 : index
    %c0_25 = arith.constant 0 : index
    %24 = vector.load %arg4[%c0_23, %c2, %c0_24, %c0_25] : memref<1x4x16x16xf32, #tpu.memory_space<vmem>>, vector<1x1x16x16xf32>
    %25 = vector.shape_cast %24 : vector<1x1x16x16xf32> to vector<16x16xf32>
    %26 = arith.mulf %25, %25 : vector<16x16xf32>
    %cst_26 = arith.constant dense<0.000000e+00> : vector<16x8xf32>
    %27 = tpu.matmul %26, %1, %cst_26 {dimension_numbers = #tpu.dot_dimension_numbers<[1], [0], [0], [1], [0, 0, 1, 1], [], []>, precision = #tpu.contract_precision<fp32>} : vector<16x16xf32>, vector<16x8xf32>, vector<16x8xf32> -> vector<16x8xf32>
    %cst_27 = arith.constant dense<0.000000e+00> : vector<8x8xf32>
    %28 = tpu.matmul %0, %27, %cst_27 {dimension_numbers = #tpu.dot_dimension_numbers<[1], [0], [0], [1], [0, 0, 1, 1], [], []>, precision = #tpu.contract_precision<fp32>} : vector<8x16xf32>, vector<16x8xf32>, vector<8x8xf32> -> vector<8x8xf32>
    %cst_28 = arith.constant 9.99999996E-13 : f32
    %29 = vector.broadcast %cst_28 : f32 to vector<8x8xf32>
    %30 = arith.addf %28, %29 : vector<8x8xf32>
    %31 = math.sqrt %30 : vector<8x8xf32>
    %c0_29 = arith.constant 0 : index
    %c2_30 = arith.constant 2 : index
    %c0_31 = arith.constant 0 : index
    %c0_32 = arith.constant 0 : index
    %32 = vector.load %arg5[%c0_29, %c2_30, %c0_31, %c0_32] : memref<1x4x8x8xf32, #tpu.memory_space<vmem>>, vector<1x1x8x8xf32>
    %33 = vector.shape_cast %32 : vector<1x1x8x8xf32> to vector<8x8xf32>
    %34 = vector.shape_cast %31 : vector<8x8xf32> to vector<1x1x8x8xf32>
    tpu.vector_store %arg5[%c0_29, %c2_30, %c0_31, %c0_32], %34 {strides = array<i32>} : memref<1x4x8x8xf32, #tpu.memory_space<vmem>>, vector<1x1x8x8xf32>,
    %c0_33 = arith.constant 0 : index
    %c3 = arith.constant 3 : index
    %c0_34 = arith.constant 0 : index
    %c0_35 = arith.constant 0 : index
    %35 = vector.load %arg4[%c0_33, %c3, %c0_34, %c0_35] : memref<1x4x16x16xf32, #tpu.memory_space<vmem>>, vector<1x1x16x16xf32>
    %36 = vector.shape_cast %35 : vector<1x1x16x16xf32> to vector<16x16xf32>
    %37 = arith.mulf %36, %36 : vector<16x16xf32>
    %cst_36 = arith.constant dense<0.000000e+00> : vector<16x8xf32>
    %38 = tpu.matmul %37, %1, %cst_36 {dimension_numbers = #tpu.dot_dimension_numbers<[1], [0], [0], [1], [0, 0, 1, 1], [], []>, precision = #tpu.contract_precision<fp32>} : vector<16x16xf32>, vector<16x8xf32>, vector<16x8xf32> -> vector<16x8xf32>
    %cst_37 = arith.constant dense<0.000000e+00> : vector<8x8xf32>
    %39 = tpu.matmul %0, %38, %cst_37 {dimension_numbers = #tpu.dot_dimension_numbers<[1], [0], [0], [1], [0, 0, 1, 1], [], []>, precision = #tpu.contract_precision<fp32>} : vector<8x16xf32>, vector<16x8xf32>, vector<8x8xf32> -> vector<8x8xf32>
    %cst_38 = arith.constant 9.99999996E-13 : f32
    %40 = vector.broadcast %cst_38 : f32 to vector<8x8xf32>
    %41 = arith.addf %39, %40 : vector<8x8xf32>
    %42 = math.sqrt %41 : vector<8x8xf32>
    %c0_39 = arith.constant 0 : index
    %c3_40 = arith.constant 3 : index
    %c0_41 = arith.constant 0 : index
    %c0_42 = arith.constant 0 : index
    %43 = vector.load %arg5[%c0_39, %c3_40, %c0_41, %c0_42] : memref<1x4x8x8xf32, #tpu.memory_space<vmem>>, vector<1x1x8x8xf32>
    %44 = vector.shape_cast %43 : vector<1x1x8x8xf32> to vector<8x8xf32>
    %45 = vector.shape_cast %42 : vector<8x8xf32> to vector<1x1x8x8xf32>
    tpu.vector_store %arg5[%c0_39, %c3_40, %c0_41, %c0_42], %45 {strides = array<i32>} : memref<1x4x8x8xf32, #tpu.memory_space<vmem>>, vector<1x1x8x8xf32>,
    return
  }
  func.func @transform_0(%arg0: i32, %arg1: i32) -> (i32, i32) {
    %c0_i32 = arith.constant 0 : i32
    %c0_i32_0 = arith.constant 0 : i32
    %c0_i32_1 = arith.constant 0 : i32
    return %c0_i32, %c0_i32_0 : i32, i32
  }
  func.func @transform_1(%arg0: i32, %arg1: i32) -> (i32, i32) {
    %c0_i32 = arith.constant 0 : i32
    %c0_i32_0 = arith.constant 0 : i32
    %c0_i32_1 = arith.constant 0 : i32
    return %c0_i32, %c0_i32_0 : i32, i32
  }
  func.func @transform_2(%arg0: i32, %arg1: i32) -> (i32, i32, i32, i32) {
    %c0_i32 = arith.constant 0 : i32
    %c0_i32_0 = arith.constant 0 : i32
    %c0_i32_1 = arith.constant 0 : i32
    return %arg0, %arg1, %c0_i32, %c0_i32_0 : i32, i32, i32, i32
  }
  func.func @transform_3(%arg0: i32, %arg1: i32) -> (i32, i32, i32, i32) {
    %c0_i32 = arith.constant 0 : i32
    %c0_i32_0 = arith.constant 0 : i32
    %c0_i32_1 = arith.constant 0 : i32
    return %arg0, %arg1, %c0_i32, %c0_i32_0 : i32, i32, i32, i32
  }
}

</mosaic_0001>

<llo_original>
// kernel: tpu_custom_call.1
$region0: #{tpu_custom_call.1}
  #allocation0 [shape = 'u32[]', space=smem, size = 0x4, offset = 0x4, fixed_abs, tag = 'smem constant byte address 0x4 - core index']
  #allocation1 [shape = 'u32[144,128]{1,0:T(1,128)}', space=vmem, size = 0x12000, scoped, tag = 'internal scratch']
  %s0 = inlined_call_operand.vmem [shape: f32[8,16], index: 0, kind: input, shape index: {}]
  %s1 = inlined_call_operand.vmem [shape: f32[16,8], index: 1, kind: input, shape index: {}]
  %s2 = inlined_call_operand.hbm [shape: f32[2,4,16,16], index: 2, kind: input, shape index: {}]
  %s3 = inlined_call_operand.hbm [shape: f32[2,4,8,8], index: 3, kind: output, shape index: {}]
  %s4 = sld [smem:[#allocation0]]
  $region49: #{tpu_custom_call.1} parent=0
    _
  %s6 = ssub.s32 1, %s4
  %s7 = scalar_select 0, %s6, %s4
  $region1: #{tpu_custom_call.1} parent=0
    #allocation2 [shape = 'u8[65536]{0}', space=vmem, size = 0x10000, scoped, tag = 'input window, operand 2']
    #allocation3 [shape = 's32[2]{0}', space=sflag, size = 0x8, scoped, tag = 'scoped memory for tpu_custom_call.1']
    #allocation4 [shape = 's32[2]{0}', space=sflag, size = 0x8, scoped, tag = 'scoped memory for tpu_custom_call.1']
    #allocation5 [shape = 'u8[32768]{0}', space=vmem, size = 0x8000, scoped, tag = 'output window, operand 0']
    %8 = vsyncpa [#allocation3], 0
    %s9 = scalar_lea.sflag [#allocation3], 1
    %10 = vsyncpa %s9, 0
    %11 = vsyncpa [#allocation4], 0
    %s12 = scalar_lea.sflag [#allocation4], 1
    %13 = vsyncpa %s12, 0
    loop: start=0, step=1, limit=4
    $region2: #{tpu_custom_call.1} parent=1 // loop_pre_header
      _
    $region3: #{tpu_custom_call.1} parent=1 // loop_header
      %s15 = sphi 0, %s19
      %p16 = scmp.ge.s32.totalorder %s15, 4
      %s22 = sphi 0, %s34
      %s23 = sphi 0, %s30
      %s24 = sphi 0, %s22
      %s25 = sphi 0, %s23
      %s26 = sphi 0, %s24
      %s27 = sphi 0, %s25
      %s35 = sphi 0, %s35
      %s37 = sphi 0, %s35
      %s38 = sphi 0, %s37
      %s52 = sphi 0, %s38
      %s56 = sphi 0, %s56
      %s58 = sphi 0, %s56
      %s59 = sphi 0, %s58
      %s73 = sphi 0, %s59
      %s81 = sphi 0, %s83
      %s84 = sphi 0, %s81
      %s85 = sphi 0, %s84
      %s101 = sphi 0, %s85
      %s109 = sphi 0, %s111
      %s112 = sphi 0, %s109
      %s113 = sphi 0, %s112
      %s129 = sphi 0, %s113
    $region4: #{tpu_custom_call.1} parent=1 // loop_header_branch
      %18 = sbr.rel (%p16) target = $region8
    $region5: #{tpu_custom_call.1} parent=1 // loop_body
      %s20 = ssub.s32 %s15, 1
      %s21 = ssub.s32 %s15, 2
      %s28 = sadd.s32 1, %s23
      %p29 = scmp.ge.s32.totalorder %s28, 1
      %s30 = scalar_select %p29, 0, %s28
      %s31 = sadd.s32 1, %s22
      %s32 = scalar_select %p29, %s31, %s22
      %p33 = scmp.ge.s32.totalorder %s32, 2
      %s34 = scalar_select %p33, 0, %s32
      %s36 = sadd.s32 %s35, 1
      %p39 = scmp.eq.s32.totalorder %s15, 1
      %p40 = scmp.ne.s32.totalorder %s35, %s37
      %p41 = scmp.eq.s32.totalorder %s15, 0
      %p42 = por %p40, %p41
      %p43 = scmp.ne.s32.totalorder %s35, %s37
      %p44 = scmp.eq.s32.totalorder %s20, 1
      %p45 = por %p43, %p44
      %p46 = scmp.ne.s32.totalorder %s37, %s38
      %p47 = scmp.eq.s32.totalorder %s20, 0
      %p48 = por %p46, %p47
      %p49 = scmp.ne.s32.totalorder %s37, %s38
      %p50 = scmp.eq.s32.totalorder %s21, 1
      %p51 = por %p49, %p50
      %p53 = scmp.ne.s32.totalorder %s38, %s52
      %p54 = scmp.eq.s32.totalorder %s21, 0
      %p55 = por %p53, %p54
      %s57 = sadd.s32 %s56, 1
      %p60 = scmp.eq.s32.totalorder %s15, 1
      %p61 = scmp.ne.s32.totalorder %s56, %s58
      %p62 = scmp.eq.s32.totalorder %s15, 0
      %p63 = por %p61, %p62
      %p64 = scmp.ne.s32.totalorder %s56, %s58
      %p65 = scmp.eq.s32.totalorder %s20, 1
      %p66 = por %p64, %p65
      %p67 = scmp.ne.s32.totalorder %s58, %s59
      %p68 = scmp.eq.s32.totalorder %s20, 0
      %p69 = por %p67, %p68
      %p70 = scmp.ne.s32.totalorder %s58, %s59
      %p71 = scmp.eq.s32.totalorder %s21, 1
      %p72 = por %p70, %p71
      %p74 = scmp.ne.s32.totalorder %s59, %s73
      %p75 = scmp.eq.s32.totalorder %s21, 0
      %p76 = por %p74, %p75
      %s77 = ssub.s32 %s22, %s34
      %s78 = ssub.s32 %s23, %s30
      %s79 = sor.u32 %s77, %s78
      %p80 = scmp.eq.s32.totalorder %s79, 0
      %s82 = sadd.s32 %s81, 1
      %s83 = scalar_select %p80, %s81, %s82
      %p86 = pneg %p80
      %p87 = scmp.eq.s32.totalorder %s15, 1
      %p88 = por %p86, %p87
      %p89 = scmp.ne.s32.totalorder %s81, %s84
      %p90 = scmp.eq.s32.totalorder %s15, 0
      %p91 = por %p89, %p90
      %p92 = scmp.ne.s32.totalorder %s81, %s84
      %p93 = scmp.eq.s32.totalorder %s20, 1
      %p94 = por %p92, %p93
      %p95 = scmp.ne.s32.totalorder %s84, %s85
      %p96 = scmp.eq.s32.totalorder %s20, 0
      %p97 = por %p95, %p96
      %p98 = scmp.ne.s32.totalorder %s84, %s85
      %p99 = scmp.eq.s32.totalorder %s21, 1
      %p100 = por %p98, %p99
      %p102 = scmp.ne.s32.totalorder %s85, %s101
      %p103 = scmp.eq.s32.totalorder %s21, 0
      %p104 = por %p102, %p103
      %s105 = ssub.s32 %s22, %s34
      %s106 = ssub.s32 %s23, %s30
      %s107 = sor.u32 %s105, %s106
      %p108 = scmp.eq.s32.totalorder %s107, 0
      %s110 = sadd.s32 %s109, 1
      %s111 = scalar_select %p108, %s109, %s110
      %p114 = pneg %p108
      %p115 = scmp.eq.s32.totalorder %s15, 1
      %p116 = por %p114, %p115
      %p117 = scmp.ne.s32.totalorder %s109, %s112
      %p118 = scmp.eq.s32.totalorder %s15, 0
      %p119 = por %p117, %p118
      %p120 = scmp.ne.s32.totalorder %s109, %s112
      %p121 = scmp.eq.s32.totalorder %s20, 1
      %p122 = por %p120, %p121
      %p123 = scmp.ne.s32.totalorder %s112, %s113
      %p124 = scmp.eq.s32.totalorder %s20, 0
      %p125 = por %p123, %p124
      %p126 = scmp.ne.s32.totalorder %s112, %s113
      %p127 = scmp.eq.s32.totalorder %s21, 1
      %p128 = por %p126, %p127
      %p130 = scmp.ne.s32.totalorder %s113, %s129
      %p131 = scmp.eq.s32.totalorder %s21, 0
      %p132 = por %p130, %p131
      %p133 = scmp.le.s32.totalorder 1, %s15
      %p134 = scmp.lt.s32.totalorder %s15, 3
      %p135 = pnand %p133, %p134
      %p136 = pneg %p135
      // Predicated region
      $region9: #{tpu_custom_call.1} parent=5 // pred_check
        _
      $region10: #{tpu_custom_call.1} parent=5 // pred_check_branch
        %138 = sbr.rel (%p135) target = $region12
      $region11: #{tpu_custom_call.1} parent=5 // pred_region
        %s139 = ssub.s32 %s15, 1
        // Predicated region
        $region13: #{tpu_custom_call.1} parent=11 // pred_check
          %p140 = pneg %p48
        $region14: #{tpu_custom_call.1} parent=11 // pred_check_branch
          %142 = sbr.rel (%p140) target = $region16
        $region15: #{tpu_custom_call.1} parent=11 // pred_region
          _
        $region16: #{tpu_custom_call.1} parent=11 // pred_fallthru
          _
        // Predicated region
        $region17: #{tpu_custom_call.1} parent=11 // pred_check
          %p143 = pneg %p69
        $region18: #{tpu_custom_call.1} parent=11 // pred_check_branch
          %145 = sbr.rel (%p143) target = $region20
        $region19: #{tpu_custom_call.1} parent=11 // pred_region
          _
        $region20: #{tpu_custom_call.1} parent=11 // pred_fallthru
          _
      $region12: #{tpu_custom_call.1} parent=5 // pred_fallthru
        _
      %p146 = scmp.lt.s32.totalorder %s15, 2
      // Predicated region
      $region21: #{tpu_custom_call.1} parent=5 // pred_check
        %p147 = pneg %p146
      $region22: #{tpu_custom_call.1} parent=5 // pred_check_branch
        %149 = sbr.rel (%p147) target = $region24
      $region23: #{tpu_custom_call.1} parent=5 // pred_region
        // Predicated region
        $region25: #{tpu_custom_call.1} parent=23 // pred_check
          %p150 = pneg %p91
        $region26: #{tpu_custom_call.1} parent=23 // pred_check_branch
          %152 = sbr.rel (%p150) target = $region28
        $region27: #{tpu_custom_call.1} parent=23 // pred_region
          %s153 = sand.u32 %s81, 1
          %s154 = scalar_lea.sflag [#allocation3], %s153
          %s155 = sand.u32 %s81, 1
          %s156 = smul.addr %s155, 64
          %s157 = scalar_lea.vmem [#allocation2], %s156
          %s158 = smul.u32 4, %s23
          %s160 = ssub.s32 1024, 1024
          %161 = vsyncadd %s154, %s160
          %s162 = smul.addr %s158, 2
          %s163 = smul.addr %s22, 8
          %s164 = sadd.s32 %s162, %s163
          %s165 = smul.addr %s164, 128
          %s166 = scalar_lea.hbm %s2, %s165
          %s167 = sshll.u32 %s157, 4
          %s168 = int_to_ptr.vmem [resolvable:$true] %s167
          %173 = dma.hbm_to_vmem [thread:$0]  %s166, 1024, %s168, %s154, 128, 128, 8
        $region28: #{tpu_custom_call.1} parent=23 // pred_fallthru
          _
      $region24: #{tpu_custom_call.1} parent=5 // pred_fallthru
        _
      %p174 = scmp.le.s32.totalorder 1, %s15
      %p175 = scmp.lt.s32.totalorder %s15, 3
      %p176 = pnand %p174, %p175
      %p177 = pneg %p176
      // Predicated region
      $region29: #{tpu_custom_call.1} parent=5 // pred_check
        _
      $region30: #{tpu_custom_call.1} parent=5 // pred_check_branch
        %179 = sbr.rel (%p176) target = $region32
      $region31: #{tpu_custom_call.1} parent=5 // pred_region
        %s180 = ssub.s32 %s15, 1
        %s181 = sand.u32 %s84, 1
        %s182 = scalar_lea.sflag [#allocation3], %s181
        %s183 = sand.u32 %s84, 1
        %s184 = smul.addr %s183, 64
        %s185 = scalar_lea.vmem [#allocation2], %s184
        // Predicated region
        $region33: #{tpu_custom_call.1} parent=31 // pred_check
          %p186 = pneg %p97
        $region34: #{tpu_custom_call.1} parent=31 // pred_check_branch
          %188 = sbr.rel (%p186) target = $region36
        $region35: #{tpu_custom_call.1} parent=31 // pred_region
          %189 = dma.done %s182, 1024
        $region36: #{tpu_custom_call.1} parent=31 // pred_fallthru
          _
        %p190 = pneg %p48
        %p191 = pneg %p45
        %p192 = pneg %p69
        %p193 = pneg %p66
        %s194 = sand.u32 %s84, 1
        %s195 = scalar_lea.sflag [#allocation3], %s194
        %s196 = sand.u32 %s84, 1
        %s197 = smul.addr %s196, 64
        %s198 = scalar_lea.vmem [#allocation2], %s197
        %p199 = pneg %p97
        %p200 = pneg %p94
        %p201 = pneg %p125
        %p202 = pneg %p122
        %s203 = sand.u32 %s112, 1
        %s204 = scalar_lea.sflag [#allocation4], %s203
        %s205 = sand.u32 %s112, 1
        %s206 = smul.addr %s205, 32
        %s207 = scalar_lea.vmem [#allocation5], %s206
        %s208 = smul.u32 4, %s25
        %s209 = smul.u32 4, %s25
        %v210 = vld [vmem:[%s0] sm:$0xff]
        %v211 = vld [vmem:[%s1] sm:$0xff]
        %v212 = vld [vmem:[%s1 + $0x8] sm:$0xff]
        %v213 = vld [vmem:[%s185] sm:$0xff]
        %v214 = vld [vmem:[%s185 + $0x8] sm:$0xff]
        %v215 = vmul.f32 %v213, %v213
        %v216 = vmul.f32 %v214, %v214
        %vm217 = vcmask 130048
        %v219 = vsel %vm217, %v215, 0
        %v222 = vsel %vm217, %v216, 0
        %224 = vmatprep.subr.mxu0 0.0
        %v225 = vand.u32 %v211, 4294901760
        %226 = vmatpush1.msra.mxu0 %v225
        %227 = vmatprep.subr.mxu0 0.0
        %v228 = vand.u32 %v212, 4294901760
        %229 = vmatpush1.msra.mxu0 %v228
        %230 = vmatprep.subr.mxu0 0.0
        %231 = vmatpush1.msra.mxu0 0.0
        %232 = vmatprep.subr.mxu0 0.0
        %233 = vmatpush1.msra.mxu0 0.0
        %234 = vmatprep.subr.mxu0 0.0
        %235 = vmatpush1.msra.mxu0 0.0
        %236 = vmatprep.subr.mxu0 0.0
        %237 = vmatpush1.msra.mxu0 0.0
        %238 = vmatprep.subr.mxu0 0.0
        %239 = vmatpush1.msra.mxu0 0.0
        %240 = vmatprep.subr.mxu0 0.0
        %241 = vmatpush1.msra.mxu0 0.0
        %242 = vmatprep.subr.mxu0 0.0
        %243 = vmatpush1.msra.mxu0 0.0
        %244 = vmatprep.subr.mxu0 0.0
        %245 = vmatpush1.msra.mxu0 0.0
        %246 = vmatprep.subr.mxu0 0.0
        %247 = vmatpush1.msra.mxu0 0.0
        %248 = vmatprep.subr.mxu0 0.0
        %249 = vmatpush1.msra.mxu0 0.0
        %250 = vmatprep.subr.mxu0 0.0
        %251 = vmatpush1.msra.mxu0 0.0
        %252 = vmatprep.subr.mxu0 0.0
        %253 = vmatpush1.msra.mxu0 0.0
        %254 = vmatprep.subr.mxu0 0.0
        %255 = vmatpush1.msra.mxu0 0.0
        %256 = vmatprep.subr.mxu0 0.0
        %257 = vmatpush1.msra.mxu0 0.0
        %258 = vmatprep.subr.mxu0 0.0
        %259 = vmatpush1.msra.mxu0 0.0
        %260 = vmatprep.subr.mxu0 0.0
        %261 = vmatpush1.msra.mxu0 0.0
        %262 = vmatprep.subr.mxu0 0.0
        %263 = vmatpush1.msra.mxu0 0.0
        %264 = vmatprep.subr.mxu0 0.0
        %265 = vmatpush1.msra.mxu0 0.0
        %266 = vmatprep.subr.mxu0 0.0
        %267 = vmatpush1.msra.mxu0 0.0
        %268 = vmatprep.subr.mxu0 0.0
        %269 = vmatpush1.msra.mxu0 0.0
        %270 = vmatprep.subr.mxu0 0.0
        %271 = vmatpush1.msra.mxu0 0.0
        %272 = vmatprep.subr.mxu0 0.0
        %273 = vmatpush1.msra.mxu0 0.0
        %274 = vmatprep.subr.mxu0 0.0
        %275 = vmatpush1.msra.mxu0 0.0
        %276 = vmatprep.subr.mxu0 0.0
        %277 = vmatpush1.msra.mxu0 0.0
        %278 = vmatprep.subr.mxu0 0.0
        %279 = vmatpush1.msra.mxu0 0.0
        %280 = vmatprep.subr.mxu0 0.0
        %281 = vmatpush1.msra.mxu0 0.0
        %282 = vmatprep.subr.mxu0 0.0
        %283 = vmatpush1.msra.mxu0 0.0
        %284 = vmatprep.subr.mxu0 0.0
        %285 = vmatpush1.msra.mxu0 0.0
        %286 = vmatprep.subr.mxu0 0.0
        %287 = vmatpush1.msra.mxu0 0.0
        %288 = vmatprep.subr.mxu0 0.0
        %289 = vmatpush1.msra.mxu0 0.0
        %290 = vmatprep.mubr.f32.mxu0 0.0
        %v291 = vand.u32 %v219, 4294901760
        %v292 = vsub.f32 %v219, %v291
        %v293 = vand.u32 %v292, 4294901760
        %v294 = vsub.f32 %v292, %v293
        %v295 = vand.u32 %v294, 4294901760
        %296 = vmatmul.mubr.f32.gmra.mrb[0].mxu0 %v295
        %v297 = vpop.f32.mrb[0].mxu0
        %v298 = vadd.f32 0.0, %v297
        %v299 = vpop.f32.mrb[0].mxu0
        %300 = vmatprep.mubr.f32.mxu0 0.0
        %v301 = vand.u32 %v222, 4294901760
        %v302 = vsub.f32 %v222, %v301
        %v303 = vand.u32 %v302, 4294901760
        %v304 = vsub.f32 %v302, %v303
        %v305 = vand.u32 %v304, 4294901760
        %306 = vmatmul.mubr.f32.gmra.mrb[0].mxu0 %v305
        %v307 = vpop.f32.mrb[0].mxu0
        %v308 = vadd.f32 0.0, %v307
        %v309 = vpop.f32.mrb[0].mxu0
        %310 = vdwg.mxu0
        %311 = vmatprep.subr.mxu0 0.0
        %v312 = vand.u32 %v211, 4294901760
        %v313 = vsub.f32 %v211, %v312
        %v314 = vand.u32 %v313, 4294901760
        %v315 = vsub.f32 %v313, %v314
        %v316 = vand.u32 %v315, 4294901760
        %317 = vmatpush1.msra.mxu0 %v316
        %318 = vmatprep.subr.mxu0 0.0
        %v319 = vand.u32 %v212, 4294901760
        %v320 = vsub.f32 %v212, %v319
        %v321 = vand.u32 %v320, 4294901760
        %v322 = vsub.f32 %v320, %v321
        %v323 = vand.u32 %v322, 4294901760
        %324 = vmatpush1.msra.mxu0 %v323
        %325 = vmatprep.subr.mxu0 0.0
        %326 = vmatpush1.msra.mxu0 0.0
        %327 = vmatprep.subr.mxu0 0.0
        %328 = vmatpush1.msra.mxu0 0.0
        %329 = vmatprep.subr.mxu0 0.0
        %330 = vmatpush1.msra.mxu0 0.0
        %331 = vmatprep.subr.mxu0 0.0
        %332 = vmatpush1.msra.mxu0 0.0
        %333 = vmatprep.subr.mxu0 0.0
        %334 = vmatpush1.msra.mxu0 0.0
        %335 = vmatprep.subr.mxu0 0.0
        %336 = vmatpush1.msra.mxu0 0.0
        %337 = vmatprep.subr.mxu0 0.0
        %338 = vmatpush1.msra.mxu0 0.0
        %339 = vmatprep.subr.mxu0 0.0
        %340 = vmatpush1.msra.mxu0 0.0
        %341 = vmatprep.subr.mxu0 0.0
        %342 = vmatpush1.msra.mxu0 0.0
        %343 = vmatprep.subr.mxu0 0.0
        %344 = vmatpush1.msra.mxu0 0.0
        %345 = vmatprep.subr.mxu0 0.0
        %346 = vmatpush1.msra.mxu0 0.0
        %347 = vmatprep.subr.mxu0 0.0
        %348 = vmatpush1.msra.mxu0 0.0
        %349 = vmatprep.subr.mxu0 0.0
        %350 = vmatpush1.msra.mxu0 0.0
        %351 = vmatprep.subr.mxu0 0.0
        %352 = vmatpush1.msra.mxu0 0.0
        %353 = vmatprep.subr.mxu0 0.0
        %354 = vmatpush1.msra.mxu0 0.0
        %355 = vmatprep.subr.mxu0 0.0
        %356 = vmatpush1.msra.mxu0 0.0
        %357 = vmatprep.subr.mxu0 0.0
        %358 = vmatpush1.msra.mxu0 0.0
        %359 = vmatprep.subr.mxu0 0.0
        %360 = vmatpush1.msra.mxu0 0.0
        %361 = vmatprep.subr.mxu0 0.0
        %362 = vmatpush1.msra.mxu0 0.0
        %363 = vmatprep.subr.mxu0 0.0
        %364 = vmatpush1.msra.mxu0 0.0
        %365 = vmatprep.subr.mxu0 0.0
        %366 = vmatpush1.msra.mxu0 0.0
        %367 = vmatprep.subr.mxu0 0.0
        %368 = vmatpush1.msra.mxu0 0.0
        %369 = vmatprep.subr.mxu0 0.0
        %370 = vmatpush1.msra.mxu0 0.0
        %371 = vmatprep.subr.mxu0 0.0
        %372 = vmatpush1.msra.mxu0 0.0
        %373 = vmatprep.subr.mxu0 0.0
        %374 = vmatpush1.msra.mxu0 0.0
        %375 = vmatprep.subr.mxu0 0.0
        %376 = vmatpush1.msra.mxu0 0.0
        %377 = vmatprep.subr.mxu0 0.0
        %378 = vmatpush1.msra.mxu0 0.0
        %379 = vmatprep.subr.mxu0 0.0
        %380 = vmatpush1.msra.mxu0 0.0
        %381 = vmatprep.subr.mxu0 0.0
        %382 = vmatpush1.msra.mxu0 0.0
        %383 = vmatprep.subr.mxu0 0.0
        %384 = vmatpush1.msra.mxu0 0.0
        %385 = vmatprep.mubr.f32.mxu0 0.0
        %v386 = vand.u32 %v219, 4294901760
        %387 = vmatmul.mubr.f32.gmra.mrb[0].mxu0 %v386
        %v388 = vpop.f32.mrb[0].mxu0
        %v389 = vadd.f32 %v298, %v388
        %v390 = vpop.f32.mrb[0].mxu0
        %391 = vmatprep.mubr.f32.mxu0 0.0
        %v392 = vand.u32 %v222, 4294901760
        %393 = vmatmul.mubr.f32.gmra.mrb[0].mxu0 %v392
        %v394 = vpop.f32.mrb[0].mxu0
        %v395 = vadd.f32 %v308, %v394
        %v396 = vpop.f32.mrb[0].mxu0
        %397 = vdwg.mxu0
        %398 = vmatprep.subr.mxu0 0.0
        %v399 = vand.u32 %v211, 4294901760
        %v400 = vsub.f32 %v211, %v399
        %401 = vmatpush1.msra.mxu0 %v400
        %402 = vmatprep.subr.mxu0 0.0
        %v403 = vand.u32 %v212, 4294901760
        %v404 = vsub.f32 %v212, %v403
        %405 = vmatpush1.msra.mxu0 %v404
        %406 = vmatprep.subr.mxu0 0.0
        %407 = vmatpush1.msra.mxu0 0.0
        %408 = vmatprep.subr.mxu0 0.0
        %409 = vmatpush1.msra.mxu0 0.0
        %410 = vmatprep.subr.mxu0 0.0
        %411 = vmatpush1.msra.mxu0 0.0
        %412 = vmatprep.subr.mxu0 0.0
        %413 = vmatpush1.msra.mxu0 0.0
        %414 = vmatprep.subr.mxu0 0.0
        %415 = vmatpush1.msra.mxu0 0.0
        %416 = vmatprep.subr.mxu0 0.0
        %417 = vmatpush1.msra.mxu0 0.0
        %418 = vmatprep.subr.mxu0 0.0
        %419 = vmatpush1.msra.mxu0 0.0
        %420 = vmatprep.subr.mxu0 0.0
        %421 = vmatpush1.msra.mxu0 0.0
        %422 = vmatprep.subr.mxu0 0.0
        %423 = vmatpush1.msra.mxu0 0.0
        %424 = vmatprep.subr.mxu0 0.0
        %425 = vmatpush1.msra.mxu0 0.0
        %426 = vmatprep.subr.mxu0 0.0
        %427 = vmatpush1.msra.mxu0 0.0
        %428 = vmatprep.subr.mxu0 0.0
        %429 = vmatpush1.msra.mxu0 0.0
        %430 = vmatprep.subr.mxu0 0.0
        %431 = vmatpush1.msra.mxu0 0.0
        %432 = vmatprep.subr.mxu0 0.0
        %433 = vmatpush1.msra.mxu0 0.0
        %434 = vmatprep.subr.mxu0 0.0
        %435 = vmatpush1.msra.mxu0 0.0
        %436 = vmatprep.subr.mxu0 0.0
        %437 = vmatpush1.msra.mxu0 0.0
        %438 = vmatprep.subr.mxu0 0.0
        %439 = vmatpush1.msra.mxu0 0.0
        %440 = vmatprep.subr.mxu0 0.0
        %441 = vmatpush1.msra.mxu0 0.0
        %442 = vmatprep.subr.mxu0 0.0
        %443 = vmatpush1.msra.mxu0 0.0
        %444 = vmatprep.subr.mxu0 0.0
        %445 = vmatpush1.msra.mxu0 0.0
        %446 = vmatprep.subr.mxu0 0.0
        %447 = vmatpush1.msra.mxu0 0.0
        %448 = vmatprep.subr.mxu0 0.0
        %449 = vmatpush1.msra.mxu0 0.0
        %450 = vmatprep.subr.mxu0 0.0
        %451 = vmatpush1.msra.mxu0 0.0
        %452 = vmatprep.subr.mxu0 0.0
        %453 = vmatpush1.msra.mxu0 0.0
        %454 = vmatprep.subr.mxu0 0.0
        %455 = vmatpush1.msra.mxu0 0.0
        %456 = vmatprep.subr.mxu0 0.0
        %457 = vmatpush1.msra.mxu0 0.0
        %458 = vmatprep.subr.mxu0 0.0
        %459 = vmatpush1.msra.mxu0 0.0
        %460 = vmatprep.subr.mxu0 0.0
        %461 = vmatpush1.msra.mxu0 0.0
        %462 = vmatprep.subr.mxu0 0.0
        %463 = vmatpush1.msra.mxu0 0.0
        %464 = vmatprep.subr.mxu0 0.0
        %465 = vmatpush1.msra.mxu0 0.0
        %466 = vmatprep.mubr.f32.mxu0 0.0
        %v467 = vand.u32 %v219, 4294901760
        %v468 = vsub.f32 %v219, %v467
        %469 = vmatmul.mubr.f32.gmra.mrb[0].mxu0 %v468
        %v470 = vpop.f32.mrb[0].mxu0
        %v471 = vadd.f32 %v389, %v470
        %v472 = vpop.f32.mrb[0].mxu0
        %473 = vmatprep.mubr.f32.mxu0 0.0
        %v474 = vand.u32 %v222, 4294901760
        %v475 = vsub.f32 %v222, %v474
        %476 = vmatmul.mubr.f32.gmra.mrb[0].mxu0 %v475
        %v477 = vpop.f32.mrb[0].mxu0
        %v478 = vadd.f32 %v395, %v477
        %v479 = vpop.f32.mrb[0].mxu0
        %480 = vdwg.mxu0
        %481 = vmatprep.subr.mxu0 0.0
        %v482 = vand.u32 %v211, 4294901760
        %483 = vmatpush1.msra.mxu0 %v482
        %484 = vmatprep.subr.mxu0 0.0
        %v485 = vand.u32 %v212, 4294901760
        %486 = vmatpush1.msra.mxu0 %v485
        %487 = vmatprep.subr.mxu0 0.0
        %488 = vmatpush1.msra.mxu0 0.0
        %489 = vmatprep.subr.mxu0 0.0
        %490 = vmatpush1.msra.mxu0 0.0
        %491 = vmatprep.subr.mxu0 0.0
        %492 = vmatpush1.msra.mxu0 0.0
        %493 = vmatprep.subr.mxu0 0.0
        %494 = vmatpush1.msra.mxu0 0.0
        %495 = vmatprep.subr.mxu0 0.0
        %496 = vmatpush1.msra.mxu0 0.0
        %497 = vmatprep.subr.mxu0 0.0
        %498 = vmatpush1.msra.mxu0 0.0
        %499 = vmatprep.subr.mxu0 0.0
        %500 = vmatpush1.msra.mxu0 0.0
        %501 = vmatprep.subr.mxu0 0.0
        %502 = vmatpush1.msra.mxu0 0.0
        %503 = vmatprep.subr.mxu0 0.0
        %504 = vmatpush1.msra.mxu0 0.0
        %505 = vmatprep.subr.mxu0 0.0
        %506 = vmatpush1.msra.mxu0 0.0
        %507 = vmatprep.subr.mxu0 0.0
        %508 = vmatpush1.msra.mxu0 0.0
        %509 = vmatprep.subr.mxu0 0.0
        %510 = vmatpush1.msra.mxu0 0.0
        %511 = vmatprep.subr.mxu0 0.0
        %512 = vmatpush1.msra.mxu0 0.0
        %513 = vmatprep.subr.mxu0 0.0
        %514 = vmatpush1.msra.mxu0 0.0
        %515 = vmatprep.subr.mxu0 0.0
        %516 = vmatpush1.msra.mxu0 0.0
        %517 = vmatprep.subr.mxu0 0.0
        %518 = vmatpush1.msra.mxu0 0.0
        %519 = vmatprep.subr.mxu0 0.0
        %520 = vmatpush1.msra.mxu0 0.0
        %521 = vmatprep.subr.mxu0 0.0
        %522 = vmatpush1.msra.mxu0 0.0
        %523 = vmatprep.subr.mxu0 0.0
        %524 = vmatpush1.msra.mxu0 0.0
        %525 = vmatprep.subr.mxu0 0.0
        %526 = vmatpush1.msra.mxu0 0.0
        %527 = vmatprep.subr.mxu0 0.0
        %528 = vmatpush1.msra.mxu0 0.0
        %529 = vmatprep.subr.mxu0 0.0
        %530 = vmatpush1.msra.mxu0 0.0
        %531 = vmatprep.subr.mxu0 0.0
        %532 = vmatpush1.msra.mxu0 0.0
        %533 = vmatprep.subr.mxu0 0.0
        %534 = vmatpush1.msra.mxu0 0.0
        %535 = vmatprep.subr.mxu0 0.0
        %536 = vmatpush1.msra.mxu0 0.0
        %537 = vmatprep.subr.mxu0 0.0
        %538 = vmatpush1.msra.mxu0 0.0
        %539 = vmatprep.subr.mxu0 0.0
        %540 = vmatpush1.msra.mxu0 0.0
        %541 = vmatprep.subr.mxu0 0.0
        %542 = vmatpush1.msra.mxu0 0.0
        %543 = vmatprep.subr.mxu0 0.0
        %544 = vmatpush1.msra.mxu0 0.0
        %545 = vmatprep.subr.mxu0 0.0
        %546 = vmatpush1.msra.mxu0 0.0
        %547 = vmatprep.mubr.f32.mxu0 0.0
        %v548 = vand.u32 %v219, 4294901760
        %v549 = vsub.f32 %v219, %v548
        %v550 = vand.u32 %v549, 4294901760
        %551 = vmatmul.mubr.f32.gmra.mrb[0].mxu0 %v550
        %v552 = vpop.f32.mrb[0].mxu0
        %v553 = vadd.f32 %v471, %v552
        %v554 = vpop.f32.mrb[0].mxu0
        %555 = vmatprep.mubr.f32.mxu0 0.0
        %v556 = vand.u32 %v222, 4294901760
        %v557 = vsub.f32 %v222, %v556
        %v558 = vand.u32 %v557, 4294901760
        %559 = vmatmul.mubr.f32.gmra.mrb[0].mxu0 %v558
        %v560 = vpop.f32.mrb[0].mxu0
        %v561 = vadd.f32 %v478, %v560
        %v562 = vpop.f32.mrb[0].mxu0
        %563 = vdwg.mxu0
        %564 = vmatprep.subr.mxu0 0.0
        %v565 = vand.u32 %v211, 4294901760
        %v566 = vsub.f32 %v211, %v565
        %v567 = vand.u32 %v566, 4294901760
        %568 = vmatpush1.msra.mxu0 %v567
        %569 = vmatprep.subr.mxu0 0.0
        %v570 = vand.u32 %v212, 4294901760
        %v571 = vsub.f32 %v212, %v570
        %v572 = vand.u32 %v571, 4294901760
        %573 = vmatpush1.msra.mxu0 %v572
        %574 = vmatprep.subr.mxu0 0.0
        %575 = vmatpush1.msra.mxu0 0.0
        %576 = vmatprep.subr.mxu0 0.0
        %577 = vmatpush1.msra.mxu0 0.0
        %578 = vmatprep.subr.mxu0 0.0
        %579 = vmatpush1.msra.mxu0 0.0
        %580 = vmatprep.subr.mxu0 0.0
        %581 = vmatpush1.msra.mxu0 0.0
        %582 = vmatprep.subr.mxu0 0.0
        %583 = vmatpush1.msra.mxu0 0.0
        %584 = vmatprep.subr.mxu0 0.0
        %585 = vmatpush1.msra.mxu0 0.0
        %586 = vmatprep.subr.mxu0 0.0
        %587 = vmatpush1.msra.mxu0 0.0
        %588 = vmatprep.subr.mxu0 0.0
        %589 = vmatpush1.msra.mxu0 0.0
        %590 = vmatprep.subr.mxu0 0.0
        %591 = vmatpush1.msra.mxu0 0.0
        %592 = vmatprep.subr.mxu0 0.0
        %593 = vmatpush1.msra.mxu0 0.0
        %594 = vmatprep.subr.mxu0 0.0
        %595 = vmatpush1.msra.mxu0 0.0
        %596 = vmatprep.subr.mxu0 0.0
        %597 = vmatpush1.msra.mxu0 0.0
        %598 = vmatprep.subr.mxu0 0.0
        %599 = vmatpush1.msra.mxu0 0.0
        %600 = vmatprep.subr.mxu0 0.0
        %601 = vmatpush1.msra.mxu0 0.0
        %602 = vmatprep.subr.mxu0 0.0
        %603 = vmatpush1.msra.mxu0 0.0
        %604 = vmatprep.subr.mxu0 0.0
        %605 = vmatpush1.msra.mxu0 0.0
        %606 = vmatprep.subr.mxu0 0.0
        %607 = vmatpush1.msra.mxu0 0.0
        %608 = vmatprep.subr.mxu0 0.0
        %609 = vmatpush1.msra.mxu0 0.0
        %610 = vmatprep.subr.mxu0 0.0
        %611 = vmatpush1.msra.mxu0 0.0
        %612 = vmatprep.subr.mxu0 0.0
        %613 = vmatpush1.msra.mxu0 0.0
        %614 = vmatprep.subr.mxu0 0.0
        %615 = vmatpush1.msra.mxu0 0.0
        %616 = vmatprep.subr.mxu0 0.0
        %617 = vmatpush1.msra.mxu0 0.0
        %618 = vmatprep.subr.mxu0 0.0
        %619 = vmatpush1.msra.mxu0 0.0
        %620 = vmatprep.subr.mxu0 0.0
        %621 = vmatpush1.msra.mxu0 0.0
        %622 = vmatprep.subr.mxu0 0.0
        %623 = vmatpush1.msra.mxu0 0.0
        %624 = vmatprep.subr.mxu0 0.0
        %625 = vmatpush1.msra.mxu0 0.0
        %626 = vmatprep.subr.mxu0 0.0
        %627 = vmatpush1.msra.mxu0 0.0
        %628 = vmatprep.subr.mxu0 0.0
        %629 = vmatpush1.msra.mxu0 0.0
        %630 = vmatprep.subr.mxu0 0.0
        %631 = vmatpush1.msra.mxu0 0.0
        %632 = vmatprep.subr.mxu0 0.0
        %633 = vmatpush1.msra.mxu0 0.0
        %634 = vmatprep.mubr.f32.mxu0 0.0
        %v635 = vand.u32 %v219, 4294901760
        %636 = vmatmul.mubr.f32.gmra.mrb[0].mxu0 %v635
        %v637 = vpop.f32.mrb[0].mxu0
        %v638 = vadd.f32 %v553, %v637
        %v639 = vpop.f32.mrb[0].mxu0
        %640 = vmatprep.mubr.f32.mxu0 0.0
        %v641 = vand.u32 %v222, 4294901760
        %642 = vmatmul.mubr.f32.gmra.mrb[0].mxu0 %v641
        %v643 = vpop.f32.mrb[0].mxu0
        %v644 = vadd.f32 %v561, %v643
        %v645 = vpop.f32.mrb[0].mxu0
        %646 = vdwg.mxu0
        %647 = vmatprep.subr.mxu0 0.0
        %v648 = vand.u32 %v211, 4294901760
        %649 = vmatpush1.msra.mxu0 %v648
        %650 = vmatprep.subr.mxu0 0.0
        %v651 = vand.u32 %v212, 4294901760
        %652 = vmatpush1.msra.mxu0 %v651
        %653 = vmatprep.subr.mxu0 0.0
        %654 = vmatpush1.msra.mxu0 0.0
        %655 = vmatprep.subr.mxu0 0.0
        %656 = vmatpush1.msra.mxu0 0.0
        %657 = vmatprep.subr.mxu0 0.0
        %658 = vmatpush1.msra.mxu0 0.0
        %659 = vmatprep.subr.mxu0 0.0
        %660 = vmatpush1.msra.mxu0 0.0
        %661 = vmatprep.subr.mxu0 0.0
        %662 = vmatpush1.msra.mxu0 0.0
        %663 = vmatprep.subr.mxu0 0.0
        %664 = vmatpush1.msra.mxu0 0.0
        %665 = vmatprep.subr.mxu0 0.0
        %666 = vmatpush1.msra.mxu0 0.0
        %667 = vmatprep.subr.mxu0 0.0
        %668 = vmatpush1.msra.mxu0 0.0
        %669 = vmatprep.subr.mxu0 0.0
        %670 = vmatpush1.msra.mxu0 0.0
        %671 = vmatprep.subr.mxu0 0.0
        %672 = vmatpush1.msra.mxu0 0.0
        %673 = vmatprep.subr.mxu0 0.0
        %674 = vmatpush1.msra.mxu0 0.0
        %675 = vmatprep.subr.mxu0 0.0
        %676 = vmatpush1.msra.mxu0 0.0
        %677 = vmatprep.subr.mxu0 0.0
        %678 = vmatpush1.msra.mxu0 0.0
        %679 = vmatprep.subr.mxu0 0.0
        %680 = vmatpush1.msra.mxu0 0.0
        %681 = vmatprep.subr.mxu0 0.0
        %682 = vmatpush1.msra.mxu0 0.0
        %683 = vmatprep.subr.mxu0 0.0
        %684 = vmatpush1.msra.mxu0 0.0
        %685 = vmatprep.subr.mxu0 0.0
        %686 = vmatpush1.msra.mxu0 0.0
        %687 = vmatprep.subr.mxu0 0.0
        %688 = vmatpush1.msra.mxu0 0.0
        %689 = vmatprep.subr.mxu0 0.0
        %690 = vmatpush1.msra.mxu0 0.0
        %691 = vmatprep.subr.mxu0 0.0
        %692 = vmatpush1.msra.mxu0 0.0
        %693 = vmatprep.subr.mxu0 0.0
        %694 = vmatpush1.msra.mxu0 0.0
        %695 = vmatprep.subr.mxu0 0.0
        %696 = vmatpush1.msra.mxu0 0.0
        %697 = vmatprep.subr.mxu0 0.0
        %698 = vmatpush1.msra.mxu0 0.0
        %699 = vmatprep.subr.mxu0 0.0
        %700 = vmatpush1.msra.mxu0 0.0
        %701 = vmatprep.subr.mxu0 0.0
        %702 = vmatpush1.msra.mxu0 0.0
        %703 = vmatprep.subr.mxu0 0.0
        %704 = vmatpush1.msra.mxu0 0.0
        %705 = vmatprep.subr.mxu0 0.0
        %706 = vmatpush1.msra.mxu0 0.0
        %707 = vmatprep.subr.mxu0 0.0
        %708 = vmatpush1.msra.mxu0 0.0
        %709 = vmatprep.subr.mxu0 0.0
        %710 = vmatpush1.msra.mxu0 0.0
        %711 = vmatprep.subr.mxu0 0.0
        %712 = vmatpush1.msra.mxu0 0.0
        %713 = vmatprep.mubr.f32.mxu0 0.0
        %v714 = vand.u32 %v219, 4294901760
        %715 = vmatmul.mubr.f32.gmra.mrb[0].mxu0 %v714
        %v716 = vpop.f32.mrb[0].mxu0
        %v717 = vadd.f32 %v638, %v716
        %v718 = vpop.f32.mrb[0].mxu0
        %719 = vmatprep.mubr.f32.mxu0 0.0
        %v720 = vand.u32 %v222, 4294901760
        %721 = vmatmul.mubr.f32.gmra.mrb[0].mxu0 %v720
        %v722 = vpop.f32.mrb[0].mxu0
        %v723 = vadd.f32 %v644, %v722
        %v724 = vpop.f32.mrb[0].mxu0
        %725 = vdwg.mxu0
        %v727 = vsel %vm217, %v210, 0
        %729 = vmatprep.subr.mxu0 0.0
        %v730 = vand.u32 %v717, 4294901760
        %731 = vmatpush1.msra.mxu0 %v730
        %732 = vmatprep.subr.mxu0 0.0
        %v733 = vand.u32 %v723, 4294901760
        %734 = vmatpush1.msra.mxu0 %v733
        %735 = vmatprep.subr.mxu0 0.0
        %736 = vmatpush1.msra.mxu0 0.0
        %737 = vmatprep.subr.mxu0 0.0
        %738 = vmatpush1.msra.mxu0 0.0
        %739 = vmatprep.subr.mxu0 0.0
        %740 = vmatpush1.msra.mxu0 0.0
        %741 = vmatprep.subr.mxu0 0.0
        %742 = vmatpush1.msra.mxu0 0.0
        %743 = vmatprep.subr.mxu0 0.0
        %744 = vmatpush1.msra.mxu0 0.0
        %745 = vmatprep.subr.mxu0 0.0
        %746 = vmatpush1.msra.mxu0 0.0
        %747 = vmatprep.subr.mxu0 0.0
        %748 = vmatpush1.msra.mxu0 0.0
        %749 = vmatprep.subr.mxu0 0.0
        %750 = vmatpush1.msra.mxu0 0.0
        %751 = vmatprep.subr.mxu0 0.0
        %752 = vmatpush1.msra.mxu0 0.0
        %753 = vmatprep.subr.mxu0 0.0
        %754 = vmatpush1.msra.mxu0 0.0
        %755 = vmatprep.subr.mxu0 0.0
        %756 = vmatpush1.msra.mxu0 0.0
        %757 = vmatprep.subr.mxu0 0.0
        %758 = vmatpush1.msra.mxu0 0.0
        %759 = vmatprep.subr.mxu0 0.0
        %760 = vmatpush1.msra.mxu0 0.0
        %761 = vmatprep.subr.mxu0 0.0
        %762 = vmatpush1.msra.mxu0 0.0
        %763 = vmatprep.subr.mxu0 0.0
        %764 = vmatpush1.msra.mxu0 0.0
        %765 = vmatprep.subr.mxu0 0.0
        %766 = vmatpush1.msra.mxu0 0.0
        %767 = vmatprep.subr.mxu0 0.0
        %768 = vmatpush1.msra.mxu0 0.0
        %769 = vmatprep.subr.mxu0 0.0
        %770 = vmatpush1.msra.mxu0 0.0
        %771 = vmatprep.subr.mxu0 0.0
        %772 = vmatpush1.msra.mxu0 0.0
        %773 = vmatprep.subr.mxu0 0.0
        %774 = vmatpush1.msra.mxu0 0.0
        %775 = vmatprep.subr.mxu0 0.0
        %776 = vmatpush1.msra.mxu0 0.0
        %777 = vmatprep.subr.mxu0 0.0
        %778 = vmatpush1.msra.mxu0 0.0
        %779 = vmatprep.subr.mxu0 0.0
        %780 = vmatpush1.msra.mxu0 0.0
        %781 = vmatprep.subr.mxu0 0.0
        %782 = vmatpush1.msra.mxu0 0.0
        %783 = vmatprep.subr.mxu0 0.0
        %784 = vmatpush1.msra.mxu0 0.0
        %785 = vmatprep.subr.mxu0 0.0
        %786 = vmatpush1.msra.mxu0 0.0
        %787 = vmatprep.subr.mxu0 0.0
        %788 = vmatpush1.msra.mxu0 0.0
        %789 = vmatprep.subr.mxu0 0.0
        %790 = vmatpush1.msra.mxu0 0.0
        %791 = vmatprep.subr.mxu0 0.0
        %792 = vmatpush1.msra.mxu0 0.0
        %793 = vmatprep.subr.mxu0 0.0
        %794 = vmatpush1.msra.mxu0 0.0
        %795 = vmatprep.mubr.f32.mxu0 0.0
        %v796 = vand.u32 %v727, 4294901760
        %v797 = vsub.f32 %v727, %v796
        %v798 = vand.u32 %v797, 4294901760
        %v799 = vsub.f32 %v797, %v798
        %v800 = vand.u32 %v799, 4294901760
        %801 = vmatmul.mubr.f32.gmra.mrb[0].mxu0 %v800
        %v802 = vpop.f32.mrb[0].mxu0
        %v803 = vadd.f32 1e-12, %v802
        %v804 = vpop.f32.mrb[0].mxu0
        %805 = vdwg.mxu0
        %806 = vmatprep.subr.mxu0 0.0
        %v807 = vand.u32 %v717, 4294901760
        %v808 = vsub.f32 %v717, %v807
        %v809 = vand.u32 %v808, 4294901760
        %v810 = vsub.f32 %v808, %v809
        %v811 = vand.u32 %v810, 4294901760
        %812 = vmatpush1.msra.mxu0 %v811
        %813 = vmatprep.subr.mxu0 0.0
        %v814 = vand.u32 %v723, 4294901760
        %v815 = vsub.f32 %v723, %v814
        %v816 = vand.u32 %v815, 4294901760
        %v817 = vsub.f32 %v815, %v816
        %v818 = vand.u32 %v817, 4294901760
        %819 = vmatpush1.msra.mxu0 %v818
        %820 = vmatprep.subr.mxu0 0.0
        %821 = vmatpush1.msra.mxu0 0.0
        %822 = vmatprep.subr.mxu0 0.0
        %823 = vmatpush1.msra.mxu0 0.0
        %824 = vmatprep.subr.mxu0 0.0
        %825 = vmatpush1.msra.mxu0 0.0
        %826 = vmatprep.subr.mxu0 0.0
        %827 = vmatpush1.msra.mxu0 0.0
        %828 = vmatprep.subr.mxu0 0.0
        %829 = vmatpush1.msra.mxu0 0.0
        %830 = vmatprep.subr.mxu0 0.0
        %831 = vmatpush1.msra.mxu0 0.0
        %832 = vmatprep.subr.mxu0 0.0
        %833 = vmatpush1.msra.mxu0 0.0
        %834 = vmatprep.subr.mxu0 0.0
        %835 = vmatpush1.msra.mxu0 0.0
        %836 = vmatprep.subr.mxu0 0.0
        %837 = vmatpush1.msra.mxu0 0.0
        %838 = vmatprep.subr.mxu0 0.0
        %839 = vmatpush1.msra.mxu0 0.0
        %840 = vmatprep.subr.mxu0 0.0
        %841 = vmatpush1.msra.mxu0 0.0
        %842 = vmatprep.subr.mxu0 0.0
        %843 = vmatpush1.msra.mxu0 0.0
        %844 = vmatprep.subr.mxu0 0.0
        %845 = vmatpush1.msra.mxu0 0.0
        %846 = vmatprep.subr.mxu0 0.0
        %847 = vmatpush1.msra.mxu0 0.0
        %848 = vmatprep.subr.mxu0 0.0
        %849 = vmatpush1.msra.mxu0 0.0
        %850 = vmatprep.subr.mxu0 0.0
        %851 = vmatpush1.msra.mxu0 0.0
        %852 = vmatprep.subr.mxu0 0.0
        %853 = vmatpush1.msra.mxu0 0.0
        %854 = vmatprep.subr.mxu0 0.0
        %855 = vmatpush1.msra.mxu0 0.0
        %856 = vmatprep.subr.mxu0 0.0
        %857 = vmatpush1.msra.mxu0 0.0
        %858 = vmatprep.subr.mxu0 0.0
        %859 = vmatpush1.msra.mxu0 0.0
        %860 = vmatprep.subr.mxu0 0.0
        %861 = vmatpush1.msra.mxu0 0.0
        %862 = vmatprep.subr.mxu0 0.0
        %863 = vmatpush1.msra.mxu0 0.0
        %864 = vmatprep.subr.mxu0 0.0
        %865 = vmatpush1.msra.mxu0 0.0
        %866 = vmatprep.subr.mxu0 0.0
        %867 = vmatpush1.msra.mxu0 0.0
        %868 = vmatprep.subr.mxu0 0.0
        %869 = vmatpush1.msra.mxu0 0.0
        %870 = vmatprep.subr.mxu0 0.0
        %871 = vmatpush1.msra.mxu0 0.0
        %872 = vmatprep.subr.mxu0 0.0
        %873 = vmatpush1.msra.mxu0 0.0
        %874 = vmatprep.subr.mxu0 0.0
        %875 = vmatpush1.msra.mxu0 0.0
        %876 = vmatprep.subr.mxu0 0.0
        %877 = vmatpush1.msra.mxu0 0.0
        %878 = vmatprep.subr.mxu0 0.0
        %879 = vmatpush1.msra.mxu0 0.0
        %880 = vmatprep.mubr.f32.mxu0 0.0
        %v881 = vand.u32 %v727, 4294901760
        %882 = vmatmul.mubr.f32.gmra.mrb[0].mxu0 %v881
        %v883 = vpop.f32.mrb[0].mxu0
        %v884 = vadd.f32 %v803, %v883
        %v885 = vpop.f32.mrb[0].mxu0
        %886 = vdwg.mxu0
        %887 = vmatprep.subr.mxu0 0.0
        %v888 = vand.u32 %v717, 4294901760
        %v889 = vsub.f32 %v717, %v888
        %890 = vmatpush1.msra.mxu0 %v889
        %891 = vmatprep.subr.mxu0 0.0
        %v892 = vand.u32 %v723, 4294901760
        %v893 = vsub.f32 %v723, %v892
        %894 = vmatpush1.msra.mxu0 %v893
        %895 = vmatprep.subr.mxu0 0.0
        %896 = vmatpush1.msra.mxu0 0.0
        %897 = vmatprep.subr.mxu0 0.0
        %898 = vmatpush1.msra.mxu0 0.0
        %899 = vmatprep.subr.mxu0 0.0
        %900 = vmatpush1.msra.mxu0 0.0
        %901 = vmatprep.subr.mxu0 0.0
        %902 = vmatpush1.msra.mxu0 0.0
        %903 = vmatprep.subr.mxu0 0.0
        %904 = vmatpush1.msra.mxu0 0.0
        %905 = vmatprep.subr.mxu0 0.0
        %906 = vmatpush1.msra.mxu0 0.0
        %907 = vmatprep.subr.mxu0 0.0
        %908 = vmatpush1.msra.mxu0 0.0
        %909 = vmatprep.subr.mxu0 0.0
        %910 = vmatpush1.msra.mxu0 0.0
        %911 = vmatprep.subr.mxu0 0.0
        %912 = vmatpush1.msra.mxu0 0.0
        %913 = vmatprep.subr.mxu0 0.0
        %914 = vmatpush1.msra.mxu0 0.0
        %915 = vmatprep.subr.mxu0 0.0
        %916 = vmatpush1.msra.mxu0 0.0
        %917 = vmatprep.subr.mxu0 0.0
        %918 = vmatpush1.msra.mxu0 0.0
        %919 = vmatprep.subr.mxu0 0.0
        %920 = vmatpush1.msra.mxu0 0.0
        %921 = vmatprep.subr.mxu0 0.0
        %922 = vmatpush1.msra.mxu0 0.0
        %923 = vmatprep.subr.mxu0 0.0
        %924 = vmatpush1.msra.mxu0 0.0
        %925 = vmatprep.subr.mxu0 0.0
        %926 = vmatpush1.msra.mxu0 0.0
        %927 = vmatprep.subr.mxu0 0.0
        %928 = vmatpush1.msra.mxu0 0.0
        %929 = vmatprep.subr.mxu0 0.0
        %930 = vmatpush1.msra.mxu0 0.0
        %931 = vmatprep.subr.mxu0 0.0
        %932 = vmatpush1.msra.mxu0 0.0
        %933 = vmatprep.subr.mxu0 0.0
        %934 = vmatpush1.msra.mxu0 0.0
        %935 = vmatprep.subr.mxu0 0.0
        %936 = vmatpush1.msra.mxu0 0.0
        %937 = vmatprep.subr.mxu0 0.0
        %938 = vmatpush1.msra.mxu0 0.0
        %939 = vmatprep.subr.mxu0 0.0
        %940 = vmatpush1.msra.mxu0 0.0
        %941 = vmatprep.subr.mxu0 0.0
        %942 = vmatpush1.msra.mxu0 0.0
        %943 = vmatprep.subr.mxu0 0.0
        %944 = vmatpush1.msra.mxu0 0.0
        %945 = vmatprep.subr.mxu0 0.0
        %946 = vmatpush1.msra.mxu0 0.0
        %947 = vmatprep.subr.mxu0 0.0
        %948 = vmatpush1.msra.mxu0 0.0
        %949 = vmatprep.subr.mxu0 0.0
        %950 = vmatpush1.msra.mxu0 0.0
        %951 = vmatprep.subr.mxu0 0.0
        %952 = vmatpush1.msra.mxu0 0.0
        %953 = vmatprep.subr.mxu0 0.0
        %954 = vmatpush1.msra.mxu0 0.0
        %955 = vmatprep.mubr.f32.mxu0 0.0
        %v956 = vand.u32 %v727, 4294901760
        %v957 = vsub.f32 %v727, %v956
        %958 = vmatmul.mubr.f32.gmra.mrb[0].mxu0 %v957
        %v959 = vpop.f32.mrb[0].mxu0
        %v960 = vadd.f32 %v884, %v959
        %v961 = vpop.f32.mrb[0].mxu0
        %962 = vdwg.mxu0
        %963 = vmatprep.subr.mxu0 0.0
        %v964 = vand.u32 %v717, 4294901760
        %965 = vmatpush1.msra.mxu0 %v964
        %966 = vmatprep.subr.mxu0 0.0
        %v967 = vand.u32 %v723, 4294901760
        %968 = vmatpush1.msra.mxu0 %v967
        %969 = vmatprep.subr.mxu0 0.0
        %970 = vmatpush1.msra.mxu0 0.0
        %971 = vmatprep.subr.mxu0 0.0
        %972 = vmatpush1.msra.mxu0 0.0
        %973 = vmatprep.subr.mxu0 0.0
        %974 = vmatpush1.msra.mxu0 0.0
        %975 = vmatprep.subr.mxu0 0.0
        %976 = vmatpush1.msra.mxu0 0.0
        %977 = vmatprep.subr.mxu0 0.0
        %978 = vmatpush1.msra.mxu0 0.0
        %979 = vmatprep.subr.mxu0 0.0
        %980 = vmatpush1.msra.mxu0 0.0
        %981 = vmatprep.subr.mxu0 0.0
        %982 = vmatpush1.msra.mxu0 0.0
        %983 = vmatprep.subr.mxu0 0.0
        %984 = vmatpush1.msra.mxu0 0.0
        %985 = vmatprep.subr.mxu0 0.0
        %986 = vmatpush1.msra.mxu0 0.0
        %987 = vmatprep.subr.mxu0 0.0
        %988 = vmatpush1.msra.mxu0 0.0
        %989 = vmatprep.subr.mxu0 0.0
        %990 = vmatpush1.msra.mxu0 0.0
        %991 = vmatprep.subr.mxu0 0.0
        %992 = vmatpush1.msra.mxu0 0.0
        %993 = vmatprep.subr.mxu0 0.0
        %994 = vmatpush1.msra.mxu0 0.0
        %995 = vmatprep.subr.mxu0 0.0
        %996 = vmatpush1.msra.mxu0 0.0
        %997 = vmatprep.subr.mxu0 0.0
        %998 = vmatpush1.msra.mxu0 0.0
        %999 = vmatprep.subr.mxu0 0.0
        %1000 = vmatpush1.msra.mxu0 0.0
        %1001 = vmatprep.subr.mxu0 0.0
        %1002 = vmatpush1.msra.mxu0 0.0
        %1003 = vmatprep.subr.mxu0 0.0
        %1004 = vmatpush1.msra.mxu0 0.0
        %1005 = vmatprep.subr.mxu0 0.0
        %1006 = vmatpush1.msra.mxu0 0.0
        %1007 = vmatprep.subr.mxu0 0.0
        %1008 = vmatpush1.msra.mxu0 0.0
        %1009 = vmatprep.subr.mxu0 0.0
        %1010 = vmatpush1.msra.mxu0 0.0
        %1011 = vmatprep.subr.mxu0 0.0
        %1012 = vmatpush1.msra.mxu0 0.0
        %1013 = vmatprep.subr.mxu0 0.0
        %1014 = vmatpush1.msra.mxu0 0.0
        %1015 = vmatprep.subr.mxu0 0.0
        %1016 = vmatpush1.msra.mxu0 0.0
        %1017 = vmatprep.subr.mxu0 0.0
        %1018 = vmatpush1.msra.mxu0 0.0
        %1019 = vmatprep.subr.mxu0 0.0
        %1020 = vmatpush1.msra.mxu0 0.0
        %1021 = vmatprep.subr.mxu0 0.0
        %1022 = vmatpush1.msra.mxu0 0.0
        %1023 = vmatprep.subr.mxu0 0.0
        %1024 = vmatpush1.msra.mxu0 0.0
        %1025 = vmatprep.subr.mxu0 0.0
        %1026 = vmatpush1.msra.mxu0 0.0
        %1027 = vmatprep.subr.mxu0 0.0
        %1028 = vmatpush1.msra.mxu0 0.0
        %1029 = vmatprep.mubr.f32.mxu0 0.0
        %v1030 = vand.u32 %v727, 4294901760
        %v1031 = vsub.f32 %v727, %v1030
        %v1032 = vand.u32 %v1031, 4294901760
        %1033 = vmatmul.mubr.f32.gmra.mrb[0].mxu0 %v1032
        %v1034 = vpop.f32.mrb[0].mxu0
        %v1035 = vadd.f32 %v960, %v1034
        %v1036 = vpop.f32.mrb[0].mxu0
        %1037 = vdwg.mxu0
        %1038 = vmatprep.subr.mxu0 0.0
        %v1039 = vand.u32 %v717, 4294901760
        %v1040 = vsub.f32 %v717, %v1039
        %v1041 = vand.u32 %v1040, 4294901760
        %1042 = vmatpush1.msra.mxu0 %v1041
        %1043 = vmatprep.subr.mxu0 0.0
        %v1044 = vand.u32 %v723, 4294901760
        %v1045 = vsub.f32 %v723, %v1044
        %v1046 = vand.u32 %v1045, 4294901760
        %1047 = vmatpush1.msra.mxu0 %v1046
        %1048 = vmatprep.subr.mxu0 0.0
        %1049 = vmatpush1.msra.mxu0 0.0
        %1050 = vmatprep.subr.mxu0 0.0
        %1051 = vmatpush1.msra.mxu0 0.0
        %1052 = vmatprep.subr.mxu0 0.0
        %1053 = vmatpush1.msra.mxu0 0.0
        %1054 = vmatprep.subr.mxu0 0.0
        %1055 = vmatpush1.msra.mxu0 0.0
        %1056 = vmatprep.subr.mxu0 0.0
        %1057 = vmatpush1.msra.mxu0 0.0
        %1058 = vmatprep.subr.mxu0 0.0
        %1059 = vmatpush1.msra.mxu0 0.0
        %1060 = vmatprep.subr.mxu0 0.0
        %1061 = vmatpush1.msra.mxu0 0.0
        %1062 = vmatprep.subr.mxu0 0.0
        %1063 = vmatpush1.msra.mxu0 0.0
        %1064 = vmatprep.subr.mxu0 0.0
        %1065 = vmatpush1.msra.mxu0 0.0
        %1066 = vmatprep.subr.mxu0 0.0
        %1067 = vmatpush1.msra.mxu0 0.0
        %1068 = vmatprep.subr.mxu0 0.0
        %1069 = vmatpush1.msra.mxu0 0.0
        %1070 = vmatprep.subr.mxu0 0.0
        %1071 = vmatpush1.msra.mxu0 0.0
        %1072 = vmatprep.subr.mxu0 0.0
        %1073 = vmatpush1.msra.mxu0 0.0
        %1074 = vmatprep.subr.mxu0 0.0
        %1075 = vmatpush1.msra.mxu0 0.0
        %1076 = vmatprep.subr.mxu0 0.0
        %1077 = vmatpush1.msra.mxu0 0.0
        %1078 = vmatprep.subr.mxu0 0.0
        %1079 = vmatpush1.msra.mxu0 0.0
        %1080 = vmatprep.subr.mxu0 0.0
        %1081 = vmatpush1.msra.mxu0 0.0
        %1082 = vmatprep.subr.mxu0 0.0
        %1083 = vmatpush1.msra.mxu0 0.0
        %1084 = vmatprep.subr.mxu0 0.0
        %1085 = vmatpush1.msra.mxu0 0.0
        %1086 = vmatprep.subr.mxu0 0.0
        %1087 = vmatpush1.msra.mxu0 0.0
        %1088 = vmatprep.subr.mxu0 0.0
        %1089 = vmatpush1.msra.mxu0 0.0
        %1090 = vmatprep.subr.mxu0 0.0
        %1091 = vmatpush1.msra.mxu0 0.0
        %1092 = vmatprep.subr.mxu0 0.0
        %1093 = vmatpush1.msra.mxu0 0.0
        %1094 = vmatprep.subr.mxu0 0.0
        %1095 = vmatpush1.msra.mxu0 0.0
        %1096 = vmatprep.subr.mxu0 0.0
        %1097 = vmatpush1.msra.mxu0 0.0
        %1098 = vmatprep.subr.mxu0 0.0
        %1099 = vmatpush1.msra.mxu0 0.0
        %1100 = vmatprep.subr.mxu0 0.0
        %1101 = vmatpush1.msra.mxu0 0.0
        %1102 = vmatprep.subr.mxu0 0.0
        %1103 = vmatpush1.msra.mxu0 0.0
        %1104 = vmatprep.subr.mxu0 0.0
        %1105 = vmatpush1.msra.mxu0 0.0
        %1106 = vmatprep.subr.mxu0 0.0
        %1107 = vmatpush1.msra.mxu0 0.0
        %1108 = vmatprep.mubr.f32.mxu0 0.0
        %v1109 = vand.u32 %v727, 4294901760
        %1110 = vmatmul.mubr.f32.gmra.mrb[0].mxu0 %v1109
        %v1111 = vpop.f32.mrb[0].mxu0
        %v1112 = vadd.f32 %v1035, %v1111
        %v1113 = vpop.f32.mrb[0].mxu0
        %1114 = vdwg.mxu0
        %1115 = vmatprep.subr.mxu0 0.0
        %v1116 = vand.u32 %v717, 4294901760
        %1117 = vmatpush1.msra.mxu0 %v1116
        %1118 = vmatprep.subr.mxu0 0.0
        %v1119 = vand.u32 %v723, 4294901760
        %1120 = vmatpush1.msra.mxu0 %v1119
        %1121 = vmatprep.subr.mxu0 0.0
        %1122 = vmatpush1.msra.mxu0 0.0
        %1123 = vmatprep.subr.mxu0 0.0
        %1124 = vmatpush1.msra.mxu0 0.0
        %1125 = vmatprep.subr.mxu0 0.0
        %1126 = vmatpush1.msra.mxu0 0.0
        %1127 = vmatprep.subr.mxu0 0.0
        %1128 = vmatpush1.msra.mxu0 0.0
        %1129 = vmatprep.subr.mxu0 0.0
        %1130 = vmatpush1.msra.mxu0 0.0
        %1131 = vmatprep.subr.mxu0 0.0
        %1132 = vmatpush1.msra.mxu0 0.0
        %1133 = vmatprep.subr.mxu0 0.0
        %1134 = vmatpush1.msra.mxu0 0.0
        %1135 = vmatprep.subr.mxu0 0.0
        %1136 = vmatpush1.msra.mxu0 0.0
        %1137 = vmatprep.subr.mxu0 0.0
        %1138 = vmatpush1.msra.mxu0 0.0
        %1139 = vmatprep.subr.mxu0 0.0
        %1140 = vmatpush1.msra.mxu0 0.0
        %1141 = vmatprep.subr.mxu0 0.0
        %1142 = vmatpush1.msra.mxu0 0.0
        %1143 = vmatprep.subr.mxu0 0.0
        %1144 = vmatpush1.msra.mxu0 0.0
        %1145 = vmatprep.subr.mxu0 0.0
        %1146 = vmatpush1.msra.mxu0 0.0
        %1147 = vmatprep.subr.mxu0 0.0
        %1148 = vmatpush1.msra.mxu0 0.0
        %1149 = vmatprep.subr.mxu0 0.0
        %1150 = vmatpush1.msra.mxu0 0.0
        %1151 = vmatprep.subr.mxu0 0.0
        %1152 = vmatpush1.msra.mxu0 0.0
        %1153 = vmatprep.subr.mxu0 0.0
        %1154 = vmatpush1.msra.mxu0 0.0
        %1155 = vmatprep.subr.mxu0 0.0
        %1156 = vmatpush1.msra.mxu0 0.0
        %1157 = vmatprep.subr.mxu0 0.0
        %1158 = vmatpush1.msra.mxu0 0.0
        %1159 = vmatprep.subr.mxu0 0.0
        %1160 = vmatpush1.msra.mxu0 0.0
        %1161 = vmatprep.subr.mxu0 0.0
        %1162 = vmatpush1.msra.mxu0 0.0
        %1163 = vmatprep.subr.mxu0 0.0
        %1164 = vmatpush1.msra.mxu0 0.0
        %1165 = vmatprep.subr.mxu0 0.0
        %1166 = vmatpush1.msra.mxu0 0.0
        %1167 = vmatprep.subr.mxu0 0.0
        %1168 = vmatpush1.msra.mxu0 0.0
        %1169 = vmatprep.subr.mxu0 0.0
        %1170 = vmatpush1.msra.mxu0 0.0
        %1171 = vmatprep.subr.mxu0 0.0
        %1172 = vmatpush1.msra.mxu0 0.0
        %1173 = vmatprep.subr.mxu0 0.0
        %1174 = vmatpush1.msra.mxu0 0.0
        %1175 = vmatprep.subr.mxu0 0.0
        %1176 = vmatpush1.msra.mxu0 0.0
        %1177 = vmatprep.subr.mxu0 0.0
        %1178 = vmatpush1.msra.mxu0 0.0
        %1179 = vmatprep.subr.mxu0 0.0
        %1180 = vmatpush1.msra.mxu0 0.0
        %1181 = vmatprep.mubr.f32.mxu0 0.0
        %v1182 = vand.u32 %v727, 4294901760
        %1183 = vmatmul.mubr.f32.gmra.mrb[0].mxu0 %v1182
        %v1184 = vpop.f32.mrb[0].mxu0
        %v1185 = vadd.f32 %v1112, %v1184
        %v1186 = vpop.f32.mrb[0].mxu0
        %1187 = vdwg.mxu0
        %v1188 = vrsqrt.pop %v1185
        %v1189 = vmul.f32 %v1185, %v1188
        %vm1190 = vcmp.eq.f32.partialorder %v1185, inf
        %v1191 = vsel %vm1190, %v1185, %v1189
        %vm1192 = vcmp.eq.f32.partialorder %v1185, 0.0
        %v1193 = vand.u32 %v1185, 2147483648
        %v1194 = vsel %vm1192, %v1193, %v1191
        %vm1195 = vcmask 64512
        %1196 = vst.msk [vmem:[%s207] sm:$0xff] %vm1195, %v1194
        %s1197 = scalar_lea.vmem %s185, 16 [#allocation2]
        %v1198 = vld [vmem:[%s1197] sm:$0xff]
        %v1199 = vld [vmem:[%s1197 + $0x8] sm:$0xff]
        %v1200 = vmul.f32 %v1198, %v1198
        %v1201 = vmul.f32 %v1199, %v1199
        %v1203 = vsel %vm217, %v1200, 0
        %v1206 = vsel %vm217, %v1201, 0
        %1208 = vmatprep.subr.mxu0 0.0
        %v1209 = vand.u32 %v211, 4294901760
        %1210 = vmatpush1.msra.mxu0 %v1209
        %1211 = vmatprep.subr.mxu0 0.0
        %v1212 = vand.u32 %v212, 4294901760
        %1213 = vmatpush1.msra.mxu0 %v1212
        %1214 = vmatprep.subr.mxu0 0.0
        %1215 = vmatpush1.msra.mxu0 0.0
        %1216 = vmatprep.subr.mxu0 0.0
        %1217 = vmatpush1.msra.mxu0 0.0
        %1218 = vmatprep.subr.mxu0 0.0
        %1219 = vmatpush1.msra.mxu0 0.0
        %1220 = vmatprep.subr.mxu0 0.0
        %1221 = vmatpush1.msra.mxu0 0.0
        %1222 = vmatprep.subr.mxu0 0.0
        %1223 = vmatpush1.msra.mxu0 0.0
        %1224 = vmatprep.subr.mxu0 0.0
        %1225 = vmatpush1.msra.mxu0 0.0
        %1226 = vmatprep.subr.mxu0 0.0
        %1227 = vmatpush1.msra.mxu0 0.0
        %1228 = vmatprep.subr.mxu0 0.0
        %1229 = vmatpush1.msra.mxu0 0.0
        %1230 = vmatprep.subr.mxu0 0.0
        %1231 = vmatpush1.msra.mxu0 0.0
        %1232 = vmatprep.subr.mxu0 0.0
        %1233 = vmatpush1.msra.mxu0 0.0
        %1234 = vmatprep.subr.mxu0 0.0
        %1235 = vmatpush1.msra.mxu0 0.0
        %1236 = vmatprep.subr.mxu0 0.0
        %1237 = vmatpush1.msra.mxu0 0.0
        %1238 = vmatprep.subr.mxu0 0.0
        %1239 = vmatpush1.msra.mxu0 0.0
        %1240 = vmatprep.subr.mxu0 0.0
        %1241 = vmatpush1.msra.mxu0 0.0
        %1242 = vmatprep.subr.mxu0 0.0
        %1243 = vmatpush1.msra.mxu0 0.0
        %1244 = vmatprep.subr.mxu0 0.0
        %1245 = vmatpush1.msra.mxu0 0.0
        %1246 = vmatprep.subr.mxu0 0.0
        %1247 = vmatpush1.msra.mxu0 0.0
        %1248 = vmatprep.subr.mxu0 0.0
        %1249 = vmatpush1.msra.mxu0 0.0
        %1250 = vmatprep.subr.mxu0 0.0
        %1251 = vmatpush1.msra.mxu0 0.0
        %1252 = vmatprep.subr.mxu0 0.0
        %1253 = vmatpush1.msra.mxu0 0.0
        %1254 = vmatprep.subr.mxu0 0.0
        %1255 = vmatpush1.msra.mxu0 0.0
        %1256 = vmatprep.subr.mxu0 0.0
        %1257 = vmatpush1.msra.mxu0 0.0
        %1258 = vmatprep.subr.mxu0 0.0
        %1259 = vmatpush1.msra.mxu0 0.0
        %1260 = vmatprep.subr.mxu0 0.0
        %1261 = vmatpush1.msra.mxu0 0.0
        %1262 = vmatprep.subr.mxu0 0.0
        %1263 = vmatpush1.msra.mxu0 0.0
        %1264 = vmatprep.subr.mxu0 0.0
        %1265 = vmatpush1.msra.mxu0 0.0
        %1266 = vmatprep.subr.mxu0 0.0
        %1267 = vmatpush1.msra.mxu0 0.0
        %1268 = vmatprep.subr.mxu0 0.0
        %1269 = vmatpush1.msra.mxu0 0.0
        %1270 = vmatprep.subr.mxu0 0.0
        %1271 = vmatpush1.msra.mxu0 0.0
        %1272 = vmatprep.subr.mxu0 0.0
        %1273 = vmatpush1.msra.mxu0 0.0
        %1274 = vmatprep.mubr.f32.mxu0 0.0
        %v1275 = vand.u32 %v1203, 4294901760
        %v1276 = vsub.f32 %v1203, %v1275
        %v1277 = vand.u32 %v1276, 4294901760
        %v1278 = vsub.f32 %v1276, %v1277
        %v1279 = vand.u32 %v1278, 4294901760
        %1280 = vmatmul.mubr.f32.gmra.mrb[0].mxu0 %v1279
        %v1281 = vpop.f32.mrb[0].mxu0
        %v1282 = vadd.f32 0.0, %v1281
        %v1283 = vpop.f32.mrb[0].mxu0
        %1284 = vmatprep.mubr.f32.mxu0 0.0
        %v1285 = vand.u32 %v1206, 4294901760
        %v1286 = vsub.f32 %v1206, %v1285
        %v1287 = vand.u32 %v1286, 4294901760
        %v1288 = vsub.f32 %v1286, %v1287
        %v1289 = vand.u32 %v1288, 4294901760
        %1290 = vmatmul.mubr.f32.gmra.mrb[0].mxu0 %v1289
        %v1291 = vpop.f32.mrb[0].mxu0
        %v1292 = vadd.f32 0.0, %v1291
        %v1293 = vpop.f32.mrb[0].mxu0
        %1294 = vdwg.mxu0
        %1295 = vmatprep.subr.mxu0 0.0
        %v1296 = vand.u32 %v211, 4294901760
        %v1297 = vsub.f32 %v211, %v1296
        %v1298 = vand.u32 %v1297, 4294901760
        %v1299 = vsub.f32 %v1297, %v1298
        %v1300 = vand.u32 %v1299, 4294901760
        %1301 = vmatpush1.msra.mxu0 %v1300
        %1302 = vmatprep.subr.mxu0 0.0
        %v1303 = vand.u32 %v212, 4294901760
        %v1304 = vsub.f32 %v212, %v1303
        %v1305 = vand.u32 %v1304, 4294901760
        %v1306 = vsub.f32 %v1304, %v1305
        %v1307 = vand.u32 %v1306, 4294901760
        %1308 = vmatpush1.msra.mxu0 %v1307
        %1309 = vmatprep.subr.mxu0 0.0
        %1310 = vmatpush1.msra.mxu0 0.0
        %1311 = vmatprep.subr.mxu0 0.0
        %1312 = vmatpush1.msra.mxu0 0.0
        %1313 = vmatprep.subr.mxu0 0.0
        %1314 = vmatpush1.msra.mxu0 0.0
        %1315 = vmatprep.subr.mxu0 0.0
        %1316 = vmatpush1.msra.mxu0 0.0
        %1317 = vmatprep.subr.mxu0 0.0
        %1318 = vmatpush1.msra.mxu0 0.0
        %1319 = vmatprep.subr.mxu0 0.0
        %1320 = vmatpush1.msra.mxu0 0.0
        %1321 = vmatprep.subr.mxu0 0.0
        %1322 = vmatpush1.msra.mxu0 0.0
        %1323 = vmatprep.subr.mxu0 0.0
        %1324 = vmatpush1.msra.mxu0 0.0
        %1325 = vmatprep.subr.mxu0 0.0
        %1326 = vmatpush1.msra.mxu0 0.0
        %1327 = vmatprep.subr.mxu0 0.0
        %1328 = vmatpush1.msra.mxu0 0.0
        %1329 = vmatprep.subr.mxu0 0.0
        %1330 = vmatpush1.msra.mxu0 0.0
        %1331 = vmatprep.subr.mxu0 0.0
        %1332 = vmatpush1.msra.mxu0 0.0
        %1333 = vmatprep.subr.mxu0 0.0
        %1334 = vmatpush1.msra.mxu0 0.0
        %1335 = vmatprep.subr.mxu0 0.0
        %1336 = vmatpush1.msra.mxu0 0.0
        %1337 = vmatprep.subr.mxu0 0.0
        %1338 = vmatpush1.msra.mxu0 0.0
        %1339 = vmatprep.subr.mxu0 0.0
        %1340 = vmatpush1.msra.mxu0 0.0
        %1341 = vmatprep.subr.mxu0 0.0
        %1342 = vmatpush1.msra.mxu0 0.0
        %1343 = vmatprep.subr.mxu0 0.0
        %1344 = vmatpush1.msra.mxu0 0.0
        %1345 = vmatprep.subr.mxu0 0.0
        %1346 = vmatpush1.msra.mxu0 0.0
        %1347 = vmatprep.subr.mxu0 0.0
        %1348 = vmatpush1.msra.mxu0 0.0
        %1349 = vmatprep.subr.mxu0 0.0
        %1350 = vmatpush1.msra.mxu0 0.0
        %1351 = vmatprep.subr.mxu0 0.0
        %1352 = vmatpush1.msra.mxu0 0.0
        %1353 = vmatprep.subr.mxu0 0.0
        %1354 = vmatpush1.msra.mxu0 0.0
        %1355 = vmatprep.subr.mxu0 0.0
        %1356 = vmatpush1.msra.mxu0 0.0
        %1357 = vmatprep.subr.mxu0 0.0
        %1358 = vmatpush1.msra.mxu0 0.0
        %1359 = vmatprep.subr.mxu0 0.0
        %1360 = vmatpush1.msra.mxu0 0.0
        %1361 = vmatprep.subr.mxu0 0.0
        %1362 = vmatpush1.msra.mxu0 0.0
        %1363 = vmatprep.subr.mxu0 0.0
        %1364 = vmatpush1.msra.mxu0 0.0
        %1365 = vmatprep.subr.mxu0 0.0
        %1366 = vmatpush1.msra.mxu0 0.0
        %1367 = vmatprep.subr.mxu0 0.0
        %1368 = vmatpush1.msra.mxu0 0.0
        %1369 = vmatprep.mubr.f32.mxu0 0.0
        %v1370 = vand.u32 %v1203, 4294901760
        %1371 = vmatmul.mubr.f32.gmra.mrb[0].mxu0 %v1370
        %v1372 = vpop.f32.mrb[0].mxu0
        %v1373 = vadd.f32 %v1282, %v1372
        %v1374 = vpop.f32.mrb[0].mxu0
        %1375 = vmatprep.mubr.f32.mxu0 0.0
        %v1376 = vand.u32 %v1206, 4294901760
        %1377 = vmatmul.mubr.f32.gmra.mrb[0].mxu0 %v1376
        %v1378 = vpop.f32.mrb[0].mxu0
        %v1379 = vadd.f32 %v1292, %v1378
        %v1380 = vpop.f32.mrb[0].mxu0
        %1381 = vdwg.mxu0
        %1382 = vmatprep.subr.mxu0 0.0
        %v1383 = vand.u32 %v211, 4294901760
        %v1384 = vsub.f32 %v211, %v1383
        %1385 = vmatpush1.msra.mxu0 %v1384
        %1386 = vmatprep.subr.mxu0 0.0
        %v1387 = vand.u32 %v212, 4294901760
        %v1388 = vsub.f32 %v212, %v1387
        %1389 = vmatpush1.msra.mxu0 %v1388
        %1390 = vmatprep.subr.mxu0 0.0
        %1391 = vmatpush1.msra.mxu0 0.0
        %1392 = vmatprep.subr.mxu0 0.0
        %1393 = vmatpush1.msra.mxu0 0.0
        %1394 = vmatprep.subr.mxu0 0.0
        %1395 = vmatpush1.msra.mxu0 0.0
        %1396 = vmatprep.subr.mxu0 0.0
        %1397 = vmatpush1.msra.mxu0 0.0
        %1398 = vmatprep.subr.mxu0 0.0
        %1399 = vmatpush1.msra.mxu0 0.0
        %1400 = vmatprep.subr.mxu0 0.0
        %1401 = vmatpush1.msra.mxu0 0.0
        %1402 = vmatprep.subr.mxu0 0.0
        %1403 = vmatpush1.msra.mxu0 0.0
        %1404 = vmatprep.subr.mxu0 0.0
        %1405 = vmatpush1.msra.mxu0 0.0
        %1406 = vmatprep.subr.mxu0 0.0
        %1407 = vmatpush1.msra.mxu0 0.0
        %1408 = vmatprep.subr.mxu0 0.0
        %1409 = vmatpush1.msra.mxu0 0.0
        %1410 = vmatprep.subr.mxu0 0.0
        %1411 = vmatpush1.msra.mxu0 0.0
        %1412 = vmatprep.subr.mxu0 0.0
        %1413 = vmatpush1.msra.mxu0 0.0
        %1414 = vmatprep.subr.mxu0 0.0
        %1415 = vmatpush1.msra.mxu0 0.0
        %1416 = vmatprep.subr.mxu0 0.0
        %1417 = vmatpush1.msra.mxu0 0.0
        %1418 = vmatprep.subr.mxu0 0.0
        %1419 = vmatpush1.msra.mxu0 0.0
        %1420 = vmatprep.subr.mxu0 0.0
        %1421 = vmatpush1.msra.mxu0 0.0
        %1422 = vmatprep.subr.mxu0 0.0
        %1423 = vmatpush1.msra.mxu0 0.0
        %1424 = vmatprep.subr.mxu0 0.0
        %1425 = vmatpush1.msra.mxu0 0.0
        %1426 = vmatprep.subr.mxu0 0.0
        %1427 = vmatpush1.msra.mxu0 0.0
        %1428 = vmatprep.subr.mxu0 0.0
        %1429 = vmatpush1.msra.mxu0 0.0
        %1430 = vmatprep.subr.mxu0 0.0
        %1431 = vmatpush1.msra.mxu0 0.0
        %1432 = vmatprep.subr.mxu0 0.0
        %1433 = vmatpush1.msra.mxu0 0.0
        %1434 = vmatprep.subr.mxu0 0.0
        %1435 = vmatpush1.msra.mxu0 0.0
        %1436 = vmatprep.subr.mxu0 0.0
        %1437 = vmatpush1.msra.mxu0 0.0
        %1438 = vmatprep.subr.mxu0 0.0
        %1439 = vmatpush1.msra.mxu0 0.0
        %1440 = vmatprep.subr.mxu0 0.0
        %1441 = vmatpush1.msra.mxu0 0.0
        %1442 = vmatprep.subr.mxu0 0.0
        %1443 = vmatpush1.msra.mxu0 0.0
        %1444 = vmatprep.subr.mxu0 0.0
        %1445 = vmatpush1.msra.mxu0 0.0
        %1446 = vmatprep.subr.mxu0 0.0
        %1447 = vmatpush1.msra.mxu0 0.0
        %1448 = vmatprep.subr.mxu0 0.0
        %1449 = vmatpush1.msra.mxu0 0.0
        %1450 = vmatprep.mubr.f32.mxu0 0.0
        %v1451 = vand.u32 %v1203, 4294901760
        %v1452 = vsub.f32 %v1203, %v1451
        %1453 = vmatmul.mubr.f32.gmra.mrb[0].mxu0 %v1452
        %v1454 = vpop.f32.mrb[0].mxu0
        %v1455 = vadd.f32 %v1373, %v1454
        %v1456 = vpop.f32.mrb[0].mxu0
        %1457 = vmatprep.mubr.f32.mxu0 0.0
        %v1458 = vand.u32 %v1206, 4294901760
        %v1459 = vsub.f32 %v1206, %v1458
        %1460 = vmatmul.mubr.f32.gmra.mrb[0].mxu0 %v1459
        %v1461 = vpop.f32.mrb[0].mxu0
        %v1462 = vadd.f32 %v1379, %v1461
        %v1463 = vpop.f32.mrb[0].mxu0
        %1464 = vdwg.mxu0
        %1465 = vmatprep.subr.mxu0 0.0
        %v1466 = vand.u32 %v211, 4294901760
        %1467 = vmatpush1.msra.mxu0 %v1466
        %1468 = vmatprep.subr.mxu0 0.0
        %v1469 = vand.u32 %v212, 4294901760
        %1470 = vmatpush1.msra.mxu0 %v1469
        %1471 = vmatprep.subr.mxu0 0.0
        %1472 = vmatpush1.msra.mxu0 0.0
        %1473 = vmatprep.subr.mxu0 0.0
        %1474 = vmatpush1.msra.mxu0 0.0
        %1475 = vmatprep.subr.mxu0 0.0
        %1476 = vmatpush1.msra.mxu0 0.0
        %1477 = vmatprep.subr.mxu0 0.0
        %1478 = vmatpush1.msra.mxu0 0.0
        %1479 = vmatprep.subr.mxu0 0.0
        %1480 = vmatpush1.msra.mxu0 0.0
        %1481 = vmatprep.subr.mxu0 0.0
        %1482 = vmatpush1.msra.mxu0 0.0
        %1483 = vmatprep.subr.mxu0 0.0
        %1484 = vmatpush1.msra.mxu0 0.0
        %1485 = vmatprep.subr.mxu0 0.0
        %1486 = vmatpush1.msra.mxu0 0.0
        %1487 = vmatprep.subr.mxu0 0.0
        %1488 = vmatpush1.msra.mxu0 0.0
        %1489 = vmatprep.subr.mxu0 0.0
        %1490 = vmatpush1.msra.mxu0 0.0
        %1491 = vmatprep.subr.mxu0 0.0
        %1492 = vmatpush1.msra.mxu0 0.0
        %1493 = vmatprep.subr.mxu0 0.0
        %1494 = vmatpush1.msra.mxu0 0.0
        %1495 = vmatprep.subr.mxu0 0.0
        %1496 = vmatpush1.msra.mxu0 0.0
        %1497 = vmatprep.subr.mxu0 0.0
        %1498 = vmatpush1.msra.mxu0 0.0
        %1499 = vmatprep.subr.mxu0 0.0
        %1500 = vmatpush1.msra.mxu0 0.0
        %1501 = vmatprep.subr.mxu0 0.0
        %1502 = vmatpush1.msra.mxu0 0.0
        %1503 = vmatprep.subr.mxu0 0.0
        %1504 = vmatpush1.msra.mxu0 0.0
        %1505 = vmatprep.subr.mxu0 0.0
        %1506 = vmatpush1.msra.mxu0 0.0
        %1507 = vmatprep.subr.mxu0 0.0
        %1508 = vmatpush1.msra.mxu0 0.0
        %1509 = vmatprep.subr.mxu0 0.0
        %1510 = vmatpush1.msra.mxu0 0.0
        %1511 = vmatprep.subr.mxu0 0.0
        %1512 = vmatpush1.msra.mxu0 0.0
        %1513 = vmatprep.subr.mxu0 0.0
        %1514 = vmatpush1.msra.mxu0 0.0
        %1515 = vmatprep.subr.mxu0 0.0
        %1516 = vmatpush1.msra.mxu0 0.0
        %1517 = vmatprep.subr.mxu0 0.0
        %1518 = vmatpush1.msra.mxu0 0.0
        %1519 = vmatprep.subr.mxu0 0.0
        %1520 = vmatpush1.msra.mxu0 0.0
        %1521 = vmatprep.subr.mxu0 0.0
        %1522 = vmatpush1.msra.mxu0 0.0
        %1523 = vmatprep.subr.mxu0 0.0
        %1524 = vmatpush1.msra.mxu0 0.0
        %1525 = vmatprep.subr.mxu0 0.0
        %1526 = vmatpush1.msra.mxu0 0.0
        %1527 = vmatprep.subr.mxu0 0.0
        %1528 = vmatpush1.msra.mxu0 0.0
        %1529 = vmatprep.subr.mxu0 0.0
        %1530 = vmatpush1.msra.mxu0 0.0
        %1531 = vmatprep.mubr.f32.mxu0 0.0
        %v1532 = vand.u32 %v1203, 4294901760
        %v1533 = vsub.f32 %v1203, %v1532
        %v1534 = vand.u32 %v1533, 4294901760
        %1535 = vmatmul.mubr.f32.gmra.mrb[0].mxu0 %v1534
        %v1536 = vpop.f32.mrb[0].mxu0
        %v1537 = vadd.f32 %v1455, %v1536
        %v1538 = vpop.f32.mrb[0].mxu0
        %1539 = vmatprep.mubr.f32.mxu0 0.0
        %v1540 = vand.u32 %v1206, 4294901760
        %v1541 = vsub.f32 %v1206, %v1540
        %v1542 = vand.u32 %v1541, 4294901760
        %1543 = vmatmul.mubr.f32.gmra.mrb[0].mxu0 %v1542
        %v1544 = vpop.f32.mrb[0].mxu0
        %v1545 = vadd.f32 %v1462, %v1544
        %v1546 = vpop.f32.mrb[0].mxu0
        %1547 = vdwg.mxu0
        %1548 = vmatprep.subr.mxu0 0.0
        %v1549 = vand.u32 %v211, 4294901760
        %v1550 = vsub.f32 %v211, %v1549
        %v1551 = vand.u32 %v1550, 4294901760
        %1552 = vmatpush1.msra.mxu0 %v1551
        %1553 = vmatprep.subr.mxu0 0.0
        %v1554 = vand.u32 %v212, 4294901760
        %v1555 = vsub.f32 %v212, %v1554
        %v1556 = vand.u32 %v1555, 4294901760
        %1557 = vmatpush1.msra.mxu0 %v1556
        %1558 = vmatprep.subr.mxu0 0.0
        %1559 = vmatpush1.msra.mxu0 0.0
        %1560 = vmatprep.subr.mxu0 0.0
        %1561 = vmatpush1.msra.mxu0 0.0
        %1562 = vmatprep.subr.mxu0 0.0
        %1563 = vmatpush1.msra.mxu0 0.0
        %1564 = vmatprep.subr.mxu0 0.0
        %1565 = vmatpush1.msra.mxu0 0.0
        %1566 = vmatprep.subr.mxu0 0.0
        %1567 = vmatpush1.msra.mxu0 0.0
        %1568 = vmatprep.subr.mxu0 0.0
        %1569 = vmatpush1.msra.mxu0 0.0
        %1570 = vmatprep.subr.mxu0 0.0
        %1571 = vmatpush1.msra.mxu0 0.0
        %1572 = vmatprep.subr.mxu0 0.0
        %1573 = vmatpush1.msra.mxu0 0.0
        %1574 = vmatprep.subr.mxu0 0.0
        %1575 = vmatpush1.msra.mxu0 0.0
        %1576 = vmatprep.subr.mxu0 0.0
        %1577 = vmatpush1.msra.mxu0 0.0
        %1578 = vmatprep.subr.mxu0 0.0
        %1579 = vmatpush1.msra.mxu0 0.0
        %1580 = vmatprep.subr.mxu0 0.0
        %1581 = vmatpush1.msra.mxu0 0.0
        %1582 = vmatprep.subr.mxu0 0.0
        %1583 = vmatpush1.msra.mxu0 0.0
        %1584 = vmatprep.subr.mxu0 0.0
        %1585 = vmatpush1.msra.mxu0 0.0
        %1586 = vmatprep.subr.mxu0 0.0
        %1587 = vmatpush1.msra.mxu0 0.0
        %1588 = vmatprep.subr.mxu0 0.0
        %1589 = vmatpush1.msra.mxu0 0.0
        %1590 = vmatprep.subr.mxu0 0.0
        %1591 = vmatpush1.msra.mxu0 0.0
        %1592 = vmatprep.subr.mxu0 0.0
        %1593 = vmatpush1.msra.mxu0 0.0
        %1594 = vmatprep.subr.mxu0 0.0
        %1595 = vmatpush1.msra.mxu0 0.0
        %1596 = vmatprep.subr.mxu0 0.0
        %1597 = vmatpush1.msra.mxu0 0.0
        %1598 = vmatprep.subr.mxu0 0.0
        %1599 = vmatpush1.msra.mxu0 0.0
        %1600 = vmatprep.subr.mxu0 0.0
        %1601 = vmatpush1.msra.mxu0 0.0
        %1602 = vmatprep.subr.mxu0 0.0
        %1603 = vmatpush1.msra.mxu0 0.0
        %1604 = vmatprep.subr.mxu0 0.0
        %1605 = vmatpush1.msra.mxu0 0.0
        %1606 = vmatprep.subr.mxu0 0.0
        %1607 = vmatpush1.msra.mxu0 0.0
        %1608 = vmatprep.subr.mxu0 0.0
        %1609 = vmatpush1.msra.mxu0 0.0
        %1610 = vmatprep.subr.mxu0 0.0
        %1611 = vmatpush1.msra.mxu0 0.0
        %1612 = vmatprep.subr.mxu0 0.0
        %1613 = vmatpush1.msra.mxu0 0.0
        %1614 = vmatprep.subr.mxu0 0.0
        %1615 = vmatpush1.msra.mxu0 0.0
        %1616 = vmatprep.subr.mxu0 0.0
        %1617 = vmatpush1.msra.mxu0 0.0
        %1618 = vmatprep.mubr.f32.mxu0 0.0
        %v1619 = vand.u32 %v1203, 4294901760
        %1620 = vmatmul.mubr.f32.gmra.mrb[0].mxu0 %v1619
        %v1621 = vpop.f32.mrb[0].mxu0
        %v1622 = vadd.f32 %v1537, %v1621
        %v1623 = vpop.f32.mrb[0].mxu0
        %1624 = vmatprep.mubr.f32.mxu0 0.0
        %v1625 = vand.u32 %v1206, 4294901760
        %1626 = vmatmul.mubr.f32.gmra.mrb[0].mxu0 %v1625
        %v1627 = vpop.f32.mrb[0].mxu0
        %v1628 = vadd.f32 %v1545, %v1627
        %v1629 = vpop.f32.mrb[0].mxu0
        %1630 = vdwg.mxu0
        %1631 = vmatprep.subr.mxu0 0.0
        %v1632 = vand.u32 %v211, 4294901760
        %1633 = vmatpush1.msra.mxu0 %v1632
        %1634 = vmatprep.subr.mxu0 0.0
        %v1635 = vand.u32 %v212, 4294901760
        %1636 = vmatpush1.msra.mxu0 %v1635
        %1637 = vmatprep.subr.mxu0 0.0
        %1638 = vmatpush1.msra.mxu0 0.0
        %1639 = vmatprep.subr.mxu0 0.0
        %1640 = vmatpush1.msra.mxu0 0.0
        %1641 = vmatprep.subr.mxu0 0.0
        %1642 = vmatpush1.msra.mxu0 0.0
        %1643 = vmatprep.subr.mxu0 0.0
        %1644 = vmatpush1.msra.mxu0 0.0
        %1645 = vmatprep.subr.mxu0 0.0
        %1646 = vmatpush1.msra.mxu0 0.0
        %1647 = vmatprep.subr.mxu0 0.0
        %1648 = vmatpush1.msra.mxu0 0.0
        %1649 = vmatprep.subr.mxu0 0.0
        %1650 = vmatpush1.msra.mxu0 0.0
        %1651 = vmatprep.subr.mxu0 0.0
        %1652 = vmatpush1.msra.mxu0 0.0
        %1653 = vmatprep.subr.mxu0 0.0
        %1654 = vmatpush1.msra.mxu0 0.0
        %1655 = vmatprep.subr.mxu0 0.0
        %1656 = vmatpush1.msra.mxu0 0.0
        %1657 = vmatprep.subr.mxu0 0.0
        %1658 = vmatpush1.msra.mxu0 0.0
        %1659 = vmatprep.subr.mxu0 0.0
        %1660 = vmatpush1.msra.mxu0 0.0
        %1661 = vmatprep.subr.mxu0 0.0
        %1662 = vmatpush1.msra.mxu0 0.0
        %1663 = vmatprep.subr.mxu0 0.0
        %1664 = vmatpush1.msra.mxu0 0.0
        %1665 = vmatprep.subr.mxu0 0.0
        %1666 = vmatpush1.msra.mxu0 0.0
        %1667 = vmatprep.subr.mxu0 0.0
        %1668 = vmatpush1.msra.mxu0 0.0
        %1669 = vmatprep.subr.mxu0 0.0
        %1670 = vmatpush1.msra.mxu0 0.0
        %1671 = vmatprep.subr.mxu0 0.0
        %1672 = vmatpush1.msra.mxu0 0.0
        %1673 = vmatprep.subr.mxu0 0.0
        %1674 = vmatpush1.msra.mxu0 0.0
        %1675 = vmatprep.subr.mxu0 0.0
        %1676 = vmatpush1.msra.mxu0 0.0
        %1677 = vmatprep.subr.mxu0 0.0
        %1678 = vmatpush1.msra.mxu0 0.0
        %1679 = vmatprep.subr.mxu0 0.0
        %1680 = vmatpush1.msra.mxu0 0.0
        %1681 = vmatprep.subr.mxu0 0.0
        %1682 = vmatpush1.msra.mxu0 0.0
        %1683 = vmatprep.subr.mxu0 0.0
        %1684 = vmatpush1.msra.mxu0 0.0
        %1685 = vmatprep.subr.mxu0 0.0
        %1686 = vmatpush1.msra.mxu0 0.0
        %1687 = vmatprep.subr.mxu0 0.0
        %1688 = vmatpush1.msra.mxu0 0.0
        %1689 = vmatprep.subr.mxu0 0.0
        %1690 = vmatpush1.msra.mxu0 0.0
        %1691 = vmatprep.subr.mxu0 0.0
        %1692 = vmatpush1.msra.mxu0 0.0
        %1693 = vmatprep.subr.mxu0 0.0
        %1694 = vmatpush1.msra.mxu0 0.0
        %1695 = vmatprep.subr.mxu0 0.0
        %1696 = vmatpush1.msra.mxu0 0.0
        %1697 = vmatprep.mubr.f32.mxu0 0.0
        %v1698 = vand.u32 %v1203, 4294901760
        %1699 = vmatmul.mubr.f32.gmra.mrb[0].mxu0 %v1698
        %v1700 = vpop.f32.mrb[0].mxu0
        %v1701 = vadd.f32 %v1622, %v1700
        %v1702 = vpop.f32.mrb[0].mxu0
        %1703 = vmatprep.mubr.f32.mxu0 0.0
        %v1704 = vand.u32 %v1206, 4294901760
        %1705 = vmatmul.mubr.f32.gmra.mrb[0].mxu0 %v1704
        %v1706 = vpop.f32.mrb[0].mxu0
        %v1707 = vadd.f32 %v1628, %v1706
        %v1708 = vpop.f32.mrb[0].mxu0
        %1709 = vdwg.mxu0
        %1710 = vmatprep.subr.mxu0 0.0
        %v1711 = vand.u32 %v1701, 4294901760
        %1712 = vmatpush1.msra.mxu0 %v1711
        %1713 = vmatprep.subr.mxu0 0.0
        %v1714 = vand.u32 %v1707, 4294901760
        %1715 = vmatpush1.msra.mxu0 %v1714
        %1716 = vmatprep.subr.mxu0 0.0
        %1717 = vmatpush1.msra.mxu0 0.0
        %1718 = vmatprep.subr.mxu0 0.0
        %1719 = vmatpush1.msra.mxu0 0.0
        %1720 = vmatprep.subr.mxu0 0.0
        %1721 = vmatpush1.msra.mxu0 0.0
        %1722 = vmatprep.subr.mxu0 0.0
        %1723 = vmatpush1.msra.mxu0 0.0
        %1724 = vmatprep.subr.mxu0 0.0
        %1725 = vmatpush1.msra.mxu0 0.0
        %1726 = vmatprep.subr.mxu0 0.0
        %1727 = vmatpush1.msra.mxu0 0.0
        %1728 = vmatprep.subr.mxu0 0.0
        %1729 = vmatpush1.msra.mxu0 0.0
        %1730 = vmatprep.subr.mxu0 0.0
        %1731 = vmatpush1.msra.mxu0 0.0
        %1732 = vmatprep.subr.mxu0 0.0
        %1733 = vmatpush1.msra.mxu0 0.0
        %1734 = vmatprep.subr.mxu0 0.0
        %1735 = vmatpush1.msra.mxu0 0.0
        %1736 = vmatprep.subr.mxu0 0.0
        %1737 = vmatpush1.msra.mxu0 0.0
        %1738 = vmatprep.subr.mxu0 0.0
        %1739 = vmatpush1.msra.mxu0 0.0
        %1740 = vmatprep.subr.mxu0 0.0
        %1741 = vmatpush1.msra.mxu0 0.0
        %1742 = vmatprep.subr.mxu0 0.0
        %1743 = vmatpush1.msra.mxu0 0.0
        %1744 = vmatprep.subr.mxu0 0.0
        %1745 = vmatpush1.msra.mxu0 0.0
        %1746 = vmatprep.subr.mxu0 0.0
        %1747 = vmatpush1.msra.mxu0 0.0
        %1748 = vmatprep.subr.mxu0 0.0
        %1749 = vmatpush1.msra.mxu0 0.0
        %1750 = vmatprep.subr.mxu0 0.0
        %1751 = vmatpush1.msra.mxu0 0.0
        %1752 = vmatprep.subr.mxu0 0.0
        %1753 = vmatpush1.msra.mxu0 0.0
        %1754 = vmatprep.subr.mxu0 0.0
        %1755 = vmatpush1.msra.mxu0 0.0
        %1756 = vmatprep.subr.mxu0 0.0
        %1757 = vmatpush1.msra.mxu0 0.0
        %1758 = vmatprep.subr.mxu0 0.0
        %1759 = vmatpush1.msra.mxu0 0.0
        %1760 = vmatprep.subr.mxu0 0.0
        %1761 = vmatpush1.msra.mxu0 0.0
        %1762 = vmatprep.subr.mxu0 0.0
        %1763 = vmatpush1.msra.mxu0 0.0
        %1764 = vmatprep.subr.mxu0 0.0
        %1765 = vmatpush1.msra.mxu0 0.0
        %1766 = vmatprep.subr.mxu0 0.0
        %1767 = vmatpush1.msra.mxu0 0.0
        %1768 = vmatprep.subr.mxu0 0.0
        %1769 = vmatpush1.msra.mxu0 0.0
        %1770 = vmatprep.subr.mxu0 0.0
        %1771 = vmatpush1.msra.mxu0 0.0
        %1772 = vmatprep.subr.mxu0 0.0
        %1773 = vmatpush1.msra.mxu0 0.0
        %1774 = vmatprep.subr.mxu0 0.0
        %1775 = vmatpush1.msra.mxu0 0.0
        %1776 = vmatprep.mubr.f32.mxu0 0.0
        %v1777 = vand.u32 %v727, 4294901760
        %v1778 = vsub.f32 %v727, %v1777
        %v1779 = vand.u32 %v1778, 4294901760
        %v1780 = vsub.f32 %v1778, %v1779
        %v1781 = vand.u32 %v1780, 4294901760
        %1782 = vmatmul.mubr.f32.gmra.mrb[0].mxu0 %v1781
        %v1783 = vpop.f32.mrb[0].mxu0
        %v1784 = vadd.f32 1e-12, %v1783
        %v1785 = vpop.f32.mrb[0].mxu0
        %1786 = vdwg.mxu0
        %1787 = vmatprep.subr.mxu0 0.0
        %v1788 = vand.u32 %v1701, 4294901760
        %v1789 = vsub.f32 %v1701, %v1788
        %v1790 = vand.u32 %v1789, 4294901760
        %v1791 = vsub.f32 %v1789, %v1790
        %v1792 = vand.u32 %v1791, 4294901760
        %1793 = vmatpush1.msra.mxu0 %v1792
        %1794 = vmatprep.subr.mxu0 0.0
        %v1795 = vand.u32 %v1707, 4294901760
        %v1796 = vsub.f32 %v1707, %v1795
        %v1797 = vand.u32 %v1796, 4294901760
        %v1798 = vsub.f32 %v1796, %v1797
        %v1799 = vand.u32 %v1798, 4294901760
        %1800 = vmatpush1.msra.mxu0 %v1799
        %1801 = vmatprep.subr.mxu0 0.0
        %1802 = vmatpush1.msra.mxu0 0.0
        %1803 = vmatprep.subr.mxu0 0.0
        %1804 = vmatpush1.msra.mxu0 0.0
        %1805 = vmatprep.subr.mxu0 0.0
        %1806 = vmatpush1.msra.mxu0 0.0
        %1807 = vmatprep.subr.mxu0 0.0
        %1808 = vmatpush1.msra.mxu0 0.0
        %1809 = vmatprep.subr.mxu0 0.0
        %1810 = vmatpush1.msra.mxu0 0.0
        %1811 = vmatprep.subr.mxu0 0.0
        %1812 = vmatpush1.msra.mxu0 0.0
        %1813 = vmatprep.subr.mxu0 0.0
        %1814 = vmatpush1.msra.mxu0 0.0
        %1815 = vmatprep.subr.mxu0 0.0
        %1816 = vmatpush1.msra.mxu0 0.0
        %1817 = vmatprep.subr.mxu0 0.0
        %1818 = vmatpush1.msra.mxu0 0.0
        %1819 = vmatprep.subr.mxu0 0.0
        %1820 = vmatpush1.msra.mxu0 0.0
        %1821 = vmatprep.subr.mxu0 0.0
        %1822 = vmatpush1.msra.mxu0 0.0
        %1823 = vmatprep.subr.mxu0 0.0
        %1824 = vmatpush1.msra.mxu0 0.0
        %1825 = vmatprep.subr.mxu0 0.0
        %1826 = vmatpush1.msra.mxu0 0.0
        %1827 = vmatprep.subr.mxu0 0.0
        %1828 = vmatpush1.msra.mxu0 0.0
        %1829 = vmatprep.subr.mxu0 0.0
        %1830 = vmatpush1.msra.mxu0 0.0
        %1831 = vmatprep.subr.mxu0 0.0
        %1832 = vmatpush1.msra.mxu0 0.0
        %1833 = vmatprep.subr.mxu0 0.0
        %1834 = vmatpush1.msra.mxu0 0.0
        %1835 = vmatprep.subr.mxu0 0.0
        %1836 = vmatpush1.msra.mxu0 0.0
        %1837 = vmatprep.subr.mxu0 0.0
        %1838 = vmatpush1.msra.mxu0 0.0
        %1839 = vmatprep.subr.mxu0 0.0
        %1840 = vmatpush1.msra.mxu0 0.0
        %1841 = vmatprep.subr.mxu0 0.0
        %1842 = vmatpush1.msra.mxu0 0.0
        %1843 = vmatprep.subr.mxu0 0.0
        %1844 = vmatpush1.msra.mxu0 0.0
        %1845 = vmatprep.subr.mxu0 0.0
        %1846 = vmatpush1.msra.mxu0 0.0
        %1847 = vmatprep.subr.mxu0 0.0
        %1848 = vmatpush1.msra.mxu0 0.0
        %1849 = vmatprep.subr.mxu0 0.0
        %1850 = vmatpush1.msra.mxu0 0.0
        %1851 = vmatprep.subr.mxu0 0.0
        %1852 = vmatpush1.msra.mxu0 0.0
        %1853 = vmatprep.subr.mxu0 0.0
        %1854 = vmatpush1.msra.mxu0 0.0
        %1855 = vmatprep.subr.mxu0 0.0
        %1856 = vmatpush1.msra.mxu0 0.0
        %1857 = vmatprep.subr.mxu0 0.0
        %1858 = vmatpush1.msra.mxu0 0.0
        %1859 = vmatprep.subr.mxu0 0.0
        %1860 = vmatpush1.msra.mxu0 0.0
        %1861 = vmatprep.mubr.f32.mxu0 0.0
        %v1862 = vand.u32 %v727, 4294901760
        %1863 = vmatmul.mubr.f32.gmra.mrb[0].mxu0 %v1862
        %v1864 = vpop.f32.mrb[0].mxu0
        %v1865 = vadd.f32 %v1784, %v1864
        %v1866 = vpop.f32.mrb[0].mxu0
        %1867 = vdwg.mxu0
        %1868 = vmatprep.subr.mxu0 0.0
        %v1869 = vand.u32 %v1701, 4294901760
        %v1870 = vsub.f32 %v1701, %v1869
        %1871 = vmatpush1.msra.mxu0 %v1870
        %1872 = vmatprep.subr.mxu0 0.0
        %v1873 = vand.u32 %v1707, 4294901760
        %v1874 = vsub.f32 %v1707, %v1873
        %1875 = vmatpush1.msra.mxu0 %v1874
        %1876 = vmatprep.subr.mxu0 0.0
        %1877 = vmatpush1.msra.mxu0 0.0
        %1878 = vmatprep.subr.mxu0 0.0
        %1879 = vmatpush1.msra.mxu0 0.0
        %1880 = vmatprep.subr.mxu0 0.0
        %1881 = vmatpush1.msra.mxu0 0.0
        %1882 = vmatprep.subr.mxu0 0.0
        %1883 = vmatpush1.msra.mxu0 0.0
        %1884 = vmatprep.subr.mxu0 0.0
        %1885 = vmatpush1.msra.mxu0 0.0
        %1886 = vmatprep.subr.mxu0 0.0
        %1887 = vmatpush1.msra.mxu0 0.0
        %1888 = vmatprep.subr.mxu0 0.0
        %1889 = vmatpush1.msra.mxu0 0.0
        %1890 = vmatprep.subr.mxu0 0.0
        %1891 = vmatpush1.msra.mxu0 0.0
        %1892 = vmatprep.subr.mxu0 0.0
        %1893 = vmatpush1.msra.mxu0 0.0
        %1894 = vmatprep.subr.mxu0 0.0
        %1895 = vmatpush1.msra.mxu0 0.0
        %1896 = vmatprep.subr.mxu0 0.0
        %1897 = vmatpush1.msra.mxu0 0.0
        %1898 = vmatprep.subr.mxu0 0.0
        %1899 = vmatpush1.msra.mxu0 0.0
        %1900 = vmatprep.subr.mxu0 0.0
        %1901 = vmatpush1.msra.mxu0 0.0
        %1902 = vmatprep.subr.mxu0 0.0
        %1903 = vmatpush1.msra.mxu0 0.0
        %1904 = vmatprep.subr.mxu0 0.0
        %1905 = vmatpush1.msra.mxu0 0.0
        %1906 = vmatprep.subr.mxu0 0.0
        %1907 = vmatpush1.msra.mxu0 0.0
        %1908 = vmatprep.subr.mxu0 0.0
        %1909 = vmatpush1.msra.mxu0 0.0
        %1910 = vmatprep.subr.mxu0 0.0
        %1911 = vmatpush1.msra.mxu0 0.0
        %1912 = vmatprep.subr.mxu0 0.0
        %1913 = vmatpush1.msra.mxu0 0.0
        %1914 = vmatprep.subr.mxu0 0.0
        %1915 = vmatpush1.msra.mxu0 0.0
        %1916 = vmatprep.subr.mxu0 0.0
        %1917 = vmatpush1.msra.mxu0 0.0
        %1918 = vmatprep.subr.mxu0 0.0
        %1919 = vmatpush1.msra.mxu0 0.0
        %1920 = vmatprep.subr.mxu0 0.0
        %1921 = vmatpush1.msra.mxu0 0.0
        %1922 = vmatprep.subr.mxu0 0.0
        %1923 = vmatpush1.msra.mxu0 0.0
        %1924 = vmatprep.subr.mxu0 0.0
        %1925 = vmatpush1.msra.mxu0 0.0
        %1926 = vmatprep.subr.mxu0 0.0
        %1927 = vmatpush1.msra.mxu0 0.0
        %1928 = vmatprep.subr.mxu0 0.0
        %1929 = vmatpush1.msra.mxu0 0.0
        %1930 = vmatprep.subr.mxu0 0.0
        %1931 = vmatpush1.msra.mxu0 0.0
        %1932 = vmatprep.subr.mxu0 0.0
        %1933 = vmatpush1.msra.mxu0 0.0
        %1934 = vmatprep.subr.mxu0 0.0
        %1935 = vmatpush1.msra.mxu0 0.0
        %1936 = vmatprep.mubr.f32.mxu0 0.0
        %v1937 = vand.u32 %v727, 4294901760
        %v1938 = vsub.f32 %v727, %v1937
        %1939 = vmatmul.mubr.f32.gmra.mrb[0].mxu0 %v1938
        %v1940 = vpop.f32.mrb[0].mxu0
        %v1941 = vadd.f32 %v1865, %v1940
        %v1942 = vpop.f32.mrb[0].mxu0
        %1943 = vdwg.mxu0
        %1944 = vmatprep.subr.mxu0 0.0
        %v1945 = vand.u32 %v1701, 4294901760
        %1946 = vmatpush1.msra.mxu0 %v1945
        %1947 = vmatprep.subr.mxu0 0.0
        %v1948 = vand.u32 %v1707, 4294901760
        %1949 = vmatpush1.msra.mxu0 %v1948
        %1950 = vmatprep.subr.mxu0 0.0
        %1951 = vmatpush1.msra.mxu0 0.0
        %1952 = vmatprep.subr.mxu0 0.0
        %1953 = vmatpush1.msra.mxu0 0.0
        %1954 = vmatprep.subr.mxu0 0.0
        %1955 = vmatpush1.msra.mxu0 0.0
        %1956 = vmatprep.subr.mxu0 0.0
        %1957 = vmatpush1.msra.mxu0 0.0
        %1958 = vmatprep.subr.mxu0 0.0
        %1959 = vmatpush1.msra.mxu0 0.0
        %1960 = vmatprep.subr.mxu0 0.0
        %1961 = vmatpush1.msra.mxu0 0.0
        %1962 = vmatprep.subr.mxu0 0.0
        %1963 = vmatpush1.msra.mxu0 0.0
        %1964 = vmatprep.subr.mxu0 0.0
        %1965 = vmatpush1.msra.mxu0 0.0
        %1966 = vmatprep.subr.mxu0 0.0
        %1967 = vmatpush1.msra.mxu0 0.0
        %1968 = vmatprep.subr.mxu0 0.0
        %1969 = vmatpush1.msra.mxu0 0.0
        %1970 = vmatprep.subr.mxu0 0.0
        %1971 = vmatpush1.msra.mxu0 0.0
        %1972 = vmatprep.subr.mxu0 0.0
        %1973 = vmatpush1.msra.mxu0 0.0
        %1974 = vmatprep.subr.mxu0 0.0
        %1975 = vmatpush1.msra.mxu0 0.0
        %1976 = vmatprep.subr.mxu0 0.0
        %1977 = vmatpush1.msra.mxu0 0.0
        %1978 = vmatprep.subr.mxu0 0.0
        %1979 = vmatpush1.msra.mxu0 0.0
        %1980 = vmatprep.subr.mxu0 0.0
        %1981 = vmatpush1.msra.mxu0 0.0
        %1982 = vmatprep.subr.mxu0 0.0
        %1983 = vmatpush1.msra.mxu0 0.0
        %1984 = vmatprep.subr.mxu0 0.0
        %1985 = vmatpush1.msra.mxu0 0.0
        %1986 = vmatprep.subr.mxu0 0.0
        %1987 = vmatpush1.msra.mxu0 0.0
        %1988 = vmatprep.subr.mxu0 0.0
        %1989 = vmatpush1.msra.mxu0 0.0
        %1990 = vmatprep.subr.mxu0 0.0
        %1991 = vmatpush1.msra.mxu0 0.0
        %1992 = vmatprep.subr.mxu0 0.0
        %1993 = vmatpush1.msra.mxu0 0.0
        %1994 = vmatprep.subr.mxu0 0.0
        %1995 = vmatpush1.msra.mxu0 0.0
        %1996 = vmatprep.subr.mxu0 0.0
        %1997 = vmatpush1.msra.mxu0 0.0
        %1998 = vmatprep.subr.mxu0 0.0
        %1999 = vmatpush1.msra.mxu0 0.0
        %2000 = vmatprep.subr.mxu0 0.0
        %2001 = vmatpush1.msra.mxu0 0.0
        %2002 = vmatprep.subr.mxu0 0.0
        %2003 = vmatpush1.msra.mxu0 0.0
        %2004 = vmatprep.subr.mxu0 0.0
        %2005 = vmatpush1.msra.mxu0 0.0
        %2006 = vmatprep.subr.mxu0 0.0
        %2007 = vmatpush1.msra.mxu0 0.0
        %2008 = vmatprep.subr.mxu0 0.0
        %2009 = vmatpush1.msra.mxu0 0.0
        %2010 = vmatprep.mubr.f32.mxu0 0.0
        %v2011 = vand.u32 %v727, 4294901760
        %v2012 = vsub.f32 %v727, %v2011
        %v2013 = vand.u32 %v2012, 4294901760
        %2014 = vmatmul.mubr.f32.gmra.mrb[0].mxu0 %v2013
        %v2015 = vpop.f32.mrb[0].mxu0
        %v2016 = vadd.f32 %v1941, %v2015
        %v2017 = vpop.f32.mrb[0].mxu0
        %2018 = vdwg.mxu0
        %2019 = vmatprep.subr.mxu0 0.0
        %v2020 = vand.u32 %v1701, 4294901760
        %v2021 = vsub.f32 %v1701, %v2020
        %v2022 = vand.u32 %v2021, 4294901760
        %2023 = vmatpush1.msra.mxu0 %v2022
        %2024 = vmatprep.subr.mxu0 0.0
        %v2025 = vand.u32 %v1707, 4294901760
        %v2026 = vsub.f32 %v1707, %v2025
        %v2027 = vand.u32 %v2026, 4294901760
        %2028 = vmatpush1.msra.mxu0 %v2027
        %2029 = vmatprep.subr.mxu0 0.0
        %2030 = vmatpush1.msra.mxu0 0.0
        %2031 = vmatprep.subr.mxu0 0.0
        %2032 = vmatpush1.msra.mxu0 0.0
        %2033 = vmatprep.subr.mxu0 0.0
        %2034 = vmatpush1.msra.mxu0 0.0
        %2035 = vmatprep.subr.mxu0 0.0
        %2036 = vmatpush1.msra.mxu0 0.0
        %2037 = vmatprep.subr.mxu0 0.0
        %2038 = vmatpush1.msra.mxu0 0.0
        %2039 = vmatprep.subr.mxu0 0.0
        %2040 = vmatpush1.msra.mxu0 0.0
        %2041 = vmatprep.subr.mxu0 0.0
        %2042 = vmatpush1.msra.mxu0 0.0
        %2043 = vmatprep.subr.mxu0 0.0
        %2044 = vmatpush1.msra.mxu0 0.0
        %2045 = vmatprep.subr.mxu0 0.0
        %2046 = vmatpush1.msra.mxu0 0.0
        %2047 = vmatprep.subr.mxu0 0.0
        %2048 = vmatpush1.msra.mxu0 0.0
        %2049 = vmatprep.subr.mxu0 0.0
        %2050 = vmatpush1.msra.mxu0 0.0
        %2051 = vmatprep.subr.mxu0 0.0
        %2052 = vmatpush1.msra.mxu0 0.0
        %2053 = vmatprep.subr.mxu0 0.0
        %2054 = vmatpush1.msra.mxu0 0.0
        %2055 = vmatprep.subr.mxu0 0.0
        %2056 = vmatpush1.msra.mxu0 0.0
        %2057 = vmatprep.subr.mxu0 0.0
        %2058 = vmatpush1.msra.mxu0 0.0
        %2059 = vmatprep.subr.mxu0 0.0
        %2060 = vmatpush1.msra.mxu0 0.0
        %2061 = vmatprep.subr.mxu0 0.0
        %2062 = vmatpush1.msra.mxu0 0.0
        %2063 = vmatprep.subr.mxu0 0.0
        %2064 = vmatpush1.msra.mxu0 0.0
        %2065 = vmatprep.subr.mxu0 0.0
        %2066 = vmatpush1.msra.mxu0 0.0
        %2067 = vmatprep.subr.mxu0 0.0
        %2068 = vmatpush1.msra.mxu0 0.0
        %2069 = vmatprep.subr.mxu0 0.0
        %2070 = vmatpush1.msra.mxu0 0.0
        %2071 = vmatprep.subr.mxu0 0.0
        %2072 = vmatpush1.msra.mxu0 0.0
        %2073 = vmatprep.subr.mxu0 0.0
        %2074 = vmatpush1.msra.mxu0 0.0
        %2075 = vmatprep.subr.mxu0 0.0
        %2076 = vmatpush1.msra.mxu0 0.0
        %2077 = vmatprep.subr.mxu0 0.0
        %2078 = vmatpush1.msra.mxu0 0.0
        %2079 = vmatprep.subr.mxu0 0.0
        %2080 = vmatpush1.msra.mxu0 0.0
        %2081 = vmatprep.subr.mxu0 0.0
        %2082 = vmatpush1.msra.mxu0 0.0
        %2083 = vmatprep.subr.mxu0 0.0
        %2084 = vmatpush1.msra.mxu0 0.0
        %2085 = vmatprep.subr.mxu0 0.0
        %2086 = vmatpush1.msra.mxu0 0.0
        %2087 = vmatprep.subr.mxu0 0.0
        %2088 = vmatpush1.msra.mxu0 0.0
        %2089 = vmatprep.mubr.f32.mxu0 0.0
        %v2090 = vand.u32 %v727, 4294901760
        %2091 = vmatmul.mubr.f32.gmra.mrb[0].mxu0 %v2090
        %v2092 = vpop.f32.mrb[0].mxu0
        %v2093 = vadd.f32 %v2016, %v2092
        %v2094 = vpop.f32.mrb[0].mxu0
        %2095 = vdwg.mxu0
        %2096 = vmatprep.subr.mxu0 0.0
        %v2097 = vand.u32 %v1701, 4294901760
        %2098 = vmatpush1.msra.mxu0 %v2097
        %2099 = vmatprep.subr.mxu0 0.0
        %v2100 = vand.u32 %v1707, 4294901760
        %2101 = vmatpush1.msra.mxu0 %v2100
        %2102 = vmatprep.subr.mxu0 0.0
        %2103 = vmatpush1.msra.mxu0 0.0
        %2104 = vmatprep.subr.mxu0 0.0
        %2105 = vmatpush1.msra.mxu0 0.0
        %2106 = vmatprep.subr.mxu0 0.0
        %2107 = vmatpush1.msra.mxu0 0.0
        %2108 = vmatprep.subr.mxu0 0.0
        %2109 = vmatpush1.msra.mxu0 0.0
        %2110 = vmatprep.subr.mxu0 0.0
        %2111 = vmatpush1.msra.mxu0 0.0
        %2112 = vmatprep.subr.mxu0 0.0
        %2113 = vmatpush1.msra.mxu0 0.0
        %2114 = vmatprep.subr.mxu0 0.0
        %2115 = vmatpush1.msra.mxu0 0.0
        %2116 = vmatprep.subr.mxu0 0.0
        %2117 = vmatpush1.msra.mxu0 0.0
        %2118 = vmatprep.subr.mxu0 0.0
        %2119 = vmatpush1.msra.mxu0 0.0
        %2120 = vmatprep.subr.mxu0 0.0
        %2121 = vmatpush1.msra.mxu0 0.0
        %2122 = vmatprep.subr.mxu0 0.0
        %2123 = vmatpush1.msra.mxu0 0.0
        %2124 = vmatprep.subr.mxu0 0.0
        %2125 = vmatpush1.msra.mxu0 0.0
        %2126 = vmatprep.subr.mxu0 0.0
        %2127 = vmatpush1.msra.mxu0 0.0
        %2128 = vmatprep.subr.mxu0 0.0
        %2129 = vmatpush1.msra.mxu0 0.0
        %2130 = vmatprep.subr.mxu0 0.0
        %2131 = vmatpush1.msra.mxu0 0.0
        %2132 = vmatprep.subr.mxu0 0.0
        %2133 = vmatpush1.msra.mxu0 0.0
        %2134 = vmatprep.subr.mxu0 0.0
        %2135 = vmatpush1.msra.mxu0 0.0
        %2136 = vmatprep.subr.mxu0 0.0
        %2137 = vmatpush1.msra.mxu0 0.0
        %2138 = vmatprep.subr.mxu0 0.0
        %2139 = vmatpush1.msra.mxu0 0.0
        %2140 = vmatprep.subr.mxu0 0.0
        %2141 = vmatpush1.msra.mxu0 0.0
        %2142 = vmatprep.subr.mxu0 0.0
        %2143 = vmatpush1.msra.mxu0 0.0
        %2144 = vmatprep.subr.mxu0 0.0
        %2145 = vmatpush1.msra.mxu0 0.0
        %2146 = vmatprep.subr.mxu0 0.0
        %2147 = vmatpush1.msra.mxu0 0.0
        %2148 = vmatprep.subr.mxu0 0.0
        %2149 = vmatpush1.msra.mxu0 0.0
        %2150 = vmatprep.subr.mxu0 0.0
        %2151 = vmatpush1.msra.mxu0 0.0
        %2152 = vmatprep.subr.mxu0 0.0
        %2153 = vmatpush1.msra.mxu0 0.0
        %2154 = vmatprep.subr.mxu0 0.0
        %2155 = vmatpush1.msra.mxu0 0.0
        %2156 = vmatprep.subr.mxu0 0.0
        %2157 = vmatpush1.msra.mxu0 0.0
        %2158 = vmatprep.subr.mxu0 0.0
        %2159 = vmatpush1.msra.mxu0 0.0
        %2160 = vmatprep.subr.mxu0 0.0
        %2161 = vmatpush1.msra.mxu0 0.0
        %2162 = vmatprep.mubr.f32.mxu0 0.0
        %v2163 = vand.u32 %v727, 4294901760
        %2164 = vmatmul.mubr.f32.gmra.mrb[0].mxu0 %v2163
        %v2165 = vpop.f32.mrb[0].mxu0
        %v2166 = vadd.f32 %v2093, %v2165
        %v2167 = vpop.f32.mrb[0].mxu0
        %2168 = vdwg.mxu0
        %v2169 = vrsqrt.pop %v2166
        %v2170 = vmul.f32 %v2166, %v2169
        %vm2171 = vcmp.eq.f32.partialorder %v2166, inf
        %v2172 = vsel %vm2171, %v2166, %v2170
        %vm2173 = vcmp.eq.f32.partialorder %v2166, 0.0
        %v2174 = vand.u32 %v2166, 2147483648
        %v2175 = vsel %vm2173, %v2174, %v2172
        %s2176 = scalar_lea.vmem %s207, 8 [#allocation5]
        %2177 = vst.msk [vmem:[%s2176] sm:$0xff] %vm1195, %v2175
        %s2178 = scalar_lea.vmem %s185, 32 [#allocation2]
        %v2179 = vld [vmem:[%s2178] sm:$0xff]
        %v2180 = vld [vmem:[%s2178 + $0x8] sm:$0xff]
        %v2181 = vmul.f32 %v2179, %v2179
        %v2182 = vmul.f32 %v2180, %v2180
        %v2184 = vsel %vm217, %v2181, 0
        %v2187 = vsel %vm217, %v2182, 0
        %2189 = vmatprep.subr.mxu0 0.0
        %v2190 = vand.u32 %v211, 4294901760
        %2191 = vmatpush1.msra.mxu0 %v2190
        %2192 = vmatprep.subr.mxu0 0.0
        %v2193 = vand.u32 %v212, 4294901760
        %2194 = vmatpush1.msra.mxu0 %v2193
        %2195 = vmatprep.subr.mxu0 0.0
        %2196 = vmatpush1.msra.mxu0 0.0
        %2197 = vmatprep.subr.mxu0 0.0
        %2198 = vmatpush1.msra.mxu0 0.0
        %2199 = vmatprep.subr.mxu0 0.0
        %2200 = vmatpush1.msra.mxu0 0.0
        %2201 = vmatprep.subr.mxu0 0.0
        %2202 = vmatpush1.msra.mxu0 0.0
        %2203 = vmatprep.subr.mxu0 0.0
        %2204 = vmatpush1.msra.mxu0 0.0
        %2205 = vmatprep.subr.mxu0 0.0
        %2206 = vmatpush1.msra.mxu0 0.0
        %2207 = vmatprep.subr.mxu0 0.0
        %2208 = vmatpush1.msra.mxu0 0.0
        %2209 = vmatprep.subr.mxu0 0.0
        %2210 = vmatpush1.msra.mxu0 0.0
        %2211 = vmatprep.subr.mxu0 0.0
        %2212 = vmatpush1.msra.mxu0 0.0
        %2213 = vmatprep.subr.mxu0 0.0
        %2214 = vmatpush1.msra.mxu0 0.0
        %2215 = vmatprep.subr.mxu0 0.0
        %2216 = vmatpush1.msra.mxu0 0.0
        %2217 = vmatprep.subr.mxu0 0.0
        %2218 = vmatpush1.msra.mxu0 0.0
        %2219 = vmatprep.subr.mxu0 0.0
        %2220 = vmatpush1.msra.mxu0 0.0
        %2221 = vmatprep.subr.mxu0 0.0
        %2222 = vmatpush1.msra.mxu0 0.0
        %2223 = vmatprep.subr.mxu0 0.0
        %2224 = vmatpush1.msra.mxu0 0.0
        %2225 = vmatprep.subr.mxu0 0.0
        %2226 = vmatpush1.msra.mxu0 0.0
        %2227 = vmatprep.subr.mxu0 0.0
        %2228 = vmatpush1.msra.mxu0 0.0
        %2229 = vmatprep.subr.mxu0 0.0
        %2230 = vmatpush1.msra.mxu0 0.0
        %2231 = vmatprep.subr.mxu0 0.0
        %2232 = vmatpush1.msra.mxu0 0.0
        %2233 = vmatprep.subr.mxu0 0.0
        %2234 = vmatpush1.msra.mxu0 0.0
        %2235 = vmatprep.subr.mxu0 0.0
        %2236 = vmatpush1.msra.mxu0 0.0
        %2237 = vmatprep.subr.mxu0 0.0
        %2238 = vmatpush1.msra.mxu0 0.0
        %2239 = vmatprep.subr.mxu0 0.0
        %2240 = vmatpush1.msra.mxu0 0.0
        %2241 = vmatprep.subr.mxu0 0.0
        %2242 = vmatpush1.msra.mxu0 0.0
        %2243 = vmatprep.subr.mxu0 0.0
        %2244 = vmatpush1.msra.mxu0 0.0
        %2245 = vmatprep.subr.mxu0 0.0
        %2246 = vmatpush1.msra.mxu0 0.0
        %2247 = vmatprep.subr.mxu0 0.0
        %2248 = vmatpush1.msra.mxu0 0.0
        %2249 = vmatprep.subr.mxu0 0.0
        %2250 = vmatpush1.msra.mxu0 0.0
        %2251 = vmatprep.subr.mxu0 0.0
        %2252 = vmatpush1.msra.mxu0 0.0
        %2253 = vmatprep.subr.mxu0 0.0
        %2254 = vmatpush1.msra.mxu0 0.0
        %2255 = vmatprep.mubr.f32.mxu0 0.0
        %v2256 = vand.u32 %v2184, 4294901760
        %v2257 = vsub.f32 %v2184, %v2256
        %v2258 = vand.u32 %v2257, 4294901760
        %v2259 = vsub.f32 %v2257, %v2258
        %v2260 = vand.u32 %v2259, 4294901760
        %2261 = vmatmul.mubr.f32.gmra.mrb[0].mxu0 %v2260
        %v2262 = vpop.f32.mrb[0].mxu0
        %v2263 = vadd.f32 0.0, %v2262
        %v2264 = vpop.f32.mrb[0].mxu0
        %2265 = vmatprep.mubr.f32.mxu0 0.0
        %v2266 = vand.u32 %v2187, 4294901760
        %v2267 = vsub.f32 %v2187, %v2266
        %v2268 = vand.u32 %v2267, 4294901760
        %v2269 = vsub.f32 %v2267, %v2268
        %v2270 = vand.u32 %v2269, 4294901760
        %2271 = vmatmul.mubr.f32.gmra.mrb[0].mxu0 %v2270
        %v2272 = vpop.f32.mrb[0].mxu0
        %v2273 = vadd.f32 0.0, %v2272
        %v2274 = vpop.f32.mrb[0].mxu0
        %2275 = vdwg.mxu0
        %2276 = vmatprep.subr.mxu0 0.0
        %v2277 = vand.u32 %v211, 4294901760
        %v2278 = vsub.f32 %v211, %v2277
        %v2279 = vand.u32 %v2278, 4294901760
        %v2280 = vsub.f32 %v2278, %v2279
        %v2281 = vand.u32 %v2280, 4294901760
        %2282 = vmatpush1.msra.mxu0 %v2281
        %2283 = vmatprep.subr.mxu0 0.0
        %v2284 = vand.u32 %v212, 4294901760
        %v2285 = vsub.f32 %v212, %v2284
        %v2286 = vand.u32 %v2285, 4294901760
        %v2287 = vsub.f32 %v2285, %v2286
        %v2288 = vand.u32 %v2287, 4294901760
        %2289 = vmatpush1.msra.mxu0 %v2288
        %2290 = vmatprep.subr.mxu0 0.0
        %2291 = vmatpush1.msra.mxu0 0.0
        %2292 = vmatprep.subr.mxu0 0.0
        %2293 = vmatpush1.msra.mxu0 0.0
        %2294 = vmatprep.subr.mxu0 0.0
        %2295 = vmatpush1.msra.mxu0 0.0
        %2296 = vmatprep.subr.mxu0 0.0
        %2297 = vmatpush1.msra.mxu0 0.0
        %2298 = vmatprep.subr.mxu0 0.0
        %2299 = vmatpush1.msra.mxu0 0.0
        %2300 = vmatprep.subr.mxu0 0.0
        %2301 = vmatpush1.msra.mxu0 0.0
        %2302 = vmatprep.subr.mxu0 0.0
        %2303 = vmatpush1.msra.mxu0 0.0
        %2304 = vmatprep.subr.mxu0 0.0
        %2305 = vmatpush1.msra.mxu0 0.0
        %2306 = vmatprep.subr.mxu0 0.0
        %2307 = vmatpush1.msra.mxu0 0.0
        %2308 = vmatprep.subr.mxu0 0.0
        %2309 = vmatpush1.msra.mxu0 0.0
        %2310 = vmatprep.subr.mxu0 0.0
        %2311 = vmatpush1.msra.mxu0 0.0
        %2312 = vmatprep.subr.mxu0 0.0
        %2313 = vmatpush1.msra.mxu0 0.0
        %2314 = vmatprep.subr.mxu0 0.0
        %2315 = vmatpush1.msra.mxu0 0.0
        %2316 = vmatprep.subr.mxu0 0.0
        %2317 = vmatpush1.msra.mxu0 0.0
        %2318 = vmatprep.subr.mxu0 0.0
        %2319 = vmatpush1.msra.mxu0 0.0
        %2320 = vmatprep.subr.mxu0 0.0
        %2321 = vmatpush1.msra.mxu0 0.0
        %2322 = vmatprep.subr.mxu0 0.0
        %2323 = vmatpush1.msra.mxu0 0.0
        %2324 = vmatprep.subr.mxu0 0.0
        %2325 = vmatpush1.msra.mxu0 0.0
        %2326 = vmatprep.subr.mxu0 0.0
        %2327 = vmatpush1.msra.mxu0 0.0
        %2328 = vmatprep.subr.mxu0 0.0
        %2329 = vmatpush1.msra.mxu0 0.0
        %2330 = vmatprep.subr.mxu0 0.0
        %2331 = vmatpush1.msra.mxu0 0.0
        %2332 = vmatprep.subr.mxu0 0.0
        %2333 = vmatpush1.msra.mxu0 0.0
        %2334 = vmatprep.subr.mxu0 0.0
        %2335 = vmatpush1.msra.mxu0 0.0
        %2336 = vmatprep.subr.mxu0 0.0
        %2337 = vmatpush1.msra.mxu0 0.0
        %2338 = vmatprep.subr.mxu0 0.0
        %2339 = vmatpush1.msra.mxu0 0.0
        %2340 = vmatprep.subr.mxu0 0.0
        %2341 = vmatpush1.msra.mxu0 0.0
        %2342 = vmatprep.subr.mxu0 0.0
        %2343 = vmatpush1.msra.mxu0 0.0
        %2344 = vmatprep.subr.mxu0 0.0
        %2345 = vmatpush1.msra.mxu0 0.0
        %2346 = vmatprep.subr.mxu0 0.0
        %2347 = vmatpush1.msra.mxu0 0.0
        %2348 = vmatprep.subr.mxu0 0.0
        %2349 = vmatpush1.msra.mxu0 0.0
        %2350 = vmatprep.mubr.f32.mxu0 0.0
        %v2351 = vand.u32 %v2184, 4294901760
        %2352 = vmatmul.mubr.f32.gmra.mrb[0].mxu0 %v2351
        %v2353 = vpop.f32.mrb[0].mxu0
        %v2354 = vadd.f32 %v2263, %v2353
        %v2355 = vpop.f32.mrb[0].mxu0
        %2356 = vmatprep.mubr.f32.mxu0 0.0
        %v2357 = vand.u32 %v2187, 4294901760
        %2358 = vmatmul.mubr.f32.gmra.mrb[0].mxu0 %v2357
        %v2359 = vpop.f32.mrb[0].mxu0
        %v2360 = vadd.f32 %v2273, %v2359
        %v2361 = vpop.f32.mrb[0].mxu0
        %2362 = vdwg.mxu0
        %2363 = vmatprep.subr.mxu0 0.0
        %v2364 = vand.u32 %v211, 4294901760
        %v2365 = vsub.f32 %v211, %v2364
        %2366 = vmatpush1.msra.mxu0 %v2365
        %2367 = vmatprep.subr.mxu0 0.0
        %v2368 = vand.u32 %v212, 4294901760
        %v2369 = vsub.f32 %v212, %v2368
        %2370 = vmatpush1.msra.mxu0 %v2369
        %2371 = vmatprep.subr.mxu0 0.0
        %2372 = vmatpush1.msra.mxu0 0.0
        %2373 = vmatprep.subr.mxu0 0.0
        %2374 = vmatpush1.msra.mxu0 0.0
        %2375 = vmatprep.subr.mxu0 0.0
        %2376 = vmatpush1.msra.mxu0 0.0
        %2377 = vmatprep.subr.mxu0 0.0
        %2378 = vmatpush1.msra.mxu0 0.0
        %2379 = vmatprep.subr.mxu0 0.0
        %2380 = vmatpush1.msra.mxu0 0.0
        %2381 = vmatprep.subr.mxu0 0.0
        %2382 = vmatpush1.msra.mxu0 0.0
        %2383 = vmatprep.subr.mxu0 0.0
        %2384 = vmatpush1.msra.mxu0 0.0
        %2385 = vmatprep.subr.mxu0 0.0
        %2386 = vmatpush1.msra.mxu0 0.0
        %2387 = vmatprep.subr.mxu0 0.0
        %2388 = vmatpush1.msra.mxu0 0.0
        %2389 = vmatprep.subr.mxu0 0.0
        %2390 = vmatpush1.msra.mxu0 0.0
        %2391 = vmatprep.subr.mxu0 0.0
        %2392 = vmatpush1.msra.mxu0 0.0
        %2393 = vmatprep.subr.mxu0 0.0
        %2394 = vmatpush1.msra.mxu0 0.0
        %2395 = vmatprep.subr.mxu0 0.0
        %2396 = vmatpush1.msra.mxu0 0.0
        %2397 = vmatprep.subr.mxu0 0.0
        %2398 = vmatpush1.msra.mxu0 0.0
        %2399 = vmatprep.subr.mxu0 0.0
        %2400 = vmatpush1.msra.mxu0 0.0
        %2401 = vmatprep.subr.mxu0 0.0
        %2402 = vmatpush1.msra.mxu0 0.0
        %2403 = vmatprep.subr.mxu0 0.0
        %2404 = vmatpush1.msra.mxu0 0.0
        %2405 = vmatprep.subr.mxu0 0.0
        %2406 = vmatpush1.msra.mxu0 0.0
        %2407 = vmatprep.subr.mxu0 0.0
        %2408 = vmatpush1.msra.mxu0 0.0
        %2409 = vmatprep.subr.mxu0 0.0
        %2410 = vmatpush1.msra.mxu0 0.0
        %2411 = vmatprep.subr.mxu0 0.0
        %2412 = vmatpush1.msra.mxu0 0.0
        %2413 = vmatprep.subr.mxu0 0.0
        %2414 = vmatpush1.msra.mxu0 0.0
        %2415 = vmatprep.subr.mxu0 0.0
        %2416 = vmatpush1.msra.mxu0 0.0
        %2417 = vmatprep.subr.mxu0 0.0
        %2418 = vmatpush1.msra.mxu0 0.0
        %2419 = vmatprep.subr.mxu0 0.0
        %2420 = vmatpush1.msra.mxu0 0.0
        %2421 = vmatprep.subr.mxu0 0.0
        %2422 = vmatpush1.msra.mxu0 0.0
        %2423 = vmatprep.subr.mxu0 0.0
        %2424 = vmatpush1.msra.mxu0 0.0
        %2425 = vmatprep.subr.mxu0 0.0
        %2426 = vmatpush1.msra.mxu0 0.0
        %2427 = vmatprep.subr.mxu0 0.0
        %2428 = vmatpush1.msra.mxu0 0.0
        %2429 = vmatprep.subr.mxu0 0.0
        %2430 = vmatpush1.msra.mxu0 0.0
        %2431 = vmatprep.mubr.f32.mxu0 0.0
        %v2432 = vand.u32 %v2184, 4294901760
        %v2433 = vsub.f32 %v2184, %v2432
        %2434 = vmatmul.mubr.f32.gmra.mrb[0].mxu0 %v2433
        %v2435 = vpop.f32.mrb[0].mxu0
        %v2436 = vadd.f32 %v2354, %v2435
        %v2437 = vpop.f32.mrb[0].mxu0
        %2438 = vmatprep.mubr.f32.mxu0 0.0
        %v2439 = vand.u32 %v2187, 4294901760
        %v2440 = vsub.f32 %v2187, %v2439
        %2441 = vmatmul.mubr.f32.gmra.mrb[0].mxu0 %v2440
        %v2442 = vpop.f32.mrb[0].mxu0
        %v2443 = vadd.f32 %v2360, %v2442
        %v2444 = vpop.f32.mrb[0].mxu0
        %2445 = vdwg.mxu0
        %2446 = vmatprep.subr.mxu0 0.0
        %v2447 = vand.u32 %v211, 4294901760
        %2448 = vmatpush1.msra.mxu0 %v2447
        %2449 = vmatprep.subr.mxu0 0.0
        %v2450 = vand.u32 %v212, 4294901760
        %2451 = vmatpush1.msra.mxu0 %v2450
        %2452 = vmatprep.subr.mxu0 0.0
        %2453 = vmatpush1.msra.mxu0 0.0
        %2454 = vmatprep.subr.mxu0 0.0
        %2455 = vmatpush1.msra.mxu0 0.0
        %2456 = vmatprep.subr.mxu0 0.0
        %2457 = vmatpush1.msra.mxu0 0.0
        %2458 = vmatprep.subr.mxu0 0.0
        %2459 = vmatpush1.msra.mxu0 0.0
        %2460 = vmatprep.subr.mxu0 0.0
        %2461 = vmatpush1.msra.mxu0 0.0
        %2462 = vmatprep.subr.mxu0 0.0
        %2463 = vmatpush1.msra.mxu0 0.0
        %2464 = vmatprep.subr.mxu0 0.0
        %2465 = vmatpush1.msra.mxu0 0.0
        %2466 = vmatprep.subr.mxu0 0.0
        %2467 = vmatpush1.msra.mxu0 0.0
        %2468 = vmatprep.subr.mxu0 0.0
        %2469 = vmatpush1.msra.mxu0 0.0
        %2470 = vmatprep.subr.mxu0 0.0
        %2471 = vmatpush1.msra.mxu0 0.0
        %2472 = vmatprep.subr.mxu0 0.0
        %2473 = vmatpush1.msra.mxu0 0.0
        %2474 = vmatprep.subr.mxu0 0.0
        %2475 = vmatpush1.msra.mxu0 0.0
        %2476 = vmatprep.subr.mxu0 0.0
        %2477 = vmatpush1.msra.mxu0 0.0
        %2478 = vmatprep.subr.mxu0 0.0
        %2479 = vmatpush1.msra.mxu0 0.0
        %2480 = vmatprep.subr.mxu0 0.0
        %2481 = vmatpush1.msra.mxu0 0.0
        %2482 = vmatprep.subr.mxu0 0.0
        %2483 = vmatpush1.msra.mxu0 0.0
        %2484 = vmatprep.subr.mxu0 0.0
        %2485 = vmatpush1.msra.mxu0 0.0
        %2486 = vmatprep.subr.mxu0 0.0
        %2487 = vmatpush1.msra.mxu0 0.0
        %2488 = vmatprep.subr.mxu0 0.0
        %2489 = vmatpush1.msra.mxu0 0.0
        %2490 = vmatprep.subr.mxu0 0.0
        %2491 = vmatpush1.msra.mxu0 0.0
        %2492 = vmatprep.subr.mxu0 0.0
        %2493 = vmatpush1.msra.mxu0 0.0
        %2494 = vmatprep.subr.mxu0 0.0
        %2495 = vmatpush1.msra.mxu0 0.0
        %2496 = vmatprep.subr.mxu0 0.0
        %2497 = vmatpush1.msra.mxu0 0.0
        %2498 = vmatprep.subr.mxu0 0.0
        %2499 = vmatpush1.msra.mxu0 0.0
        %2500 = vmatprep.subr.mxu0 0.0
        %2501 = vmatpush1.msra.mxu0 0.0
        %2502 = vmatprep.subr.mxu0 0.0
        %2503 = vmatpush1.msra.mxu0 0.0
        %2504 = vmatprep.subr.mxu0 0.0
        %2505 = vmatpush1.msra.mxu0 0.0
        %2506 = vmatprep.subr.mxu0 0.0
        %2507 = vmatpush1.msra.mxu0 0.0
        %2508 = vmatprep.subr.mxu0 0.0
        %2509 = vmatpush1.msra.mxu0 0.0
        %2510 = vmatprep.subr.mxu0 0.0
        %2511 = vmatpush1.msra.mxu0 0.0
        %2512 = vmatprep.mubr.f32.mxu0 0.0
        %v2513 = vand.u32 %v2184, 4294901760
        %v2514 = vsub.f32 %v2184, %v2513
        %v2515 = vand.u32 %v2514, 4294901760
        %2516 = vmatmul.mubr.f32.gmra.mrb[0].mxu0 %v2515
        %v2517 = vpop.f32.mrb[0].mxu0
        %v2518 = vadd.f32 %v2436, %v2517
        %v2519 = vpop.f32.mrb[0].mxu0
        %2520 = vmatprep.mubr.f32.mxu0 0.0
        %v2521 = vand.u32 %v2187, 4294901760
        %v2522 = vsub.f32 %v2187, %v2521
        %v2523 = vand.u32 %v2522, 4294901760
        %2524 = vmatmul.mubr.f32.gmra.mrb[0].mxu0 %v2523
        %v2525 = vpop.f32.mrb[0].mxu0
        %v2526 = vadd.f32 %v2443, %v2525
        %v2527 = vpop.f32.mrb[0].mxu0
        %2528 = vdwg.mxu0
        %2529 = vmatprep.subr.mxu0 0.0
        %v2530 = vand.u32 %v211, 4294901760
        %v2531 = vsub.f32 %v211, %v2530
        %v2532 = vand.u32 %v2531, 4294901760
        %2533 = vmatpush1.msra.mxu0 %v2532
        %2534 = vmatprep.subr.mxu0 0.0
        %v2535 = vand.u32 %v212, 4294901760
        %v2536 = vsub.f32 %v212, %v2535
        %v2537 = vand.u32 %v2536, 4294901760
        %2538 = vmatpush1.msra.mxu0 %v2537
        %2539 = vmatprep.subr.mxu0 0.0
        %2540 = vmatpush1.msra.mxu0 0.0
        %2541 = vmatprep.subr.mxu0 0.0
        %2542 = vmatpush1.msra.mxu0 0.0
        %2543 = vmatprep.subr.mxu0 0.0
        %2544 = vmatpush1.msra.mxu0 0.0
        %2545 = vmatprep.subr.mxu0 0.0
        %2546 = vmatpush1.msra.mxu0 0.0
        %2547 = vmatprep.subr.mxu0 0.0
        %2548 = vmatpush1.msra.mxu0 0.0
        %2549 = vmatprep.subr.mxu0 0.0
        %2550 = vmatpush1.msra.mxu0 0.0
        %2551 = vmatprep.subr.mxu0 0.0
        %2552 = vmatpush1.msra.mxu0 0.0
        %2553 = vmatprep.subr.mxu0 0.0
        %2554 = vmatpush1.msra.mxu0 0.0
        %2555 = vmatprep.subr.mxu0 0.0
        %2556 = vmatpush1.msra.mxu0 0.0
        %2557 = vmatprep.subr.mxu0 0.0
        %2558 = vmatpush1.msra.mxu0 0.0
        %2559 = vmatprep.subr.mxu0 0.0
        %2560 = vmatpush1.msra.mxu0 0.0
        %2561 = vmatprep.subr.mxu0 0.0
        %2562 = vmatpush1.msra.mxu0 0.0
        %2563 = vmatprep.subr.mxu0 0.0
        %2564 = vmatpush1.msra.mxu0 0.0
        %2565 = vmatprep.subr.mxu0 0.0
        %2566 = vmatpush1.msra.mxu0 0.0
        %2567 = vmatprep.subr.mxu0 0.0
        %2568 = vmatpush1.msra.mxu0 0.0
        %2569 = vmatprep.subr.mxu0 0.0
        %2570 = vmatpush1.msra.mxu0 0.0
        %2571 = vmatprep.subr.mxu0 0.0
        %2572 = vmatpush1.msra.mxu0 0.0
        %2573 = vmatprep.subr.mxu0 0.0
        %2574 = vmatpush1.msra.mxu0 0.0
        %2575 = vmatprep.subr.mxu0 0.0
        %2576 = vmatpush1.msra.mxu0 0.0
        %2577 = vmatprep.subr.mxu0 0.0
        %2578 = vmatpush1.msra.mxu0 0.0
        %2579 = vmatprep.subr.mxu0 0.0
        %2580 = vmatpush1.msra.mxu0 0.0
        %2581 = vmatprep.subr.mxu0 0.0
        %2582 = vmatpush1.msra.mxu0 0.0
        %2583 = vmatprep.subr.mxu0 0.0
        %2584 = vmatpush1.msra.mxu0 0.0
        %2585 = vmatprep.subr.mxu0 0.0
        %2586 = vmatpush1.msra.mxu0 0.0
        %2587 = vmatprep.subr.mxu0 0.0
        %2588 = vmatpush1.msra.mxu0 0.0
        %2589 = vmatprep.subr.mxu0 0.0
        %2590 = vmatpush1.msra.mxu0 0.0
        %2591 = vmatprep.subr.mxu0 0.0
        %2592 = vmatpush1.msra.mxu0 0.0
        %2593 = vmatprep.subr.mxu0 0.0
        %2594 = vmatpush1.msra.mxu0 0.0
        %2595 = vmatprep.subr.mxu0 0.0
        %2596 = vmatpush1.msra.mxu0 0.0
        %2597 = vmatprep.subr.mxu0 0.0
        %2598 = vmatpush1.msra.mxu0 0.0
        %2599 = vmatprep.mubr.f32.mxu0 0.0
        %v2600 = vand.u32 %v2184, 4294901760
        %2601 = vmatmul.mubr.f32.gmra.mrb[0].mxu0 %v2600
        %v2602 = vpop.f32.mrb[0].mxu0
        %v2603 = vadd.f32 %v2518, %v2602
        %v2604 = vpop.f32.mrb[0].mxu0
        %2605 = vmatprep.mubr.f32.mxu0 0.0
        %v2606 = vand.u32 %v2187, 4294901760
        %2607 = vmatmul.mubr.f32.gmra.mrb[0].mxu0 %v2606
        %v2608 = vpop.f32.mrb[0].mxu0
        %v2609 = vadd.f32 %v2526, %v2608
        %v2610 = vpop.f32.mrb[0].mxu0
        %2611 = vdwg.mxu0
        %2612 = vmatprep.subr.mxu0 0.0
        %v2613 = vand.u32 %v211, 4294901760
        %2614 = vmatpush1.msra.mxu0 %v2613
        %2615 = vmatprep.subr.mxu0 0.0
        %v2616 = vand.u32 %v212, 4294901760
        %2617 = vmatpush1.msra.mxu0 %v2616
        %2618 = vmatprep.subr.mxu0 0.0
        %2619 = vmatpush1.msra.mxu0 0.0
        %2620 = vmatprep.subr.mxu0 0.0
        %2621 = vmatpush1.msra.mxu0 0.0
        %2622 = vmatprep.subr.mxu0 0.0
        %2623 = vmatpush1.msra.mxu0 0.0
        %2624 = vmatprep.subr.mxu0 0.0
        %2625 = vmatpush1.msra.mxu0 0.0
        %2626 = vmatprep.subr.mxu0 0.0
        %2627 = vmatpush1.msra.mxu0 0.0
        %2628 = vmatprep.subr.mxu0 0.0
        %2629 = vmatpush1.msra.mxu0 0.0
        %2630 = vmatprep.subr.mxu0 0.0
        %2631 = vmatpush1.msra.mxu0 0.0
        %2632 = vmatprep.subr.mxu0 0.0
        %2633 = vmatpush1.msra.mxu0 0.0
        %2634 = vmatprep.subr.mxu0 0.0
        %2635 = vmatpush1.msra.mxu0 0.0
        %2636 = vmatprep.subr.mxu0 0.0
        %2637 = vmatpush1.msra.mxu0 0.0
        %2638 = vmatprep.subr.mxu0 0.0
        %2639 = vmatpush1.msra.mxu0 0.0
        %2640 = vmatprep.subr.mxu0 0.0
        %2641 = vmatpush1.msra.mxu0 0.0
        %2642 = vmatprep.subr.mxu0 0.0
        %2643 = vmatpush1.msra.mxu0 0.0
        %2644 = vmatprep.subr.mxu0 0.0
        %2645 = vmatpush1.msra.mxu0 0.0
        %2646 = vmatprep.subr.mxu0 0.0
        %2647 = vmatpush1.msra.mxu0 0.0
        %2648 = vmatprep.subr.mxu0 0.0
        %2649 = vmatpush1.msra.mxu0 0.0
        %2650 = vmatprep.subr.mxu0 0.0
        %2651 = vmatpush1.msra.mxu0 0.0
        %2652 = vmatprep.subr.mxu0 0.0
        %2653 = vmatpush1.msra.mxu0 0.0
        %2654 = vmatprep.subr.mxu0 0.0
        %2655 = vmatpush1.msra.mxu0 0.0
        %2656 = vmatprep.subr.mxu0 0.0
        %2657 = vmatpush1.msra.mxu0 0.0
        %2658 = vmatprep.subr.mxu0 0.0
        %2659 = vmatpush1.msra.mxu0 0.0
        %2660 = vmatprep.subr.mxu0 0.0
        %2661 = vmatpush1.msra.mxu0 0.0
        %2662 = vmatprep.subr.mxu0 0.0
        %2663 = vmatpush1.msra.mxu0 0.0
        %2664 = vmatprep.subr.mxu0 0.0
        %2665 = vmatpush1.msra.mxu0 0.0
        %2666 = vmatprep.subr.mxu0 0.0
        %2667 = vmatpush1.msra.mxu0 0.0
        %2668 = vmatprep.subr.mxu0 0.0
        %2669 = vmatpush1.msra.mxu0 0.0
        %2670 = vmatprep.subr.mxu0 0.0
        %2671 = vmatpush1.msra.mxu0 0.0
        %2672 = vmatprep.subr.mxu0 0.0
        %2673 = vmatpush1.msra.mxu0 0.0
        %2674 = vmatprep.subr.mxu0 0.0
        %2675 = vmatpush1.msra.mxu0 0.0
        %2676 = vmatprep.subr.mxu0 0.0
        %2677 = vmatpush1.msra.mxu0 0.0
        %2678 = vmatprep.mubr.f32.mxu0 0.0
        %v2679 = vand.u32 %v2184, 4294901760
        %2680 = vmatmul.mubr.f32.gmra.mrb[0].mxu0 %v2679
        %v2681 = vpop.f32.mrb[0].mxu0
        %v2682 = vadd.f32 %v2603, %v2681
        %v2683 = vpop.f32.mrb[0].mxu0
        %2684 = vmatprep.mubr.f32.mxu0 0.0
        %v2685 = vand.u32 %v2187, 4294901760
        %2686 = vmatmul.mubr.f32.gmra.mrb[0].mxu0 %v2685
        %v2687 = vpop.f32.mrb[0].mxu0
        %v2688 = vadd.f32 %v2609, %v2687
        %v2689 = vpop.f32.mrb[0].mxu0
        %2690 = vdwg.mxu0
        %2691 = vmatprep.subr.mxu0 0.0
        %v2692 = vand.u32 %v2682, 4294901760
        %2693 = vmatpush1.msra.mxu0 %v2692
        %2694 = vmatprep.subr.mxu0 0.0
        %v2695 = vand.u32 %v2688, 4294901760
        %2696 = vmatpush1.msra.mxu0 %v2695
        %2697 = vmatprep.subr.mxu0 0.0
        %2698 = vmatpush1.msra.mxu0 0.0
        %2699 = vmatprep.subr.mxu0 0.0
        %2700 = vmatpush1.msra.mxu0 0.0
        %2701 = vmatprep.subr.mxu0 0.0
        %2702 = vmatpush1.msra.mxu0 0.0
        %2703 = vmatprep.subr.mxu0 0.0
        %2704 = vmatpush1.msra.mxu0 0.0
        %2705 = vmatprep.subr.mxu0 0.0
        %2706 = vmatpush1.msra.mxu0 0.0
        %2707 = vmatprep.subr.mxu0 0.0
        %2708 = vmatpush1.msra.mxu0 0.0
        %2709 = vmatprep.subr.mxu0 0.0
        %2710 = vmatpush1.msra.mxu0 0.0
        %2711 = vmatprep.subr.mxu0 0.0
        %2712 = vmatpush1.msra.mxu0 0.0
        %2713 = vmatprep.subr.mxu0 0.0
        %2714 = vmatpush1.msra.mxu0 0.0
        %2715 = vmatprep.subr.mxu0 0.0
        %2716 = vmatpush1.msra.mxu0 0.0
        %2717 = vmatprep.subr.mxu0 0.0
        %2718 = vmatpush1.msra.mxu0 0.0
        %2719 = vmatprep.subr.mxu0 0.0
        %2720 = vmatpush1.msra.mxu0 0.0
        %2721 = vmatprep.subr.mxu0 0.0
        %2722 = vmatpush1.msra.mxu0 0.0
        %2723 = vmatprep.subr.mxu0 0.0
        %2724 = vmatpush1.msra.mxu0 0.0
        %2725 = vmatprep.subr.mxu0 0.0
        %2726 = vmatpush1.msra.mxu0 0.0
        %2727 = vmatprep.subr.mxu0 0.0
        %2728 = vmatpush1.msra.mxu0 0.0
        %2729 = vmatprep.subr.mxu0 0.0
        %2730 = vmatpush1.msra.mxu0 0.0
        %2731 = vmatprep.subr.mxu0 0.0
        %2732 = vmatpush1.msra.mxu0 0.0
        %2733 = vmatprep.subr.mxu0 0.0
        %2734 = vmatpush1.msra.mxu0 0.0
        %2735 = vmatprep.subr.mxu0 0.0
        %2736 = vmatpush1.msra.mxu0 0.0
        %2737 = vmatprep.subr.mxu0 0.0
        %2738 = vmatpush1.msra.mxu0 0.0
        %2739 = vmatprep.subr.mxu0 0.0
        %2740 = vmatpush1.msra.mxu0 0.0
        %2741 = vmatprep.subr.mxu0 0.0
        %2742 = vmatpush1.msra.mxu0 0.0
        %2743 = vmatprep.subr.mxu0 0.0
        %2744 = vmatpush1.msra.mxu0 0.0
        %2745 = vmatprep.subr.mxu0 0.0
        %2746 = vmatpush1.msra.mxu0 0.0
        %2747 = vmatprep.subr.mxu0 0.0
        %2748 = vmatpush1.msra.mxu0 0.0
        %2749 = vmatprep.subr.mxu0 0.0
        %2750 = vmatpush1.msra.mxu0 0.0
        %2751 = vmatprep.subr.mxu0 0.0
        %2752 = vmatpush1.msra.mxu0 0.0
        %2753 = vmatprep.subr.mxu0 0.0
        %2754 = vmatpush1.msra.mxu0 0.0
        %2755 = vmatprep.subr.mxu0 0.0
        %2756 = vmatpush1.msra.mxu0 0.0
        %2757 = vmatprep.mubr.f32.mxu0 0.0
        %v2758 = vand.u32 %v727, 4294901760
        %v2759 = vsub.f32 %v727, %v2758
        %v2760 = vand.u32 %v2759, 4294901760
        %v2761 = vsub.f32 %v2759, %v2760
        %v2762 = vand.u32 %v2761, 4294901760
        %2763 = vmatmul.mubr.f32.gmra.mrb[0].mxu0 %v2762
        %v2764 = vpop.f32.mrb[0].mxu0
        %v2765 = vadd.f32 1e-12, %v2764
        %v2766 = vpop.f32.mrb[0].mxu0
        %2767 = vdwg.mxu0
        %2768 = vmatprep.subr.mxu0 0.0
        %v2769 = vand.u32 %v2682, 4294901760
        %v2770 = vsub.f32 %v2682, %v2769
        %v2771 = vand.u32 %v2770, 4294901760
        %v2772 = vsub.f32 %v2770, %v2771
        %v2773 = vand.u32 %v2772, 4294901760
        %2774 = vmatpush1.msra.mxu0 %v2773
        %2775 = vmatprep.subr.mxu0 0.0
        %v2776 = vand.u32 %v2688, 4294901760
        %v2777 = vsub.f32 %v2688, %v2776
        %v2778 = vand.u32 %v2777, 4294901760
        %v2779 = vsub.f32 %v2777, %v2778
        %v2780 = vand.u32 %v2779, 4294901760
        %2781 = vmatpush1.msra.mxu0 %v2780
        %2782 = vmatprep.subr.mxu0 0.0
        %2783 = vmatpush1.msra.mxu0 0.0
        %2784 = vmatprep.subr.mxu0 0.0
        %2785 = vmatpush1.msra.mxu0 0.0
        %2786 = vmatprep.subr.mxu0 0.0
        %2787 = vmatpush1.msra.mxu0 0.0
        %2788 = vmatprep.subr.mxu0 0.0
        %2789 = vmatpush1.msra.mxu0 0.0
        %2790 = vmatprep.subr.mxu0 0.0
        %2791 = vmatpush1.msra.mxu0 0.0
        %2792 = vmatprep.subr.mxu0 0.0
        %2793 = vmatpush1.msra.mxu0 0.0
        %2794 = vmatprep.subr.mxu0 0.0
        %2795 = vmatpush1.msra.mxu0 0.0
        %2796 = vmatprep.subr.mxu0 0.0
        %2797 = vmatpush1.msra.mxu0 0.0
        %2798 = vmatprep.subr.mxu0 0.0
        %2799 = vmatpush1.msra.mxu0 0.0
        %2800 = vmatprep.subr.mxu0 0.0
        %2801 = vmatpush1.msra.mxu0 0.0
        %2802 = vmatprep.subr.mxu0 0.0
        %2803 = vmatpush1.msra.mxu0 0.0
        %2804 = vmatprep.subr.mxu0 0.0
        %2805 = vmatpush1.msra.mxu0 0.0
        %2806 = vmatprep.subr.mxu0 0.0
        %2807 = vmatpush1.msra.mxu0 0.0
        %2808 = vmatprep.subr.mxu0 0.0
        %2809 = vmatpush1.msra.mxu0 0.0
        %2810 = vmatprep.subr.mxu0 0.0
        %2811 = vmatpush1.msra.mxu0 0.0
        %2812 = vmatprep.subr.mxu0 0.0
        %2813 = vmatpush1.msra.mxu0 0.0
        %2814 = vmatprep.subr.mxu0 0.0
        %2815 = vmatpush1.msra.mxu0 0.0
        %2816 = vmatprep.subr.mxu0 0.0
        %2817 = vmatpush1.msra.mxu0 0.0
        %2818 = vmatprep.subr.mxu0 0.0
        %2819 = vmatpush1.msra.mxu0 0.0
        %2820 = vmatprep.subr.mxu0 0.0
        %2821 = vmatpush1.msra.mxu0 0.0
        %2822 = vmatprep.subr.mxu0 0.0
        %2823 = vmatpush1.msra.mxu0 0.0
        %2824 = vmatprep.subr.mxu0 0.0
        %2825 = vmatpush1.msra.mxu0 0.0
        %2826 = vmatprep.subr.mxu0 0.0
        %2827 = vmatpush1.msra.mxu0 0.0
        %2828 = vmatprep.subr.mxu0 0.0
        %2829 = vmatpush1.msra.mxu0 0.0
        %2830 = vmatprep.subr.mxu0 0.0
        %2831 = vmatpush1.msra.mxu0 0.0
        %2832 = vmatprep.subr.mxu0 0.0
        %2833 = vmatpush1.msra.mxu0 0.0
        %2834 = vmatprep.subr.mxu0 0.0
        %2835 = vmatpush1.msra.mxu0 0.0
        %2836 = vmatprep.subr.mxu0 0.0
        %2837 = vmatpush1.msra.mxu0 0.0
        %2838 = vmatprep.subr.mxu0 0.0
        %2839 = vmatpush1.msra.mxu0 0.0
        %2840 = vmatprep.subr.mxu0 0.0
        %2841 = vmatpush1.msra.mxu0 0.0
        %2842 = vmatprep.mubr.f32.mxu0 0.0
        %v2843 = vand.u32 %v727, 4294901760
        %2844 = vmatmul.mubr.f32.gmra.mrb[0].mxu0 %v2843
        %v2845 = vpop.f32.mrb[0].mxu0
        %v2846 = vadd.f32 %v2765, %v2845
        %v2847 = vpop.f32.mrb[0].mxu0
        %2848 = vdwg.mxu0
        %2849 = vmatprep.subr.mxu0 0.0
        %v2850 = vand.u32 %v2682, 4294901760
        %v2851 = vsub.f32 %v2682, %v2850
        %2852 = vmatpush1.msra.mxu0 %v2851
        %2853 = vmatprep.subr.mxu0 0.0
        %v2854 = vand.u32 %v2688, 4294901760
        %v2855 = vsub.f32 %v2688, %v2854
        %2856 = vmatpush1.msra.mxu0 %v2855
        %2857 = vmatprep.subr.mxu0 0.0
        %2858 = vmatpush1.msra.mxu0 0.0
        %2859 = vmatprep.subr.mxu0 0.0
        %2860 = vmatpush1.msra.mxu0 0.0
        %2861 = vmatprep.subr.mxu0 0.0
        %2862 = vmatpush1.msra.mxu0 0.0
        %2863 = vmatprep.subr.mxu0 0.0
        %2864 = vmatpush1.msra.mxu0 0.0
        %2865 = vmatprep.subr.mxu0 0.0
        %2866 = vmatpush1.msra.mxu0 0.0
        %2867 = vmatprep.subr.mxu0 0.0
        %2868 = vmatpush1.msra.mxu0 0.0
        %2869 = vmatprep.subr.mxu0 0.0
        %2870 = vmatpush1.msra.mxu0 0.0
        %2871 = vmatprep.subr.mxu0 0.0
        %2872 = vmatpush1.msra.mxu0 0.0
        %2873 = vmatprep.subr.mxu0 0.0
        %2874 = vmatpush1.msra.mxu0 0.0
        %2875 = vmatprep.subr.mxu0 0.0
        %2876 = vmatpush1.msra.mxu0 0.0
        %2877 = vmatprep.subr.mxu0 0.0
        %2878 = vmatpush1.msra.mxu0 0.0
        %2879 = vmatprep.subr.mxu0 0.0
        %2880 = vmatpush1.msra.mxu0 0.0
        %2881 = vmatprep.subr.mxu0 0.0
        %2882 = vmatpush1.msra.mxu0 0.0
        %2883 = vmatprep.subr.mxu0 0.0
        %2884 = vmatpush1.msra.mxu0 0.0
        %2885 = vmatprep.subr.mxu0 0.0
        %2886 = vmatpush1.msra.mxu0 0.0
        %2887 = vmatprep.subr.mxu0 0.0
        %2888 = vmatpush1.msra.mxu0 0.0
        %2889 = vmatprep.subr.mxu0 0.0
        %2890 = vmatpush1.msra.mxu0 0.0
        %2891 = vmatprep.subr.mxu0 0.0
        %2892 = vmatpush1.msra.mxu0 0.0
        %2893 = vmatprep.subr.mxu0 0.0
        %2894 = vmatpush1.msra.mxu0 0.0
        %2895 = vmatprep.subr.mxu0 0.0
        %2896 = vmatpush1.msra.mxu0 0.0
        %2897 = vmatprep.subr.mxu0 0.0
        %2898 = vmatpush1.msra.mxu0 0.0
        %2899 = vmatprep.subr.mxu0 0.0
        %2900 = vmatpush1.msra.mxu0 0.0
        %2901 = vmatprep.subr.mxu0 0.0
        %2902 = vmatpush1.msra.mxu0 0.0
        %2903 = vmatprep.subr.mxu0 0.0
        %2904 = vmatpush1.msra.mxu0 0.0
        %2905 = vmatprep.subr.mxu0 0.0
        %2906 = vmatpush1.msra.mxu0 0.0
        %2907 = vmatprep.subr.mxu0 0.0
        %2908 = vmatpush1.msra.mxu0 0.0
        %2909 = vmatprep.subr.mxu0 0.0
        %2910 = vmatpush1.msra.mxu0 0.0
        %2911 = vmatprep.subr.mxu0 0.0
        %2912 = vmatpush1.msra.mxu0 0.0
        %2913 = vmatprep.subr.mxu0 0.0
        %2914 = vmatpush1.msra.mxu0 0.0
        %2915 = vmatprep.subr.mxu0 0.0
        %2916 = vmatpush1.msra.mxu0 0.0
        %2917 = vmatprep.mubr.f32.mxu0 0.0
        %v2918 = vand.u32 %v727, 4294901760
        %v2919 = vsub.f32 %v727, %v2918
        %2920 = vmatmul.mubr.f32.gmra.mrb[0].mxu0 %v2919
        %v2921 = vpop.f32.mrb[0].mxu0
        %v2922 = vadd.f32 %v2846, %v2921
        %v2923 = vpop.f32.mrb[0].mxu0
        %2924 = vdwg.mxu0
        %2925 = vmatprep.subr.mxu0 0.0
        %v2926 = vand.u32 %v2682, 4294901760
        %2927 = vmatpush1.msra.mxu0 %v2926
        %2928 = vmatprep.subr.mxu0 0.0
        %v2929 = vand.u32 %v2688, 4294901760
        %2930 = vmatpush1.msra.mxu0 %v2929
        %2931 = vmatprep.subr.mxu0 0.0
        %2932 = vmatpush1.msra.mxu0 0.0
        %2933 = vmatprep.subr.mxu0 0.0
        %2934 = vmatpush1.msra.mxu0 0.0
        %2935 = vmatprep.subr.mxu0 0.0
        %2936 = vmatpush1.msra.mxu0 0.0
        %2937 = vmatprep.subr.mxu0 0.0
        %2938 = vmatpush1.msra.mxu0 0.0
        %2939 = vmatprep.subr.mxu0 0.0
        %2940 = vmatpush1.msra.mxu0 0.0
        %2941 = vmatprep.subr.mxu0 0.0
        %2942 = vmatpush1.msra.mxu0 0.0
        %2943 = vmatprep.subr.mxu0 0.0
        %2944 = vmatpush1.msra.mxu0 0.0
        %2945 = vmatprep.subr.mxu0 0.0
        %2946 = vmatpush1.msra.mxu0 0.0
        %2947 = vmatprep.subr.mxu0 0.0
        %2948 = vmatpush1.msra.mxu0 0.0
        %2949 = vmatprep.subr.mxu0 0.0
        %2950 = vmatpush1.msra.mxu0 0.0
        %2951 = vmatprep.subr.mxu0 0.0
        %2952 = vmatpush1.msra.mxu0 0.0
        %2953 = vmatprep.subr.mxu0 0.0
        %2954 = vmatpush1.msra.mxu0 0.0
        %2955 = vmatprep.subr.mxu0 0.0
        %2956 = vmatpush1.msra.mxu0 0.0
        %2957 = vmatprep.subr.mxu0 0.0
        %2958 = vmatpush1.msra.mxu0 0.0
        %2959 = vmatprep.subr.mxu0 0.0
        %2960 = vmatpush1.msra.mxu0 0.0
        %2961 = vmatprep.subr.mxu0 0.0
        %2962 = vmatpush1.msra.mxu0 0.0
        %2963 = vmatprep.subr.mxu0 0.0
        %2964 = vmatpush1.msra.mxu0 0.0
        %2965 = vmatprep.subr.mxu0 0.0
        %2966 = vmatpush1.msra.mxu0 0.0
        %2967 = vmatprep.subr.mxu0 0.0
        %2968 = vmatpush1.msra.mxu0 0.0
        %2969 = vmatprep.subr.mxu0 0.0
        %2970 = vmatpush1.msra.mxu0 0.0
        %2971 = vmatprep.subr.mxu0 0.0
        %2972 = vmatpush1.msra.mxu0 0.0
        %2973 = vmatprep.subr.mxu0 0.0
        %2974 = vmatpush1.msra.mxu0 0.0
        %2975 = vmatprep.subr.mxu0 0.0
        %2976 = vmatpush1.msra.mxu0 0.0
        %2977 = vmatprep.subr.mxu0 0.0
        %2978 = vmatpush1.msra.mxu0 0.0
        %2979 = vmatprep.subr.mxu0 0.0
        %2980 = vmatpush1.msra.mxu0 0.0
        %2981 = vmatprep.subr.mxu0 0.0
        %2982 = vmatpush1.msra.mxu0 0.0
        %2983 = vmatprep.subr.mxu0 0.0
        %2984 = vmatpush1.msra.mxu0 0.0
        %2985 = vmatprep.subr.mxu0 0.0
        %2986 = vmatpush1.msra.mxu0 0.0
        %2987 = vmatprep.subr.mxu0 0.0
        %2988 = vmatpush1.msra.mxu0 0.0
        %2989 = vmatprep.subr.mxu0 0.0
        %2990 = vmatpush1.msra.mxu0 0.0
        %2991 = vmatprep.mubr.f32.mxu0 0.0
        %v2992 = vand.u32 %v727, 4294901760
        %v2993 = vsub.f32 %v727, %v2992
        %v2994 = vand.u32 %v2993, 4294901760
        %2995 = vmatmul.mubr.f32.gmra.mrb[0].mxu0 %v2994
        %v2996 = vpop.f32.mrb[0].mxu0
        %v2997 = vadd.f32 %v2922, %v2996
        %v2998 = vpop.f32.mrb[0].mxu0
        %2999 = vdwg.mxu0
        %3000 = vmatprep.subr.mxu0 0.0
        %v3001 = vand.u32 %v2682, 4294901760
        %v3002 = vsub.f32 %v2682, %v3001
        %v3003 = vand.u32 %v3002, 4294901760
        %3004 = vmatpush1.msra.mxu0 %v3003
        %3005 = vmatprep.subr.mxu0 0.0
        %v3006 = vand.u32 %v2688, 4294901760
        %v3007 = vsub.f32 %v2688, %v3006
        %v3008 = vand.u32 %v3007, 4294901760
        %3009 = vmatpush1.msra.mxu0 %v3008
        %3010 = vmatprep.subr.mxu0 0.0
        %3011 = vmatpush1.msra.mxu0 0.0
        %3012 = vmatprep.subr.mxu0 0.0
        %3013 = vmatpush1.msra.mxu0 0.0
        %3014 = vmatprep.subr.mxu0 0.0
        %3015 = vmatpush1.msra.mxu0 0.0
        %3016 = vmatprep.subr.mxu0 0.0
        %3017 = vmatpush1.msra.mxu0 0.0
        %3018 = vmatprep.subr.mxu0 0.0
        %3019 = vmatpush1.msra.mxu0 0.0
        %3020 = vmatprep.subr.mxu0 0.0
        %3021 = vmatpush1.msra.mxu0 0.0
        %3022 = vmatprep.subr.mxu0 0.0
        %3023 = vmatpush1.msra.mxu0 0.0
        %3024 = vmatprep.subr.mxu0 0.0
        %3025 = vmatpush1.msra.mxu0 0.0
        %3026 = vmatprep.subr.mxu0 0.0
        %3027 = vmatpush1.msra.mxu0 0.0
        %3028 = vmatprep.subr.mxu0 0.0
        %3029 = vmatpush1.msra.mxu0 0.0
        %3030 = vmatprep.subr.mxu0 0.0
        %3031 = vmatpush1.msra.mxu0 0.0
        %3032 = vmatprep.subr.mxu0 0.0
        %3033 = vmatpush1.msra.mxu0 0.0
        %3034 = vmatprep.subr.mxu0 0.0
        %3035 = vmatpush1.msra.mxu0 0.0
        %3036 = vmatprep.subr.mxu0 0.0
        %3037 = vmatpush1.msra.mxu0 0.0
        %3038 = vmatprep.subr.mxu0 0.0
        %3039 = vmatpush1.msra.mxu0 0.0
        %3040 = vmatprep.subr.mxu0 0.0
        %3041 = vmatpush1.msra.mxu0 0.0
        %3042 = vmatprep.subr.mxu0 0.0
        %3043 = vmatpush1.msra.mxu0 0.0
        %3044 = vmatprep.subr.mxu0 0.0
        %3045 = vmatpush1.msra.mxu0 0.0
        %3046 = vmatprep.subr.mxu0 0.0
        %3047 = vmatpush1.msra.mxu0 0.0
        %3048 = vmatprep.subr.mxu0 0.0
        %3049 = vmatpush1.msra.mxu0 0.0
        %3050 = vmatprep.subr.mxu0 0.0
        %3051 = vmatpush1.msra.mxu0 0.0
        %3052 = vmatprep.subr.mxu0 0.0
        %3053 = vmatpush1.msra.mxu0 0.0
        %3054 = vmatprep.subr.mxu0 0.0
        %3055 = vmatpush1.msra.mxu0 0.0
        %3056 = vmatprep.subr.mxu0 0.0
        %3057 = vmatpush1.msra.mxu0 0.0
        %3058 = vmatprep.subr.mxu0 0.0
        %3059 = vmatpush1.msra.mxu0 0.0
        %3060 = vmatprep.subr.mxu0 0.0
        %3061 = vmatpush1.msra.mxu0 0.0
        %3062 = vmatprep.subr.mxu0 0.0
        %3063 = vmatpush1.msra.mxu0 0.0
        %3064 = vmatprep.subr.mxu0 0.0
        %3065 = vmatpush1.msra.mxu0 0.0
        %3066 = vmatprep.subr.mxu0 0.0
        %3067 = vmatpush1.msra.mxu0 0.0
        %3068 = vmatprep.subr.mxu0 0.0
        %3069 = vmatpush1.msra.mxu0 0.0
        %3070 = vmatprep.mubr.f32.mxu0 0.0
        %v3071 = vand.u32 %v727, 4294901760
        %3072 = vmatmul.mubr.f32.gmra.mrb[0].mxu0 %v3071
        %v3073 = vpop.f32.mrb[0].mxu0
        %v3074 = vadd.f32 %v2997, %v3073
        %v3075 = vpop.f32.mrb[0].mxu0
        %3076 = vdwg.mxu0
        %3077 = vmatprep.subr.mxu0 0.0
        %v3078 = vand.u32 %v2682, 4294901760
        %3079 = vmatpush1.msra.mxu0 %v3078
        %3080 = vmatprep.subr.mxu0 0.0
        %v3081 = vand.u32 %v2688, 4294901760
        %3082 = vmatpush1.msra.mxu0 %v3081
        %3083 = vmatprep.subr.mxu0 0.0
        %3084 = vmatpush1.msra.mxu0 0.0
        %3085 = vmatprep.subr.mxu0 0.0
        %3086 = vmatpush1.msra.mxu0 0.0
        %3087 = vmatprep.subr.mxu0 0.0
        %3088 = vmatpush1.msra.mxu0 0.0
        %3089 = vmatprep.subr.mxu0 0.0
        %3090 = vmatpush1.msra.mxu0 0.0
        %3091 = vmatprep.subr.mxu0 0.0
        %3092 = vmatpush1.msra.mxu0 0.0
        %3093 = vmatprep.subr.mxu0 0.0
        %3094 = vmatpush1.msra.mxu0 0.0
        %3095 = vmatprep.subr.mxu0 0.0
        %3096 = vmatpush1.msra.mxu0 0.0
        %3097 = vmatprep.subr.mxu0 0.0
        %3098 = vmatpush1.msra.mxu0 0.0
        %3099 = vmatprep.subr.mxu0 0.0
        %3100 = vmatpush1.msra.mxu0 0.0
        %3101 = vmatprep.subr.mxu0 0.0
        %3102 = vmatpush1.msra.mxu0 0.0
        %3103 = vmatprep.subr.mxu0 0.0
        %3104 = vmatpush1.msra.mxu0 0.0
        %3105 = vmatprep.subr.mxu0 0.0
        %3106 = vmatpush1.msra.mxu0 0.0
        %3107 = vmatprep.subr.mxu0 0.0
        %3108 = vmatpush1.msra.mxu0 0.0
        %3109 = vmatprep.subr.mxu0 0.0
        %3110 = vmatpush1.msra.mxu0 0.0
        %3111 = vmatprep.subr.mxu0 0.0
        %3112 = vmatpush1.msra.mxu0 0.0
        %3113 = vmatprep.subr.mxu0 0.0
        %3114 = vmatpush1.msra.mxu0 0.0
        %3115 = vmatprep.subr.mxu0 0.0
        %3116 = vmatpush1.msra.mxu0 0.0
        %3117 = vmatprep.subr.mxu0 0.0
        %3118 = vmatpush1.msra.mxu0 0.0
        %3119 = vmatprep.subr.mxu0 0.0
        %3120 = vmatpush1.msra.mxu0 0.0
        %3121 = vmatprep.subr.mxu0 0.0
        %3122 = vmatpush1.msra.mxu0 0.0
        %3123 = vmatprep.subr.mxu0 0.0
        %3124 = vmatpush1.msra.mxu0 0.0
        %3125 = vmatprep.subr.mxu0 0.0
        %3126 = vmatpush1.msra.mxu0 0.0
        %3127 = vmatprep.subr.mxu0 0.0
        %3128 = vmatpush1.msra.mxu0 0.0
        %3129 = vmatprep.subr.mxu0 0.0
        %3130 = vmatpush1.msra.mxu0 0.0
        %3131 = vmatprep.subr.mxu0 0.0
        %3132 = vmatpush1.msra.mxu0 0.0
        %3133 = vmatprep.subr.mxu0 0.0
        %3134 = vmatpush1.msra.mxu0 0.0
        %3135 = vmatprep.subr.mxu0 0.0
        %3136 = vmatpush1.msra.mxu0 0.0
        %3137 = vmatprep.subr.mxu0 0.0
        %3138 = vmatpush1.msra.mxu0 0.0
        %3139 = vmatprep.subr.mxu0 0.0
        %3140 = vmatpush1.msra.mxu0 0.0
        %3141 = vmatprep.subr.mxu0 0.0
        %3142 = vmatpush1.msra.mxu0 0.0
        %3143 = vmatprep.mubr.f32.mxu0 0.0
        %v3144 = vand.u32 %v727, 4294901760
        %3145 = vmatmul.mubr.f32.gmra.mrb[0].mxu0 %v3144
        %v3146 = vpop.f32.mrb[0].mxu0
        %v3147 = vadd.f32 %v3074, %v3146
        %v3148 = vpop.f32.mrb[0].mxu0
        %3149 = vdwg.mxu0
        %v3150 = vrsqrt.pop %v3147
        %v3151 = vmul.f32 %v3147, %v3150
        %vm3152 = vcmp.eq.f32.partialorder %v3147, inf
        %v3153 = vsel %vm3152, %v3147, %v3151
        %vm3154 = vcmp.eq.f32.partialorder %v3147, 0.0
        %v3155 = vand.u32 %v3147, 2147483648
        %v3156 = vsel %vm3154, %v3155, %v3153
        %s3157 = scalar_lea.vmem %s207, 16 [#allocation5]
        %3158 = vst.msk [vmem:[%s3157] sm:$0xff] %vm1195, %v3156
        %s3159 = scalar_lea.vmem %s185, 48 [#allocation2]
        %v3160 = vld [vmem:[%s3159] sm:$0xff]
        %v3161 = vld [vmem:[%s3159 + $0x8] sm:$0xff]
        %v3162 = vmul.f32 %v3160, %v3160
        %v3163 = vmul.f32 %v3161, %v3161
        %v3165 = vsel %vm217, %v3162, 0
        %v3168 = vsel %vm217, %v3163, 0
        %3170 = vmatprep.subr.mxu0 0.0
        %v3171 = vand.u32 %v211, 4294901760
        %3172 = vmatpush1.msra.mxu0 %v3171
        %3173 = vmatprep.subr.mxu0 0.0
        %v3174 = vand.u32 %v212, 4294901760
        %3175 = vmatpush1.msra.mxu0 %v3174
        %3176 = vmatprep.subr.mxu0 0.0
        %3177 = vmatpush1.msra.mxu0 0.0
        %3178 = vmatprep.subr.mxu0 0.0
        %3179 = vmatpush1.msra.mxu0 0.0
        %3180 = vmatprep.subr.mxu0 0.0
        %3181 = vmatpush1.msra.mxu0 0.0
        %3182 = vmatprep.subr.mxu0 0.0
        %3183 = vmatpush1.msra.mxu0 0.0
        %3184 = vmatprep.subr.mxu0 0.0
        %3185 = vmatpush1.msra.mxu0 0.0
        %3186 = vmatprep.subr.mxu0 0.0
        %3187 = vmatpush1.msra.mxu0 0.0
        %3188 = vmatprep.subr.mxu0 0.0
        %3189 = vmatpush1.msra.mxu0 0.0
        %3190 = vmatprep.subr.mxu0 0.0
        %3191 = vmatpush1.msra.mxu0 0.0
        %3192 = vmatprep.subr.mxu0 0.0
        %3193 = vmatpush1.msra.mxu0 0.0
        %3194 = vmatprep.subr.mxu0 0.0
        %3195 = vmatpush1.msra.mxu0 0.0
        %3196 = vmatprep.subr.mxu0 0.0
        %3197 = vmatpush1.msra.mxu0 0.0
        %3198 = vmatprep.subr.mxu0 0.0
        %3199 = vmatpush1.msra.mxu0 0.0
        %3200 = vmatprep.subr.mxu0 0.0
        %3201 = vmatpush1.msra.mxu0 0.0
        %3202 = vmatprep.subr.mxu0 0.0
        %3203 = vmatpush1.msra.mxu0 0.0
        %3204 = vmatprep.subr.mxu0 0.0
        %3205 = vmatpush1.msra.mxu0 0.0
        %3206 = vmatprep.subr.mxu0 0.0
        %3207 = vmatpush1.msra.mxu0 0.0
        %3208 = vmatprep.subr.mxu0 0.0
        %3209 = vmatpush1.msra.mxu0 0.0
        %3210 = vmatprep.subr.mxu0 0.0
        %3211 = vmatpush1.msra.mxu0 0.0
        %3212 = vmatprep.subr.mxu0 0.0
        %3213 = vmatpush1.msra.mxu0 0.0
        %3214 = vmatprep.subr.mxu0 0.0
        %3215 = vmatpush1.msra.mxu0 0.0
        %3216 = vmatprep.subr.mxu0 0.0
        %3217 = vmatpush1.msra.mxu0 0.0
        %3218 = vmatprep.subr.mxu0 0.0
        %3219 = vmatpush1.msra.mxu0 0.0
        %3220 = vmatprep.subr.mxu0 0.0
        %3221 = vmatpush1.msra.mxu0 0.0
        %3222 = vmatprep.subr.mxu0 0.0
        %3223 = vmatpush1.msra.mxu0 0.0
        %3224 = vmatprep.subr.mxu0 0.0
        %3225 = vmatpush1.msra.mxu0 0.0
        %3226 = vmatprep.subr.mxu0 0.0
        %3227 = vmatpush1.msra.mxu0 0.0
        %3228 = vmatprep.subr.mxu0 0.0
        %3229 = vmatpush1.msra.mxu0 0.0
        %3230 = vmatprep.subr.mxu0 0.0
        %3231 = vmatpush1.msra.mxu0 0.0
        %3232 = vmatprep.subr.mxu0 0.0
        %3233 = vmatpush1.msra.mxu0 0.0
        %3234 = vmatprep.subr.mxu0 0.0
        %3235 = vmatpush1.msra.mxu0 0.0
        %3236 = vmatprep.mubr.f32.mxu0 0.0
        %v3237 = vand.u32 %v3165, 4294901760
        %v3238 = vsub.f32 %v3165, %v3237
        %v3239 = vand.u32 %v3238, 4294901760
        %v3240 = vsub.f32 %v3238, %v3239
        %v3241 = vand.u32 %v3240, 4294901760
        %3242 = vmatmul.mubr.f32.gmra.mrb[0].mxu0 %v3241
        %v3243 = vpop.f32.mrb[0].mxu0
        %v3244 = vadd.f32 0.0, %v3243
        %v3245 = vpop.f32.mrb[0].mxu0
        %3246 = vmatprep.mubr.f32.mxu0 0.0
        %v3247 = vand.u32 %v3168, 4294901760
        %v3248 = vsub.f32 %v3168, %v3247
        %v3249 = vand.u32 %v3248, 4294901760
        %v3250 = vsub.f32 %v3248, %v3249
        %v3251 = vand.u32 %v3250, 4294901760
        %3252 = vmatmul.mubr.f32.gmra.mrb[0].mxu0 %v3251
        %v3253 = vpop.f32.mrb[0].mxu0
        %v3254 = vadd.f32 0.0, %v3253
        %v3255 = vpop.f32.mrb[0].mxu0
        %3256 = vdwg.mxu0
        %3257 = vmatprep.subr.mxu0 0.0
        %v3258 = vand.u32 %v211, 4294901760
        %v3259 = vsub.f32 %v211, %v3258
        %v3260 = vand.u32 %v3259, 4294901760
        %v3261 = vsub.f32 %v3259, %v3260
        %v3262 = vand.u32 %v3261, 4294901760
        %3263 = vmatpush1.msra.mxu0 %v3262
        %3264 = vmatprep.subr.mxu0 0.0
        %v3265 = vand.u32 %v212, 4294901760
        %v3266 = vsub.f32 %v212, %v3265
        %v3267 = vand.u32 %v3266, 4294901760
        %v3268 = vsub.f32 %v3266, %v3267
        %v3269 = vand.u32 %v3268, 4294901760
        %3270 = vmatpush1.msra.mxu0 %v3269
        %3271 = vmatprep.subr.mxu0 0.0
        %3272 = vmatpush1.msra.mxu0 0.0
        %3273 = vmatprep.subr.mxu0 0.0
        %3274 = vmatpush1.msra.mxu0 0.0
        %3275 = vmatprep.subr.mxu0 0.0
        %3276 = vmatpush1.msra.mxu0 0.0
        %3277 = vmatprep.subr.mxu0 0.0
        %3278 = vmatpush1.msra.mxu0 0.0
        %3279 = vmatprep.subr.mxu0 0.0
        %3280 = vmatpush1.msra.mxu0 0.0
        %3281 = vmatprep.subr.mxu0 0.0
        %3282 = vmatpush1.msra.mxu0 0.0
        %3283 = vmatprep.subr.mxu0 0.0
        %3284 = vmatpush1.msra.mxu0 0.0
        %3285 = vmatprep.subr.mxu0 0.0
        %3286 = vmatpush1.msra.mxu0 0.0
        %3287 = vmatprep.subr.mxu0 0.0
        %3288 = vmatpush1.msra.mxu0 0.0
        %3289 = vmatprep.subr.mxu0 0.0
        %3290 = vmatpush1.msra.mxu0 0.0
        %3291 = vmatprep.subr.mxu0 0.0
        %3292 = vmatpush1.msra.mxu0 0.0
        %3293 = vmatprep.subr.mxu0 0.0
        %3294 = vmatpush1.msra.mxu0 0.0
        %3295 = vmatprep.subr.mxu0 0.0
        %3296 = vmatpush1.msra.mxu0 0.0
        %3297 = vmatprep.subr.mxu0 0.0
        %3298 = vmatpush1.msra.mxu0 0.0
        %3299 = vmatprep.subr.mxu0 0.0
        %3300 = vmatpush1.msra.mxu0 0.0
        %3301 = vmatprep.subr.mxu0 0.0
        %3302 = vmatpush1.msra.mxu0 0.0
        %3303 = vmatprep.subr.mxu0 0.0
        %3304 = vmatpush1.msra.mxu0 0.0
        %3305 = vmatprep.subr.mxu0 0.0
        %3306 = vmatpush1.msra.mxu0 0.0
        %3307 = vmatprep.subr.mxu0 0.0
        %3308 = vmatpush1.msra.mxu0 0.0
        %3309 = vmatprep.subr.mxu0 0.0
        %3310 = vmatpush1.msra.mxu0 0.0
        %3311 = vmatprep.subr.mxu0 0.0
        %3312 = vmatpush1.msra.mxu0 0.0
        %3313 = vmatprep.subr.mxu0 0.0
        %3314 = vmatpush1.msra.mxu0 0.0
        %3315 = vmatprep.subr.mxu0 0.0
        %3316 = vmatpush1.msra.mxu0 0.0
        %3317 = vmatprep.subr.mxu0 0.0
        %3318 = vmatpush1.msra.mxu0 0.0
        %3319 = vmatprep.subr.mxu0 0.0
        %3320 = vmatpush1.msra.mxu0 0.0
        %3321 = vmatprep.subr.mxu0 0.0
        %3322 = vmatpush1.msra.mxu0 0.0
        %3323 = vmatprep.subr.mxu0 0.0
        %3324 = vmatpush1.msra.mxu0 0.0
        %3325 = vmatprep.subr.mxu0 0.0
        %3326 = vmatpush1.msra.mxu0 0.0
        %3327 = vmatprep.subr.mxu0 0.0
        %3328 = vmatpush1.msra.mxu0 0.0
        %3329 = vmatprep.subr.mxu0 0.0
        %3330 = vmatpush1.msra.mxu0 0.0
        %3331 = vmatprep.mubr.f32.mxu0 0.0
        %v3332 = vand.u32 %v3165, 4294901760
        %3333 = vmatmul.mubr.f32.gmra.mrb[0].mxu0 %v3332
        %v3334 = vpop.f32.mrb[0].mxu0
        %v3335 = vadd.f32 %v3244, %v3334
        %v3336 = vpop.f32.mrb[0].mxu0
        %3337 = vmatprep.mubr.f32.mxu0 0.0
        %v3338 = vand.u32 %v3168, 4294901760
        %3339 = vmatmul.mubr.f32.gmra.mrb[0].mxu0 %v3338
        %v3340 = vpop.f32.mrb[0].mxu0
        %v3341 = vadd.f32 %v3254, %v3340
        %v3342 = vpop.f32.mrb[0].mxu0
        %3343 = vdwg.mxu0
        %3344 = vmatprep.subr.mxu0 0.0
        %v3345 = vand.u32 %v211, 4294901760
        %v3346 = vsub.f32 %v211, %v3345
        %3347 = vmatpush1.msra.mxu0 %v3346
        %3348 = vmatprep.subr.mxu0 0.0
        %v3349 = vand.u32 %v212, 4294901760
        %v3350 = vsub.f32 %v212, %v3349
        %3351 = vmatpush1.msra.mxu0 %v3350
        %3352 = vmatprep.subr.mxu0 0.0
        %3353 = vmatpush1.msra.mxu0 0.0
        %3354 = vmatprep.subr.mxu0 0.0
        %3355 = vmatpush1.msra.mxu0 0.0
        %3356 = vmatprep.subr.mxu0 0.0
        %3357 = vmatpush1.msra.mxu0 0.0
        %3358 = vmatprep.subr.mxu0 0.0
        %3359 = vmatpush1.msra.mxu0 0.0
        %3360 = vmatprep.subr.mxu0 0.0
        %3361 = vmatpush1.msra.mxu0 0.0
        %3362 = vmatprep.subr.mxu0 0.0
        %3363 = vmatpush1.msra.mxu0 0.0
        %3364 = vmatprep.subr.mxu0 0.0
        %3365 = vmatpush1.msra.mxu0 0.0
        %3366 = vmatprep.subr.mxu0 0.0
        %3367 = vmatpush1.msra.mxu0 0.0
        %3368 = vmatprep.subr.mxu0 0.0
        %3369 = vmatpush1.msra.mxu0 0.0
        %3370 = vmatprep.subr.mxu0 0.0
        %3371 = vmatpush1.msra.mxu0 0.0
        %3372 = vmatprep.subr.mxu0 0.0
        %3373 = vmatpush1.msra.mxu0 0.0
        %3374 = vmatprep.subr.mxu0 0.0
        %3375 = vmatpush1.msra.mxu0 0.0
        %3376 = vmatprep.subr.mxu0 0.0
        %3377 = vmatpush1.msra.mxu0 0.0
        %3378 = vmatprep.subr.mxu0 0.0
        %3379 = vmatpush1.msra.mxu0 0.0
        %3380 = vmatprep.subr.mxu0 0.0
        %3381 = vmatpush1.msra.mxu0 0.0
        %3382 = vmatprep.subr.mxu0 0.0
        %3383 = vmatpush1.msra.mxu0 0.0
        %3384 = vmatprep.subr.mxu0 0.0
        %3385 = vmatpush1.msra.mxu0 0.0
        %3386 = vmatprep.subr.mxu0 0.0
        %3387 = vmatpush1.msra.mxu0 0.0
        %3388 = vmatprep.subr.mxu0 0.0
        %3389 = vmatpush1.msra.mxu0 0.0
        %3390 = vmatprep.subr.mxu0 0.0
        %3391 = vmatpush1.msra.mxu0 0.0
        %3392 = vmatprep.subr.mxu0 0.0
        %3393 = vmatpush1.msra.mxu0 0.0
        %3394 = vmatprep.subr.mxu0 0.0
        %3395 = vmatpush1.msra.mxu0 0.0
        %3396 = vmatprep.subr.mxu0 0.0
        %3397 = vmatpush1.msra.mxu0 0.0
        %3398 = vmatprep.subr.mxu0 0.0
        %3399 = vmatpush1.msra.mxu0 0.0
        %3400 = vmatprep.subr.mxu0 0.0
        %3401 = vmatpush1.msra.mxu0 0.0
        %3402 = vmatprep.subr.mxu0 0.0
        %3403 = vmatpush1.msra.mxu0 0.0
        %3404 = vmatprep.subr.mxu0 0.0
        %3405 = vmatpush1.msra.mxu0 0.0
        %3406 = vmatprep.subr.mxu0 0.0
        %3407 = vmatpush1.msra.mxu0 0.0
        %3408 = vmatprep.subr.mxu0 0.0
        %3409 = vmatpush1.msra.mxu0 0.0
        %3410 = vmatprep.subr.mxu0 0.0
        %3411 = vmatpush1.msra.mxu0 0.0
        %3412 = vmatprep.mubr.f32.mxu0 0.0
        %v3413 = vand.u32 %v3165, 4294901760
        %v3414 = vsub.f32 %v3165, %v3413
        %3415 = vmatmul.mubr.f32.gmra.mrb[0].mxu0 %v3414
        %v3416 = vpop.f32.mrb[0].mxu0
        %v3417 = vadd.f32 %v3335, %v3416
        %v3418 = vpop.f32.mrb[0].mxu0
        %3419 = vmatprep.mubr.f32.mxu0 0.0
        %v3420 = vand.u32 %v3168, 4294901760
        %v3421 = vsub.f32 %v3168, %v3420
        %3422 = vmatmul.mubr.f32.gmra.mrb[0].mxu0 %v3421
        %v3423 = vpop.f32.mrb[0].mxu0
        %v3424 = vadd.f32 %v3341, %v3423
        %v3425 = vpop.f32.mrb[0].mxu0
        %3426 = vdwg.mxu0
        %3427 = vmatprep.subr.mxu0 0.0
        %v3428 = vand.u32 %v211, 4294901760
        %3429 = vmatpush1.msra.mxu0 %v3428
        %3430 = vmatprep.subr.mxu0 0.0
        %v3431 = vand.u32 %v212, 4294901760
        %3432 = vmatpush1.msra.mxu0 %v3431
        %3433 = vmatprep.subr.mxu0 0.0
        %3434 = vmatpush1.msra.mxu0 0.0
        %3435 = vmatprep.subr.mxu0 0.0
        %3436 = vmatpush1.msra.mxu0 0.0
        %3437 = vmatprep.subr.mxu0 0.0
        %3438 = vmatpush1.msra.mxu0 0.0
        %3439 = vmatprep.subr.mxu0 0.0
        %3440 = vmatpush1.msra.mxu0 0.0
        %3441 = vmatprep.subr.mxu0 0.0
        %3442 = vmatpush1.msra.mxu0 0.0
        %3443 = vmatprep.subr.mxu0 0.0
        %3444 = vmatpush1.msra.mxu0 0.0
        %3445 = vmatprep.subr.mxu0 0.0
        %3446 = vmatpush1.msra.mxu0 0.0
        %3447 = vmatprep.subr.mxu0 0.0
        %3448 = vmatpush1.msra.mxu0 0.0
        %3449 = vmatprep.subr.mxu0 0.0
        %3450 = vmatpush1.msra.mxu0 0.0
        %3451 = vmatprep.subr.mxu0 0.0
        %3452 = vmatpush1.msra.mxu0 0.0
        %3453 = vmatprep.subr.mxu0 0.0
        %3454 = vmatpush1.msra.mxu0 0.0
        %3455 = vmatprep.subr.mxu0 0.0
        %3456 = vmatpush1.msra.mxu0 0.0
        %3457 = vmatprep.subr.mxu0 0.0
        %3458 = vmatpush1.msra.mxu0 0.0
        %3459 = vmatprep.subr.mxu0 0.0
        %3460 = vmatpush1.msra.mxu0 0.0
        %3461 = vmatprep.subr.mxu0 0.0
        %3462 = vmatpush1.msra.mxu0 0.0
        %3463 = vmatprep.subr.mxu0 0.0
        %3464 = vmatpush1.msra.mxu0 0.0
        %3465 = vmatprep.subr.mxu0 0.0
        %3466 = vmatpush1.msra.mxu0 0.0
        %3467 = vmatprep.subr.mxu0 0.0
        %3468 = vmatpush1.msra.mxu0 0.0
        %3469 = vmatprep.subr.mxu0 0.0
        %3470 = vmatpush1.msra.mxu0 0.0
        %3471 = vmatprep.subr.mxu0 0.0
        %3472 = vmatpush1.msra.mxu0 0.0
        %3473 = vmatprep.subr.mxu0 0.0
        %3474 = vmatpush1.msra.mxu0 0.0
        %3475 = vmatprep.subr.mxu0 0.0
        %3476 = vmatpush1.msra.mxu0 0.0
        %3477 = vmatprep.subr.mxu0 0.0
        %3478 = vmatpush1.msra.mxu0 0.0
        %3479 = vmatprep.subr.mxu0 0.0
        %3480 = vmatpush1.msra.mxu0 0.0
        %3481 = vmatprep.subr.mxu0 0.0
        %3482 = vmatpush1.msra.mxu0 0.0
        %3483 = vmatprep.subr.mxu0 0.0
        %3484 = vmatpush1.msra.mxu0 0.0
        %3485 = vmatprep.subr.mxu0 0.0
        %3486 = vmatpush1.msra.mxu0 0.0
        %3487 = vmatprep.subr.mxu0 0.0
        %3488 = vmatpush1.msra.mxu0 0.0
        %3489 = vmatprep.subr.mxu0 0.0
        %3490 = vmatpush1.msra.mxu0 0.0
        %3491 = vmatprep.subr.mxu0 0.0
        %3492 = vmatpush1.msra.mxu0 0.0
        %3493 = vmatprep.mubr.f32.mxu0 0.0
        %v3494 = vand.u32 %v3165, 4294901760
        %v3495 = vsub.f32 %v3165, %v3494
        %v3496 = vand.u32 %v3495, 4294901760
        %3497 = vmatmul.mubr.f32.gmra.mrb[0].mxu0 %v3496
        %v3498 = vpop.f32.mrb[0].mxu0
        %v3499 = vadd.f32 %v3417, %v3498
        %v3500 = vpop.f32.mrb[0].mxu0
        %3501 = vmatprep.mubr.f32.mxu0 0.0
        %v3502 = vand.u32 %v3168, 4294901760
        %v3503 = vsub.f32 %v3168, %v3502
        %v3504 = vand.u32 %v3503, 4294901760
        %3505 = vmatmul.mubr.f32.gmra.mrb[0].mxu0 %v3504
        %v3506 = vpop.f32.mrb[0].mxu0
        %v3507 = vadd.f32 %v3424, %v3506
        %v3508 = vpop.f32.mrb[0].mxu0
        %3509 = vdwg.mxu0
        %3510 = vmatprep.subr.mxu0 0.0
        %v3511 = vand.u32 %v211, 4294901760
        %v3512 = vsub.f32 %v211, %v3511
        %v3513 = vand.u32 %v3512, 4294901760
        %3514 = vmatpush1.msra.mxu0 %v3513
        %3515 = vmatprep.subr.mxu0 0.0
        %v3516 = vand.u32 %v212, 4294901760
        %v3517 = vsub.f32 %v212, %v3516
        %v3518 = vand.u32 %v3517, 4294901760
        %3519 = vmatpush1.msra.mxu0 %v3518
        %3520 = vmatprep.subr.mxu0 0.0
        %3521 = vmatpush1.msra.mxu0 0.0
        %3522 = vmatprep.subr.mxu0 0.0
        %3523 = vmatpush1.msra.mxu0 0.0
        %3524 = vmatprep.subr.mxu0 0.0
        %3525 = vmatpush1.msra.mxu0 0.0
        %3526 = vmatprep.subr.mxu0 0.0
        %3527 = vmatpush1.msra.mxu0 0.0
        %3528 = vmatprep.subr.mxu0 0.0
        %3529 = vmatpush1.msra.mxu0 0.0
        %3530 = vmatprep.subr.mxu0 0.0
        %3531 = vmatpush1.msra.mxu0 0.0
        %3532 = vmatprep.subr.mxu0 0.0
        %3533 = vmatpush1.msra.mxu0 0.0
        %3534 = vmatprep.subr.mxu0 0.0
        %3535 = vmatpush1.msra.mxu0 0.0
        %3536 = vmatprep.subr.mxu0 0.0
        %3537 = vmatpush1.msra.mxu0 0.0
        %3538 = vmatprep.subr.mxu0 0.0
        %3539 = vmatpush1.msra.mxu0 0.0
        %3540 = vmatprep.subr.mxu0 0.0
        %3541 = vmatpush1.msra.mxu0 0.0
        %3542 = vmatprep.subr.mxu0 0.0
        %3543 = vmatpush1.msra.mxu0 0.0
        %3544 = vmatprep.subr.mxu0 0.0
        %3545 = vmatpush1.msra.mxu0 0.0
        %3546 = vmatprep.subr.mxu0 0.0
        %3547 = vmatpush1.msra.mxu0 0.0
        %3548 = vmatprep.subr.mxu0 0.0
        %3549 = vmatpush1.msra.mxu0 0.0
        %3550 = vmatprep.subr.mxu0 0.0
        %3551 = vmatpush1.msra.mxu0 0.0
        %3552 = vmatprep.subr.mxu0 0.0
        %3553 = vmatpush1.msra.mxu0 0.0
        %3554 = vmatprep.subr.mxu0 0.0
        %3555 = vmatpush1.msra.mxu0 0.0
        %3556 = vmatprep.subr.mxu0 0.0
        %3557 = vmatpush1.msra.mxu0 0.0
        %3558 = vmatprep.subr.mxu0 0.0
        %3559 = vmatpush1.msra.mxu0 0.0
        %3560 = vmatprep.subr.mxu0 0.0
        %3561 = vmatpush1.msra.mxu0 0.0
        %3562 = vmatprep.subr.mxu0 0.0
        %3563 = vmatpush1.msra.mxu0 0.0
        %3564 = vmatprep.subr.mxu0 0.0
        %3565 = vmatpush1.msra.mxu0 0.0
        %3566 = vmatprep.subr.mxu0 0.0
        %3567 = vmatpush1.msra.mxu0 0.0
        %3568 = vmatprep.subr.mxu0 0.0
        %3569 = vmatpush1.msra.mxu0 0.0
        %3570 = vmatprep.subr.mxu0 0.0
        %3571 = vmatpush1.msra.mxu0 0.0
        %3572 = vmatprep.subr.mxu0 0.0
        %3573 = vmatpush1.msra.mxu0 0.0
        %3574 = vmatprep.subr.mxu0 0.0
        %3575 = vmatpush1.msra.mxu0 0.0
        %3576 = vmatprep.subr.mxu0 0.0
        %3577 = vmatpush1.msra.mxu0 0.0
        %3578 = vmatprep.subr.mxu0 0.0
        %3579 = vmatpush1.msra.mxu0 0.0
        %3580 = vmatprep.mubr.f32.mxu0 0.0
        %v3581 = vand.u32 %v3165, 4294901760
        %3582 = vmatmul.mubr.f32.gmra.mrb[0].mxu0 %v3581
        %v3583 = vpop.f32.mrb[0].mxu0
        %v3584 = vadd.f32 %v3499, %v3583
        %v3585 = vpop.f32.mrb[0].mxu0
        %3586 = vmatprep.mubr.f32.mxu0 0.0
        %v3587 = vand.u32 %v3168, 4294901760
        %3588 = vmatmul.mubr.f32.gmra.mrb[0].mxu0 %v3587
        %v3589 = vpop.f32.mrb[0].mxu0
        %v3590 = vadd.f32 %v3507, %v3589
        %v3591 = vpop.f32.mrb[0].mxu0
        %3592 = vdwg.mxu0
        %3593 = vmatprep.subr.mxu0 0.0
        %v3594 = vand.u32 %v211, 4294901760
        %3595 = vmatpush1.msra.mxu0 %v3594
        %3596 = vmatprep.subr.mxu0 0.0
        %v3597 = vand.u32 %v212, 4294901760
        %3598 = vmatpush1.msra.mxu0 %v3597
        %3599 = vmatprep.subr.mxu0 0.0
        %3600 = vmatpush1.msra.mxu0 0.0
        %3601 = vmatprep.subr.mxu0 0.0
        %3602 = vmatpush1.msra.mxu0 0.0
        %3603 = vmatprep.subr.mxu0 0.0
        %3604 = vmatpush1.msra.mxu0 0.0
        %3605 = vmatprep.subr.mxu0 0.0
        %3606 = vmatpush1.msra.mxu0 0.0
        %3607 = vmatprep.subr.mxu0 0.0
        %3608 = vmatpush1.msra.mxu0 0.0
        %3609 = vmatprep.subr.mxu0 0.0
        %3610 = vmatpush1.msra.mxu0 0.0
        %3611 = vmatprep.subr.mxu0 0.0
        %3612 = vmatpush1.msra.mxu0 0.0
        %3613 = vmatprep.subr.mxu0 0.0
        %3614 = vmatpush1.msra.mxu0 0.0
        %3615 = vmatprep.subr.mxu0 0.0
        %3616 = vmatpush1.msra.mxu0 0.0
        %3617 = vmatprep.subr.mxu0 0.0
        %3618 = vmatpush1.msra.mxu0 0.0
        %3619 = vmatprep.subr.mxu0 0.0
        %3620 = vmatpush1.msra.mxu0 0.0
        %3621 = vmatprep.subr.mxu0 0.0
        %3622 = vmatpush1.msra.mxu0 0.0
        %3623 = vmatprep.subr.mxu0 0.0
        %3624 = vmatpush1.msra.mxu0 0.0
        %3625 = vmatprep.subr.mxu0 0.0
        %3626 = vmatpush1.msra.mxu0 0.0
        %3627 = vmatprep.subr.mxu0 0.0
        %3628 = vmatpush1.msra.mxu0 0.0
        %3629 = vmatprep.subr.mxu0 0.0
        %3630 = vmatpush1.msra.mxu0 0.0
        %3631 = vmatprep.subr.mxu0 0.0
        %3632 = vmatpush1.msra.mxu0 0.0
        %3633 = vmatprep.subr.mxu0 0.0
        %3634 = vmatpush1.msra.mxu0 0.0
        %3635 = vmatprep.subr.mxu0 0.0
        %3636 = vmatpush1.msra.mxu0 0.0
        %3637 = vmatprep.subr.mxu0 0.0
        %3638 = vmatpush1.msra.mxu0 0.0
        %3639 = vmatprep.subr.mxu0 0.0
        %3640 = vmatpush1.msra.mxu0 0.0
        %3641 = vmatprep.subr.mxu0 0.0
        %3642 = vmatpush1.msra.mxu0 0.0
        %3643 = vmatprep.subr.mxu0 0.0
        %3644 = vmatpush1.msra.mxu0 0.0
        %3645 = vmatprep.subr.mxu0 0.0
        %3646 = vmatpush1.msra.mxu0 0.0
        %3647 = vmatprep.subr.mxu0 0.0
        %3648 = vmatpush1.msra.mxu0 0.0
        %3649 = vmatprep.subr.mxu0 0.0
        %3650 = vmatpush1.msra.mxu0 0.0
        %3651 = vmatprep.subr.mxu0 0.0
        %3652 = vmatpush1.msra.mxu0 0.0
        %3653 = vmatprep.subr.mxu0 0.0
        %3654 = vmatpush1.msra.mxu0 0.0
        %3655 = vmatprep.subr.mxu0 0.0
        %3656 = vmatpush1.msra.mxu0 0.0
        %3657 = vmatprep.subr.mxu0 0.0
        %3658 = vmatpush1.msra.mxu0 0.0
        %3659 = vmatprep.mubr.f32.mxu0 0.0
        %v3660 = vand.u32 %v3165, 4294901760
        %3661 = vmatmul.mubr.f32.gmra.mrb[0].mxu0 %v3660
        %v3662 = vpop.f32.mrb[0].mxu0
        %v3663 = vadd.f32 %v3584, %v3662
        %v3664 = vpop.f32.mrb[0].mxu0
        %3665 = vmatprep.mubr.f32.mxu0 0.0
        %v3666 = vand.u32 %v3168, 4294901760
        %3667 = vmatmul.mubr.f32.gmra.mrb[0].mxu0 %v3666
        %v3668 = vpop.f32.mrb[0].mxu0
        %v3669 = vadd.f32 %v3590, %v3668
        %v3670 = vpop.f32.mrb[0].mxu0
        %3671 = vdwg.mxu0
        %3672 = vmatprep.subr.mxu0 0.0
        %v3673 = vand.u32 %v3663, 4294901760
        %3674 = vmatpush1.msra.mxu0 %v3673
        %3675 = vmatprep.subr.mxu0 0.0
        %v3676 = vand.u32 %v3669, 4294901760
        %3677 = vmatpush1.msra.mxu0 %v3676
        %3678 = vmatprep.subr.mxu0 0.0
        %3679 = vmatpush1.msra.mxu0 0.0
        %3680 = vmatprep.subr.mxu0 0.0
        %3681 = vmatpush1.msra.mxu0 0.0
        %3682 = vmatprep.subr.mxu0 0.0
        %3683 = vmatpush1.msra.mxu0 0.0
        %3684 = vmatprep.subr.mxu0 0.0
        %3685 = vmatpush1.msra.mxu0 0.0
        %3686 = vmatprep.subr.mxu0 0.0
        %3687 = vmatpush1.msra.mxu0 0.0
        %3688 = vmatprep.subr.mxu0 0.0
        %3689 = vmatpush1.msra.mxu0 0.0
        %3690 = vmatprep.subr.mxu0 0.0
        %3691 = vmatpush1.msra.mxu0 0.0
        %3692 = vmatprep.subr.mxu0 0.0
        %3693 = vmatpush1.msra.mxu0 0.0
        %3694 = vmatprep.subr.mxu0 0.0
        %3695 = vmatpush1.msra.mxu0 0.0
        %3696 = vmatprep.subr.mxu0 0.0
        %3697 = vmatpush1.msra.mxu0 0.0
        %3698 = vmatprep.subr.mxu0 0.0
        %3699 = vmatpush1.msra.mxu0 0.0
        %3700 = vmatprep.subr.mxu0 0.0
        %3701 = vmatpush1.msra.mxu0 0.0
        %3702 = vmatprep.subr.mxu0 0.0
        %3703 = vmatpush1.msra.mxu0 0.0
        %3704 = vmatprep.subr.mxu0 0.0
        %3705 = vmatpush1.msra.mxu0 0.0
        %3706 = vmatprep.subr.mxu0 0.0
        %3707 = vmatpush1.msra.mxu0 0.0
        %3708 = vmatprep.subr.mxu0 0.0
        %3709 = vmatpush1.msra.mxu0 0.0
        %3710 = vmatprep.subr.mxu0 0.0
        %3711 = vmatpush1.msra.mxu0 0.0
        %3712 = vmatprep.subr.mxu0 0.0
        %3713 = vmatpush1.msra.mxu0 0.0
        %3714 = vmatprep.subr.mxu0 0.0
        %3715 = vmatpush1.msra.mxu0 0.0
        %3716 = vmatprep.subr.mxu0 0.0
        %3717 = vmatpush1.msra.mxu0 0.0
        %3718 = vmatprep.subr.mxu0 0.0
        %3719 = vmatpush1.msra.mxu0 0.0
        %3720 = vmatprep.subr.mxu0 0.0
        %3721 = vmatpush1.msra.mxu0 0.0
        %3722 = vmatprep.subr.mxu0 0.0
        %3723 = vmatpush1.msra.mxu0 0.0
        %3724 = vmatprep.subr.mxu0 0.0
        %3725 = vmatpush1.msra.mxu0 0.0
        %3726 = vmatprep.subr.mxu0 0.0
        %3727 = vmatpush1.msra.mxu0 0.0
        %3728 = vmatprep.subr.mxu0 0.0
        %3729 = vmatpush1.msra.mxu0 0.0
        %3730 = vmatprep.subr.mxu0 0.0
        %3731 = vmatpush1.msra.mxu0 0.0
        %3732 = vmatprep.subr.mxu0 0.0
        %3733 = vmatpush1.msra.mxu0 0.0
        %3734 = vmatprep.subr.mxu0 0.0
        %3735 = vmatpush1.msra.mxu0 0.0
        %3736 = vmatprep.subr.mxu0 0.0
        %3737 = vmatpush1.msra.mxu0 0.0
        %3738 = vmatprep.mubr.f32.mxu0 0.0
        %v3739 = vand.u32 %v727, 4294901760
        %v3740 = vsub.f32 %v727, %v3739
        %v3741 = vand.u32 %v3740, 4294901760
        %v3742 = vsub.f32 %v3740, %v3741
        %v3743 = vand.u32 %v3742, 4294901760
        %3744 = vmatmul.mubr.f32.gmra.mrb[0].mxu0 %v3743
        %v3745 = vpop.f32.mrb[0].mxu0
        %v3746 = vadd.f32 1e-12, %v3745
        %v3747 = vpop.f32.mrb[0].mxu0
        %3748 = vdwg.mxu0
        %3749 = vmatprep.subr.mxu0 0.0
        %v3750 = vand.u32 %v3663, 4294901760
        %v3751 = vsub.f32 %v3663, %v3750
        %v3752 = vand.u32 %v3751, 4294901760
        %v3753 = vsub.f32 %v3751, %v3752
        %v3754 = vand.u32 %v3753, 4294901760
        %3755 = vmatpush1.msra.mxu0 %v3754
        %3756 = vmatprep.subr.mxu0 0.0
        %v3757 = vand.u32 %v3669, 4294901760
        %v3758 = vsub.f32 %v3669, %v3757
        %v3759 = vand.u32 %v3758, 4294901760
        %v3760 = vsub.f32 %v3758, %v3759
        %v3761 = vand.u32 %v3760, 4294901760
        %3762 = vmatpush1.msra.mxu0 %v3761
        %3763 = vmatprep.subr.mxu0 0.0
        %3764 = vmatpush1.msra.mxu0 0.0
        %3765 = vmatprep.subr.mxu0 0.0
        %3766 = vmatpush1.msra.mxu0 0.0
        %3767 = vmatprep.subr.mxu0 0.0
        %3768 = vmatpush1.msra.mxu0 0.0
        %3769 = vmatprep.subr.mxu0 0.0
        %3770 = vmatpush1.msra.mxu0 0.0
        %3771 = vmatprep.subr.mxu0 0.0
        %3772 = vmatpush1.msra.mxu0 0.0
        %3773 = vmatprep.subr.mxu0 0.0
        %3774 = vmatpush1.msra.mxu0 0.0
        %3775 = vmatprep.subr.mxu0 0.0
        %3776 = vmatpush1.msra.mxu0 0.0
        %3777 = vmatprep.subr.mxu0 0.0
        %3778 = vmatpush1.msra.mxu0 0.0
        %3779 = vmatprep.subr.mxu0 0.0
        %3780 = vmatpush1.msra.mxu0 0.0
        %3781 = vmatprep.subr.mxu0 0.0
        %3782 = vmatpush1.msra.mxu0 0.0
        %3783 = vmatprep.subr.mxu0 0.0
        %3784 = vmatpush1.msra.mxu0 0.0
        %3785 = vmatprep.subr.mxu0 0.0
        %3786 = vmatpush1.msra.mxu0 0.0
        %3787 = vmatprep.subr.mxu0 0.0
        %3788 = vmatpush1.msra.mxu0 0.0
        %3789 = vmatprep.subr.mxu0 0.0
        %3790 = vmatpush1.msra.mxu0 0.0
        %3791 = vmatprep.subr.mxu0 0.0
        %3792 = vmatpush1.msra.mxu0 0.0
        %3793 = vmatprep.subr.mxu0 0.0
        %3794 = vmatpush1.msra.mxu0 0.0
        %3795 = vmatprep.subr.mxu0 0.0
        %3796 = vmatpush1.msra.mxu0 0.0
        %3797 = vmatprep.subr.mxu0 0.0
        %3798 = vmatpush1.msra.mxu0 0.0
        %3799 = vmatprep.subr.mxu0 0.0
        %3800 = vmatpush1.msra.mxu0 0.0
        %3801 = vmatprep.subr.mxu0 0.0
        %3802 = vmatpush1.msra.mxu0 0.0
        %3803 = vmatprep.subr.mxu0 0.0
        %3804 = vmatpush1.msra.mxu0 0.0
        %3805 = vmatprep.subr.mxu0 0.0
        %3806 = vmatpush1.msra.mxu0 0.0
        %3807 = vmatprep.subr.mxu0 0.0
        %3808 = vmatpush1.msra.mxu0 0.0
        %3809 = vmatprep.subr.mxu0 0.0
        %3810 = vmatpush1.msra.mxu0 0.0
        %3811 = vmatprep.subr.mxu0 0.0
        %3812 = vmatpush1.msra.mxu0 0.0
        %3813 = vmatprep.subr.mxu0 0.0
        %3814 = vmatpush1.msra.mxu0 0.0
        %3815 = vmatprep.subr.mxu0 0.0
        %3816 = vmatpush1.msra.mxu0 0.0
        %3817 = vmatprep.subr.mxu0 0.0
        %3818 = vmatpush1.msra.mxu0 0.0
        %3819 = vmatprep.subr.mxu0 0.0
        %3820 = vmatpush1.msra.mxu0 0.0
        %3821 = vmatprep.subr.mxu0 0.0
        %3822 = vmatpush1.msra.mxu0 0.0
        %3823 = vmatprep.mubr.f32.mxu0 0.0
        %v3824 = vand.u32 %v727, 4294901760
        %3825 = vmatmul.mubr.f32.gmra.mrb[0].mxu0 %v3824
        %v3826 = vpop.f32.mrb[0].mxu0
        %v3827 = vadd.f32 %v3746, %v3826
        %v3828 = vpop.f32.mrb[0].mxu0
        %3829 = vdwg.mxu0
        %3830 = vmatprep.subr.mxu0 0.0
        %v3831 = vand.u32 %v3663, 4294901760
        %v3832 = vsub.f32 %v3663, %v3831
        %3833 = vmatpush1.msra.mxu0 %v3832
        %3834 = vmatprep.subr.mxu0 0.0
        %v3835 = vand.u32 %v3669, 4294901760
        %v3836 = vsub.f32 %v3669, %v3835
        %3837 = vmatpush1.msra.mxu0 %v3836
        %3838 = vmatprep.subr.mxu0 0.0
        %3839 = vmatpush1.msra.mxu0 0.0
        %3840 = vmatprep.subr.mxu0 0.0
        %3841 = vmatpush1.msra.mxu0 0.0
        %3842 = vmatprep.subr.mxu0 0.0
        %3843 = vmatpush1.msra.mxu0 0.0
        %3844 = vmatprep.subr.mxu0 0.0
        %3845 = vmatpush1.msra.mxu0 0.0
        %3846 = vmatprep.subr.mxu0 0.0
        %3847 = vmatpush1.msra.mxu0 0.0
        %3848 = vmatprep.subr.mxu0 0.0
        %3849 = vmatpush1.msra.mxu0 0.0
        %3850 = vmatprep.subr.mxu0 0.0
        %3851 = vmatpush1.msra.mxu0 0.0
        %3852 = vmatprep.subr.mxu0 0.0
        %3853 = vmatpush1.msra.mxu0 0.0
        %3854 = vmatprep.subr.mxu0 0.0
        %3855 = vmatpush1.msra.mxu0 0.0
        %3856 = vmatprep.subr.mxu0 0.0
        %3857 = vmatpush1.msra.mxu0 0.0
        %3858 = vmatprep.subr.mxu0 0.0
        %3859 = vmatpush1.msra.mxu0 0.0
        %3860 = vmatprep.subr.mxu0 0.0
        %3861 = vmatpush1.msra.mxu0 0.0
        %3862 = vmatprep.subr.mxu0 0.0
        %3863 = vmatpush1.msra.mxu0 0.0
        %3864 = vmatprep.subr.mxu0 0.0
        %3865 = vmatpush1.msra.mxu0 0.0
        %3866 = vmatprep.subr.mxu0 0.0
        %3867 = vmatpush1.msra.mxu0 0.0
        %3868 = vmatprep.subr.mxu0 0.0
        %3869 = vmatpush1.msra.mxu0 0.0
        %3870 = vmatprep.subr.mxu0 0.0
        %3871 = vmatpush1.msra.mxu0 0.0
        %3872 = vmatprep.subr.mxu0 0.0
        %3873 = vmatpush1.msra.mxu0 0.0
        %3874 = vmatprep.subr.mxu0 0.0
        %3875 = vmatpush1.msra.mxu0 0.0
        %3876 = vmatprep.subr.mxu0 0.0
        %3877 = vmatpush1.msra.mxu0 0.0
        %3878 = vmatprep.subr.mxu0 0.0
        %3879 = vmatpush1.msra.mxu0 0.0
        %3880 = vmatprep.subr.mxu0 0.0
        %3881 = vmatpush1.msra.mxu0 0.0
        %3882 = vmatprep.subr.mxu0 0.0
        %3883 = vmatpush1.msra.mxu0 0.0
        %3884 = vmatprep.subr.mxu0 0.0
        %3885 = vmatpush1.msra.mxu0 0.0
        %3886 = vmatprep.subr.mxu0 0.0
        %3887 = vmatpush1.msra.mxu0 0.0
        %3888 = vmatprep.subr.mxu0 0.0
        %3889 = vmatpush1.msra.mxu0 0.0
        %3890 = vmatprep.subr.mxu0 0.0
        %3891 = vmatpush1.msra.mxu0 0.0
        %3892 = vmatprep.subr.mxu0 0.0
        %3893 = vmatpush1.msra.mxu0 0.0
        %3894 = vmatprep.subr.mxu0 0.0
        %3895 = vmatpush1.msra.mxu0 0.0
        %3896 = vmatprep.subr.mxu0 0.0
        %3897 = vmatpush1.msra.mxu0 0.0
        %3898 = vmatprep.mubr.f32.mxu0 0.0
        %v3899 = vand.u32 %v727, 4294901760
        %v3900 = vsub.f32 %v727, %v3899
        %3901 = vmatmul.mubr.f32.gmra.mrb[0].mxu0 %v3900
        %v3902 = vpop.f32.mrb[0].mxu0
        %v3903 = vadd.f32 %v3827, %v3902
        %v3904 = vpop.f32.mrb[0].mxu0
        %3905 = vdwg.mxu0
        %3906 = vmatprep.subr.mxu0 0.0
        %v3907 = vand.u32 %v3663, 4294901760
        %3908 = vmatpush1.msra.mxu0 %v3907
        %3909 = vmatprep.subr.mxu0 0.0
        %v3910 = vand.u32 %v3669, 4294901760
        %3911 = vmatpush1.msra.mxu0 %v3910
        %3912 = vmatprep.subr.mxu0 0.0
        %3913 = vmatpush1.msra.mxu0 0.0
        %3914 = vmatprep.subr.mxu0 0.0
        %3915 = vmatpush1.msra.mxu0 0.0
        %3916 = vmatprep.subr.mxu0 0.0
        %3917 = vmatpush1.msra.mxu0 0.0
        %3918 = vmatprep.subr.mxu0 0.0
        %3919 = vmatpush1.msra.mxu0 0.0
        %3920 = vmatprep.subr.mxu0 0.0
        %3921 = vmatpush1.msra.mxu0 0.0
        %3922 = vmatprep.subr.mxu0 0.0
        %3923 = vmatpush1.msra.mxu0 0.0
        %3924 = vmatprep.subr.mxu0 0.0
        %3925 = vmatpush1.msra.mxu0 0.0
        %3926 = vmatprep.subr.mxu0 0.0
        %3927 = vmatpush1.msra.mxu0 0.0
        %3928 = vmatprep.subr.mxu0 0.0
        %3929 = vmatpush1.msra.mxu0 0.0
        %3930 = vmatprep.subr.mxu0 0.0
        %3931 = vmatpush1.msra.mxu0 0.0
        %3932 = vmatprep.subr.mxu0 0.0
        %3933 = vmatpush1.msra.mxu0 0.0
        %3934 = vmatprep.subr.mxu0 0.0
        %3935 = vmatpush1.msra.mxu0 0.0
        %3936 = vmatprep.subr.mxu0 0.0
        %3937 = vmatpush1.msra.mxu0 0.0
        %3938 = vmatprep.subr.mxu0 0.0
        %3939 = vmatpush1.msra.mxu0 0.0
        %3940 = vmatprep.subr.mxu0 0.0
        %3941 = vmatpush1.msra.mxu0 0.0
        %3942 = vmatprep.subr.mxu0 0.0
        %3943 = vmatpush1.msra.mxu0 0.0
        %3944 = vmatprep.subr.mxu0 0.0
        %3945 = vmatpush1.msra.mxu0 0.0
        %3946 = vmatprep.subr.mxu0 0.0
        %3947 = vmatpush1.msra.mxu0 0.0
        %3948 = vmatprep.subr.mxu0 0.0
        %3949 = vmatpush1.msra.mxu0 0.0
        %3950 = vmatprep.subr.mxu0 0.0
        %3951 = vmatpush1.msra.mxu0 0.0
        %3952 = vmatprep.subr.mxu0 0.0
        %3953 = vmatpush1.msra.mxu0 0.0
        %3954 = vmatprep.subr.mxu0 0.0
        %3955 = vmatpush1.msra.mxu0 0.0
        %3956 = vmatprep.subr.mxu0 0.0
        %3957 = vmatpush1.msra.mxu0 0.0
        %3958 = vmatprep.subr.mxu0 0.0
        %3959 = vmatpush1.msra.mxu0 0.0
        %3960 = vmatprep.subr.mxu0 0.0
        %3961 = vmatpush1.msra.mxu0 0.0
        %3962 = vmatprep.subr.mxu0 0.0
        %3963 = vmatpush1.msra.mxu0 0.0
        %3964 = vmatprep.subr.mxu0 0.0
        %3965 = vmatpush1.msra.mxu0 0.0
        %3966 = vmatprep.subr.mxu0 0.0
        %3967 = vmatpush1.msra.mxu0 0.0
        %3968 = vmatprep.subr.mxu0 0.0
        %3969 = vmatpush1.msra.mxu0 0.0
        %3970 = vmatprep.subr.mxu0 0.0
        %3971 = vmatpush1.msra.mxu0 0.0
        %3972 = vmatprep.mubr.f32.mxu0 0.0
        %v3973 = vand.u32 %v727, 4294901760
        %v3974 = vsub.f32 %v727, %v3973
        %v3975 = vand.u32 %v3974, 4294901760
        %3976 = vmatmul.mubr.f32.gmra.mrb[0].mxu0 %v3975
        %v3977 = vpop.f32.mrb[0].mxu0
        %v3978 = vadd.f32 %v3903, %v3977
        %v3979 = vpop.f32.mrb[0].mxu0
        %3980 = vdwg.mxu0
        %3981 = vmatprep.subr.mxu0 0.0
        %v3982 = vand.u32 %v3663, 4294901760
        %v3983 = vsub.f32 %v3663, %v3982
        %v3984 = vand.u32 %v3983, 4294901760
        %3985 = vmatpush1.msra.mxu0 %v3984
        %3986 = vmatprep.subr.mxu0 0.0
        %v3987 = vand.u32 %v3669, 4294901760
        %v3988 = vsub.f32 %v3669, %v3987
        %v3989 = vand.u32 %v3988, 4294901760
        %3990 = vmatpush1.msra.mxu0 %v3989
        %3991 = vmatprep.subr.mxu0 0.0
        %3992 = vmatpush1.msra.mxu0 0.0
        %3993 = vmatprep.subr.mxu0 0.0
        %3994 = vmatpush1.msra.mxu0 0.0
        %3995 = vmatprep.subr.mxu0 0.0
        %3996 = vmatpush1.msra.mxu0 0.0
        %3997 = vmatprep.subr.mxu0 0.0
        %3998 = vmatpush1.msra.mxu0 0.0
        %3999 = vmatprep.subr.mxu0 0.0
        %4000 = vmatpush1.msra.mxu0 0.0
        %4001 = vmatprep.subr.mxu0 0.0
        %4002 = vmatpush1.msra.mxu0 0.0
        %4003 = vmatprep.subr.mxu0 0.0
        %4004 = vmatpush1.msra.mxu0 0.0
        %4005 = vmatprep.subr.mxu0 0.0
        %4006 = vmatpush1.msra.mxu0 0.0
        %4007 = vmatprep.subr.mxu0 0.0
        %4008 = vmatpush1.msra.mxu0 0.0
        %4009 = vmatprep.subr.mxu0 0.0
        %4010 = vmatpush1.msra.mxu0 0.0
        %4011 = vmatprep.subr.mxu0 0.0
        %4012 = vmatpush1.msra.mxu0 0.0
        %4013 = vmatprep.subr.mxu0 0.0
        %4014 = vmatpush1.msra.mxu0 0.0
        %4015 = vmatprep.subr.mxu0 0.0
        %4016 = vmatpush1.msra.mxu0 0.0
        %4017 = vmatprep.subr.mxu0 0.0
        %4018 = vmatpush1.msra.mxu0 0.0
        %4019 = vmatprep.subr.mxu0 0.0
        %4020 = vmatpush1.msra.mxu0 0.0
        %4021 = vmatprep.subr.mxu0 0.0
        %4022 = vmatpush1.msra.mxu0 0.0
        %4023 = vmatprep.subr.mxu0 0.0
        %4024 = vmatpush1.msra.mxu0 0.0
        %4025 = vmatprep.subr.mxu0 0.0
        %4026 = vmatpush1.msra.mxu0 0.0
        %4027 = vmatprep.subr.mxu0 0.0
        %4028 = vmatpush1.msra.mxu0 0.0
        %4029 = vmatprep.subr.mxu0 0.0
        %4030 = vmatpush1.msra.mxu0 0.0
        %4031 = vmatprep.subr.mxu0 0.0
        %4032 = vmatpush1.msra.mxu0 0.0
        %4033 = vmatprep.subr.mxu0 0.0
        %4034 = vmatpush1.msra.mxu0 0.0
        %4035 = vmatprep.subr.mxu0 0.0
        %4036 = vmatpush1.msra.mxu0 0.0
        %4037 = vmatprep.subr.mxu0 0.0
        %4038 = vmatpush1.msra.mxu0 0.0
        %4039 = vmatprep.subr.mxu0 0.0
        %4040 = vmatpush1.msra.mxu0 0.0
        %4041 = vmatprep.subr.mxu0 0.0
        %4042 = vmatpush1.msra.mxu0 0.0
        %4043 = vmatprep.subr.mxu0 0.0
        %4044 = vmatpush1.msra.mxu0 0.0
        %4045 = vmatprep.subr.mxu0 0.0
        %4046 = vmatpush1.msra.mxu0 0.0
        %4047 = vmatprep.subr.mxu0 0.0
        %4048 = vmatpush1.msra.mxu0 0.0
        %4049 = vmatprep.subr.mxu0 0.0
        %4050 = vmatpush1.msra.mxu0 0.0
        %4051 = vmatprep.mubr.f32.mxu0 0.0
        %v4052 = vand.u32 %v727, 4294901760
        %4053 = vmatmul.mubr.f32.gmra.mrb[0].mxu0 %v4052
        %v4054 = vpop.f32.mrb[0].mxu0
        %v4055 = vadd.f32 %v3978, %v4054
        %v4056 = vpop.f32.mrb[0].mxu0
        %4057 = vdwg.mxu0
        %4058 = vmatprep.subr.mxu0 0.0
        %v4059 = vand.u32 %v3663, 4294901760
        %4060 = vmatpush1.msra.mxu0 %v4059
        %4061 = vmatprep.subr.mxu0 0.0
        %v4062 = vand.u32 %v3669, 4294901760
        %4063 = vmatpush1.msra.mxu0 %v4062
        %4064 = vmatprep.subr.mxu0 0.0
        %4065 = vmatpush1.msra.mxu0 0.0
        %4066 = vmatprep.subr.mxu0 0.0
        %4067 = vmatpush1.msra.mxu0 0.0
        %4068 = vmatprep.subr.mxu0 0.0
        %4069 = vmatpush1.msra.mxu0 0.0
        %4070 = vmatprep.subr.mxu0 0.0
        %4071 = vmatpush1.msra.mxu0 0.0
        %4072 = vmatprep.subr.mxu0 0.0
        %4073 = vmatpush1.msra.mxu0 0.0
        %4074 = vmatprep.subr.mxu0 0.0
        %4075 = vmatpush1.msra.mxu0 0.0
        %4076 = vmatprep.subr.mxu0 0.0
        %4077 = vmatpush1.msra.mxu0 0.0
        %4078 = vmatprep.subr.mxu0 0.0
        %4079 = vmatpush1.msra.mxu0 0.0
        %4080 = vmatprep.subr.mxu0 0.0
        %4081 = vmatpush1.msra.mxu0 0.0
        %4082 = vmatprep.subr.mxu0 0.0
        %4083 = vmatpush1.msra.mxu0 0.0
        %4084 = vmatprep.subr.mxu0 0.0
        %4085 = vmatpush1.msra.mxu0 0.0
        %4086 = vmatprep.subr.mxu0 0.0
        %4087 = vmatpush1.msra.mxu0 0.0
        %4088 = vmatprep.subr.mxu0 0.0
        %4089 = vmatpush1.msra.mxu0 0.0
        %4090 = vmatprep.subr.mxu0 0.0
        %4091 = vmatpush1.msra.mxu0 0.0
        %4092 = vmatprep.subr.mxu0 0.0
        %4093 = vmatpush1.msra.mxu0 0.0
        %4094 = vmatprep.subr.mxu0 0.0
        %4095 = vmatpush1.msra.mxu0 0.0
        %4096 = vmatprep.subr.mxu0 0.0
        %4097 = vmatpush1.msra.mxu0 0.0
        %4098 = vmatprep.subr.mxu0 0.0
        %4099 = vmatpush1.msra.mxu0 0.0
        %4100 = vmatprep.subr.mxu0 0.0
        %4101 = vmatpush1.msra.mxu0 0.0
        %4102 = vmatprep.subr.mxu0 0.0
        %4103 = vmatpush1.msra.mxu0 0.0
        %4104 = vmatprep.subr.mxu0 0.0
        %4105 = vmatpush1.msra.mxu0 0.0
        %4106 = vmatprep.subr.mxu0 0.0
        %4107 = vmatpush1.msra.mxu0 0.0
        %4108 = vmatprep.subr.mxu0 0.0
        %4109 = vmatpush1.msra.mxu0 0.0
        %4110 = vmatprep.subr.mxu0 0.0
        %4111 = vmatpush1.msra.mxu0 0.0
        %4112 = vmatprep.subr.mxu0 0.0
        %4113 = vmatpush1.msra.mxu0 0.0
        %4114 = vmatprep.subr.mxu0 0.0
        %4115 = vmatpush1.msra.mxu0 0.0
        %4116 = vmatprep.subr.mxu0 0.0
        %4117 = vmatpush1.msra.mxu0 0.0
        %4118 = vmatprep.subr.mxu0 0.0
        %4119 = vmatpush1.msra.mxu0 0.0
        %4120 = vmatprep.subr.mxu0 0.0
        %4121 = vmatpush1.msra.mxu0 0.0
        %4122 = vmatprep.subr.mxu0 0.0
        %4123 = vmatpush1.msra.mxu0 0.0
        %4124 = vmatprep.mubr.f32.mxu0 0.0
        %v4125 = vand.u32 %v727, 4294901760
        %4126 = vmatmul.mubr.f32.gmra.mrb[0].mxu0 %v4125
        %v4127 = vpop.f32.mrb[0].mxu0
        %v4128 = vadd.f32 %v4055, %v4127
        %v4129 = vpop.f32.mrb[0].mxu0
        %4130 = vdwg.mxu0
        %v4131 = vrsqrt.pop %v4128
        %v4132 = vmul.f32 %v4128, %v4131
        %vm4133 = vcmp.eq.f32.partialorder %v4128, inf
        %v4134 = vsel %vm4133, %v4128, %v4132
        %vm4135 = vcmp.eq.f32.partialorder %v4128, 0.0
        %v4136 = vand.u32 %v4128, 2147483648
        %v4137 = vsel %vm4135, %v4136, %v4134
        %s4138 = scalar_lea.vmem %s207, 24 [#allocation5]
        %4139 = vst.msk [vmem:[%s4138] sm:$0xff] %vm1195, %v4137
        %s4140 = sand.u32 %s112, 1
        %s4141 = scalar_lea.sflag [#allocation4], %s4140
        %s4142 = sand.u32 %s112, 1
        %s4143 = smul.addr %s4142, 32
        %s4144 = scalar_lea.vmem [#allocation5], %s4143
        // Predicated region
        $region37: #{tpu_custom_call.1} parent=31 // pred_check
          %p4145 = pneg %p122
        $region38: #{tpu_custom_call.1} parent=31 // pred_check_branch
          %4147 = sbr.rel (%p4145) target = $region40
        $region39: #{tpu_custom_call.1} parent=31 // pred_region
          %s4148 = smul.u32 4, %s25
          %s4150 = ssub.s32 512, 512
          %4151 = vsyncadd %s4141, %s4150
          %s4152 = smul.addr %s24, 4
          %s4153 = sadd.s32 %s4148, %s4152
          %s4154 = smul.addr %s4153, 128
          %s4155 = scalar_lea.hbm %s3, %s4154
          %s4156 = sshll.u32 %s4144, 4
          %s4157 = int_to_ptr.vmem [resolvable:$true] %s4156
          %4162 = dma.vmem_to_hbm [thread:$0]  %s4157, 512, %s4155, %s4141, 128, 128, 8
        $region40: #{tpu_custom_call.1} parent=31 // pred_fallthru
          _
      $region32: #{tpu_custom_call.1} parent=5 // pred_fallthru
        _
      %p4163 = scmp.le.s32.totalorder 2, %s15
      // Predicated region
      $region41: #{tpu_custom_call.1} parent=5 // pred_check
        %p4164 = pneg %p4163
      $region42: #{tpu_custom_call.1} parent=5 // pred_check_branch
        %4166 = sbr.rel (%p4164) target = $region44
      $region43: #{tpu_custom_call.1} parent=5 // pred_region
        %s4167 = ssub.s32 %s15, 2
        // Predicated region
        $region45: #{tpu_custom_call.1} parent=43 // pred_check
          %p4168 = pneg %p128
        $region46: #{tpu_custom_call.1} parent=43 // pred_check_branch
          %4170 = sbr.rel (%p4168) target = $region48
        $region47: #{tpu_custom_call.1} parent=43 // pred_region
          %s4171 = sand.u32 %s113, 1
          %s4172 = scalar_lea.sflag [#allocation4], %s4171
          %s4173 = sand.u32 %s113, 1
          %s4174 = smul.addr %s4173, 32
          %s4175 = scalar_lea.vmem [#allocation5], %s4174
          %4176 = dma.done %s4172, 512
        $region48: #{tpu_custom_call.1} parent=43 // pred_fallthru
          _
      $region44: #{tpu_custom_call.1} parent=5 // pred_fallthru
        _
    $region6: #{tpu_custom_call.1} parent=1 // loop_footer
      %s19 = sadd.s32 1, %s15
    $region7: #{tpu_custom_call.1} parent=1 // loop_footer_branch
      %14 = sbr.rel target = $region3
    $region8: #{tpu_custom_call.1} parent=1 // loop_exit
      _
    %4177 = vsyncpa [#allocation3], 1
    %s4178 = scalar_lea.sflag [#allocation3], 1
    %4179 = vsyncpa %s4178, 1
    %4180 = vsyncpa [#allocation4], 1
    %s4181 = scalar_lea.sflag [#allocation4], 1
    %4182 = vsyncpa %s4181, 1

</llo_original>
